<compile_context>
chip_gen: v7x
topology: tpu7x:2x2x1
jax: 0.10.0
libtpu: 0.0.40
codegen_flags: <defaults>
</compile_context>

<pallas_src>
import functools

import jax
import jax.numpy as jnp
from jax.experimental import pallas as pl
from jax.experimental.pallas import tpu as pltpu

_DMA_BLOCK_BYTES = 8 * 1024 * 1024     # per-grid-step HBM->VMEM payload target
_ACC_BUDGET_BYTES = 8 * 1024 * 1024    # budget for the (sub, H*W) f32 accumulators


def _plan_channel_tiling(n_chan, hw, itemsize, target_bytes):
    """Pick the channel tile: dtype-aligned sublane multiple sized to the DMA
    target; returns (c_tile, n_blocks, ragged, sub_mult)."""
    sub_mult = max(8, 32 // itemsize)            # 8 f32 / 16 bf16 / 32 int8
    row_bytes = hw * itemsize
    if n_chan * row_bytes <= target_bytes or n_chan <= sub_mult:
        return n_chan, 1, False, sub_mult        # one block over all channels
    c_tile = (target_bytes // row_bytes) // sub_mult * sub_mult
    c_tile = max(sub_mult, c_tile)
    c_tile = min(c_tile, (n_chan // sub_mult) * sub_mult)
    n_blocks = -(-n_chan // c_tile)              # cdiv
    ragged = (n_blocks * c_tile != n_chan)
    return c_tile, n_blocks, ragged, sub_mult


def _vmem_limit(block_bytes, out_block_bytes, scratch_bytes):
    """Scoped VMEM limit: double-buffered in/out blocks + scratch + headroom,
    capped at 3/4 of physical VMEM (48 MiB on v7x, more on v5e/v6e)."""
    try:
        phys = int(getattr(pltpu.get_tpu_info(), "vmem_capacity_bytes", 64 << 20))
    except Exception:
        phys = 64 << 20
    need = 2 * block_bytes + 2 * out_block_bytes + scratch_bytes + (2 << 20)
    return int(min(max(need, 16 << 20), (phys * 3) // 4))


def _spatial_attn_kernel(w_ref, x_ref, o_ref,
                         sum_ref, max_ref, featp_ref, shift_ref, conv_ref,
                         *, ks, pad, n_chan, c_tile, step, acc_rows, ragged):
    # w_ref     : SMEM (2*ks*ks,) f32 — conv weights flattened [ci, ki, kj] (OIHW)
    # x_ref     : VMEM (1, c_tile, H*W) — lane-dense channel chunk, one batch elem
    # o_ref     : VMEM (1, 1, H, W)
    # sum_ref   : VMEM (acc_rows, H*W) f32 — running channel sum (row-wise)
    # max_ref   : VMEM (acc_rows, H*W) f32 — running channel max (row-wise)
    # featp_ref : VMEM (2, H+2p, W+2p) f32 — zero-padded [avg, max] maps
    # shift_ref : VMEM (H+2p, W) f32 — staged lane-shifted conv slab
    # conv_ref  : VMEM (H, W) f32 — conv accumulator
    H, W = o_ref.shape[2], o_ref.shape[3]
    c_idx = pl.program_id(1)

    @pl.when(c_idx == 0)
    def _init():
        sum_ref[...] = jnp.zeros_like(sum_ref)
        max_ref[...] = jnp.full(max_ref.shape, -jnp.inf, max_ref.dtype)

    # ---- channel reduction: element-wise accumulation over dtype-aligned slabs
    # (no cross-sublane reduce in the hot loop when acc_rows > 1).
    for s0 in range(0, c_tile, step):
        sc = min(step, c_tile - s0)
        slab = x_ref[0, s0:s0 + sc].astype(jnp.float32)          # (sc, H*W)
        if ragged:
            row_id = (jax.lax.broadcasted_iota(jnp.int32, slab.shape, 0)
                      + (c_idx * c_tile + s0))
            valid = row_id < n_chan
            slab_sum = jnp.where(valid, slab, 0.0)
            slab_max = jnp.where(valid, slab, -jnp.inf)
        else:
            slab_sum = slab
            slab_max = slab
        if acc_rows > 1:
            sum_ref[0:sc] += slab_sum
            max_ref[0:sc] = jnp.maximum(max_ref[0:sc], slab_max)
        else:
            sum_ref[...] += jnp.sum(slab_sum, axis=0, keepdims=True)
            max_ref[...] = jnp.maximum(
                max_ref[...], jnp.max(slab_max, axis=0, keepdims=True))

    # ---- finalize: collapse, relayout into padded maps, 2*ks*ks conv, sigmoid
    @pl.when(c_idx == pl.num_programs(1) - 1)
    def _finalize():
        inv_c = 1.0 / n_chan
        # Single cross-sublane collapse per batch (XLU, off the hot loop).
        sum_ref[0:1] = jnp.sum(sum_ref[...], axis=0, keepdims=True) * inv_c
        max_ref[0:1] = jnp.max(max_ref[...], axis=0, keepdims=True)

        # Zero-padded border gives avg = 0, max = 0 there, matching conv2d's
        # implicit zero padding of the concatenated [avg, max] map.
        featp_ref[...] = jnp.zeros_like(featp_ref)
        for i in range(H):                                        # static rows
            featp_ref[0, pad + i, pad:pad + W] = sum_ref[0, pl.ds(i * W, W)]
            featp_ref[1, pad + i, pad:pad + W] = max_ref[0, pl.ds(i * W, W)]

        # Conv: one lane-shifted slab staged per (channel, kj); the inner ki
        # loop is a cheap sublane-offset load + MAC (2*ks lane rotates total).
        conv_ref[...] = jnp.zeros_like(conv_ref)
        for ci in range(2):
            for kj in range(ks):
                shift_ref[...] = featp_ref[ci, :, kj:kj + W]      # (H+2p, W)
                for ki in range(ks):
                    wv = w_ref[ci * ks * ks + ki * ks + kj]
                    conv_ref[...] += wv * shift_ref[ki:ki + H, :]

        o_ref[0, 0] = jax.nn.sigmoid(conv_ref[...]).astype(o_ref.dtype)


def spatial_attention(x, weight, kernel_size=7,
                      block_bytes_target=_DMA_BLOCK_BYTES):
    """x: (B, C, H, W); weight: (1, 2, ks, ks). Returns (B, 1, H, W)."""
    assert kernel_size in (3, 7), "kernel size must be 3 or 7"
    pad = 3 if kernel_size == 7 else 1
    B, C, H, W = x.shape
    HW = H * W
    itemsize = jnp.dtype(x.dtype).itemsize

    x_flat = x.reshape(B, C, HW)                        # lane-dense view of NCHW
    w_flat = weight.reshape(-1).astype(jnp.float32)     # (2*ks*ks,) -> SMEM

    c_tile, n_c, ragged, sub_mult = _plan_channel_tiling(
        C, HW, itemsize, block_bytes_target)
    acc_rows = sub_mult if 2 * sub_mult * HW * 4 <= _ACC_BUDGET_BYTES else 1

    Hp, Wp = H + 2 * pad, W + 2 * pad
    scratch_bytes = (2 * acc_rows * HW * 4      # running sum / max
                     + 2 * Hp * Wp * 4          # padded [avg, max] maps
                     + Hp * W * 4               # lane-shifted conv slab
                     + H * W * 4)               # conv accumulator
    vmem_limit = _vmem_limit(c_tile * HW * itemsize, H * W * itemsize,
                             scratch_bytes)

    kernel = functools.partial(
        _spatial_attn_kernel, ks=kernel_size, pad=pad, n_chan=C,
        c_tile=c_tile, step=sub_mult, acc_rows=acc_rows, ragged=ragged)

    return pl.pallas_call(
        kernel,
        out_shape=jax.ShapeDtypeStruct((B, 1, H, W), x.dtype),
        grid_spec=pltpu.PrefetchScalarGridSpec(
            num_scalar_prefetch=0,
            grid=(B, n_c),                               # reduction axis last
            in_specs=[
                pl.BlockSpec(memory_space=pltpu.MemorySpace.SMEM),      # weights
                pl.BlockSpec((1, c_tile, HW), lambda b, c: (b, c, 0)),  # x chunk
            ],
            out_specs=pl.BlockSpec((1, 1, H, W), lambda b, c: (b, 0, 0, 0)),
            scratch_shapes=[
                pltpu.VMEM((acc_rows, HW), jnp.float32),                 # run sum
                pltpu.VMEM((acc_rows, HW), jnp.float32),                 # run max
                pltpu.VMEM((2, Hp, Wp), jnp.float32),                    # padded maps
                pltpu.VMEM((Hp, W), jnp.float32),                        # shift slab
                pltpu.VMEM((H, W), jnp.float32),                         # conv acc
            ],
        ),
        compiler_params=pltpu.CompilerParams(
            dimension_semantics=("parallel", "arbitrary"),
            vmem_limit_bytes=vmem_limit,
        ),
    )(w_flat, x_flat)


def _reference(x, weight, kernel_size=7):
    pad = 3 if kernel_size == 7 else 1
    avg = jnp.mean(x, axis=1, keepdims=True)
    mx = jnp.max(x, axis=1, keepdims=True)
    feat = jnp.concatenate([avg, mx], axis=1)
    out = jax.lax.conv_general_dilated(
        feat, weight, window_strides=(1, 1), padding=[(pad, pad), (pad, pad)],
        dimension_numbers=("NCHW", "OIHW", "NCHW"))
    return jax.nn.sigmoid(out)


if __name__ == "__main__":
    key = jax.random.PRNGKey(0)
    kx, kw = jax.random.split(key)

    B, C, H, W = 2, 4, 16, 16
    ks = 7
    x = jax.random.normal(kx, (B, C, H, W), jnp.float32)

    # Deterministic Conv2d(2, 1, 7, bias=False) weight init (kaiming-uniform-like).
    fan_in = 2 * ks * ks
    bound = 1.0 / (fan_in ** 0.5)
    weight = jax.random.uniform(kw, (1, 2, ks, ks), jnp.float32, -bound, bound)

    out = spatial_attention(x, weight, kernel_size=ks)
    out = jax.block_until_ready(out)
    ref = _reference(x, weight, kernel_size=ks)
    assert out.shape == (B, 1, H, W)
    assert jnp.allclose(out, ref, atol=1e-5, rtol=1e-5), "mismatch vs reference"

    # Exercise the multi-block accumulation path (n_c > 1) and the ragged
    # channel-mask path with a tiny forced block target.
    kx2, _ = jax.random.split(kx)
    for C2 in (24, 20):                      # 24: exact 3 blocks; 20: ragged tail
        x2 = jax.random.normal(kx2, (1, C2, H, W), jnp.float32)
        out2 = jax.block_until_ready(
            spatial_attention(x2, weight, kernel_size=ks, block_bytes_target=4096))
        ref2 = _reference(x2, weight, kernel_size=ks)
        assert jnp.allclose(out2, ref2, atol=1e-5, rtol=1e-5), \
            f"mismatch vs reference (C={C2} multi-block path)"

    print("KERNEL_OK")
</pallas_src>

<mosaic_0001>
module attributes {stable_mosaic.version = 11 : i64} {
  func.func @_spatial_attn_kernel(%arg0: i32, %arg1: i32, %arg2: memref<98xf32, #tpu.memory_space<smem>>, %arg3: memref<1x4x256xf32, #tpu.memory_space<vmem>>, %arg4: memref<1x1x16x16xf32, #tpu.memory_space<vmem>>, %arg5: memref<8x256xf32, #tpu.memory_space<vmem>>, %arg6: memref<8x256xf32, #tpu.memory_space<vmem>>, %arg7: memref<2x22x22xf32, #tpu.memory_space<vmem>>, %arg8: memref<22x16xf32, #tpu.memory_space<vmem>>, %arg9: memref<16x16xf32, #tpu.memory_space<vmem>>) attributes {dimension_semantics = [#tpu.dimension_semantics<parallel>, #tpu.dimension_semantics<arbitrary>], iteration_bounds = array<i64: 2, 1>, scalar_prefetch = 0 : i64, scratch_operands = 5 : i64, tpu.core_type = #tpu.core_type<tc>, window_params = [{transform_indices = @transform_0, window_bounds = array<i64: 98>}, {transform_indices = @transform_1, window_bounds = array<i64: 1, 4, 256>}, {transform_indices = @transform_2, window_bounds = array<i64: 1, 1, 16, 16>}]} {
    %c0_i32 = arith.constant 0 : i32
    %0 = arith.cmpi eq, %arg1, %c0_i32 : i32
    %1 = arith.extui %0 : i1 to i32
    %c0_i32_0 = arith.constant 0 : i32
    %2 = arith.cmpi ne, %1, %c0_i32_0 : i32
    scf.if %2 {
      %cst = arith.constant 0.000000e+00 : f32
      %14 = vector.broadcast %cst : f32 to vector<8x256xf32>
      %c0_13 = arith.constant 0 : index
      %c0_14 = arith.constant 0 : index
      %15 = vector.load %arg5[%c0_13, %c0_14] : memref<8x256xf32, #tpu.memory_space<vmem>>, vector<8x256xf32>
      tpu.vector_store %arg5[%c0_13, %c0_14], %14 {strides = array<i32>} : memref<8x256xf32, #tpu.memory_space<vmem>>, vector<8x256xf32>,
      %cst_15 = arith.constant 0xFF800000 : f32
      %16 = vector.broadcast %cst_15 : f32 to vector<8x256xf32>
      %c0_16 = arith.constant 0 : index
      %c0_17 = arith.constant 0 : index
      %17 = vector.load %arg6[%c0_16, %c0_17] : memref<8x256xf32, #tpu.memory_space<vmem>>, vector<8x256xf32>
      tpu.vector_store %arg6[%c0_16, %c0_17], %16 {strides = array<i32>} : memref<8x256xf32, #tpu.memory_space<vmem>>, vector<8x256xf32>,
    } else {
    }
    %c0 = arith.constant 0 : index
    %c0_1 = arith.constant 0 : index
    %c0_2 = arith.constant 0 : index
    %3 = vector.load %arg3[%c0, %c0_1, %c0_2] : memref<1x4x256xf32, #tpu.memory_space<vmem>>, vector<1x4x256xf32>
    %4 = vector.shape_cast %3 : vector<1x4x256xf32> to vector<4x256xf32>
    %c0_3 = arith.constant 0 : index
    %c0_4 = arith.constant 0 : index
    %5 = vector.load %arg5[%c0_3, %c0_4] : memref<8x256xf32, #tpu.memory_space<vmem>>, vector<4x256xf32>
    %6 = arith.addf %5, %4 : vector<4x256xf32>
    %c0_5 = arith.constant 0 : index
    %c0_6 = arith.constant 0 : index
    %7 = vector.load %arg5[%c0_5, %c0_6] : memref<8x256xf32, #tpu.memory_space<vmem>>, vector<4x256xf32>
    tpu.vector_store %arg5[%c0_5, %c0_6], %6 {strides = array<i32>} : memref<8x256xf32, #tpu.memory_space<vmem>>, vector<4x256xf32>,
    %c0_7 = arith.constant 0 : index
    %c0_8 = arith.constant 0 : index
    %8 = vector.load %arg6[%c0_7, %c0_8] : memref<8x256xf32, #tpu.memory_space<vmem>>, vector<4x256xf32>
    %9 = arith.maximumf %8, %4 : vector<4x256xf32>
    %c0_9 = arith.constant 0 : index
    %c0_10 = arith.constant 0 : index
    %10 = vector.load %arg6[%c0_9, %c0_10] : memref<8x256xf32, #tpu.memory_space<vmem>>, vector<4x256xf32>
    tpu.vector_store %arg6[%c0_9, %c0_10], %9 {strides = array<i32>} : memref<8x256xf32, #tpu.memory_space<vmem>>, vector<4x256xf32>,
    %c0_i32_11 = arith.constant 0 : i32
    %11 = arith.cmpi eq, %arg1, %c0_i32_11 : i32
    %12 = arith.extui %11 : i1 to i32
    %c0_i32_12 = arith.constant 0 : i32
    %13 = arith.cmpi ne, %12, %c0_i32_12 : i32
    scf.if %13 {
      %c0_13 = arith.constant 0 : index
      %c0_14 = arith.constant 0 : index
      %14 = vector.load %arg5[%c0_13, %c0_14] : memref<8x256xf32, #tpu.memory_space<vmem>>, vector<8x256xf32>
      %cst = arith.constant dense<0.000000e+00> : vector<256xf32>
      %15 = vector.multi_reduction <add>, %14, %cst [0] : vector<8x256xf32> to vector<256xf32>
      %16 = vector.shape_cast %15 : vector<256xf32> to vector<1x256xf32>
      %cst_15 = arith.constant 2.500000e-01 : f32
      %17 = vector.broadcast %cst_15 : f32 to vector<1x256xf32>
      %18 = arith.mulf %16, %17 : vector<1x256xf32>
      %c0_16 = arith.constant 0 : index
      %c0_17 = arith.constant 0 : index
      %19 = vector.load %arg5[%c0_16, %c0_17] : memref<8x256xf32, #tpu.memory_space<vmem>>, vector<1x256xf32>
      tpu.vector_store %arg5[%c0_16, %c0_17], %18 {strides = array<i32>} : memref<8x256xf32, #tpu.memory_space<vmem>>, vector<1x256xf32>,
      %c0_18 = arith.constant 0 : index
      %c0_19 = arith.constant 0 : index
      %20 = vector.load %arg6[%c0_18, %c0_19] : memref<8x256xf32, #tpu.memory_space<vmem>>, vector<8x256xf32>
      %cst_20 = arith.constant dense<0xFF800000> : vector<256xf32>
      %21 = vector.multi_reduction <maximumf>, %20, %cst_20 [0] : vector<8x256xf32> to vector<256xf32>
      %22 = vector.shape_cast %21 : vector<256xf32> to vector<1x256xf32>
      %c0_21 = arith.constant 0 : index
      %c0_22 = arith.constant 0 : index
      %23 = vector.load %arg6[%c0_21, %c0_22] : memref<8x256xf32, #tpu.memory_space<vmem>>, vector<1x256xf32>
      tpu.vector_store %arg6[%c0_21, %c0_22], %22 {strides = array<i32>} : memref<8x256xf32, #tpu.memory_space<vmem>>, vector<1x256xf32>,
      %cst_23 = arith.constant 0.000000e+00 : f32
      %24 = vector.broadcast %cst_23 : f32 to vector<2x22x22xf32>
      %c0_24 = arith.constant 0 : index
      %c0_25 = arith.constant 0 : index
      %c0_26 = arith.constant 0 : index
      %25 = vector.load %arg7[%c0_24, %c0_25, %c0_26] : memref<2x22x22xf32, #tpu.memory_space<vmem>>, vector<2x22x22xf32>
      tpu.vector_store %arg7[%c0_24, %c0_25, %c0_26], %24 {strides = array<i32>} : memref<2x22x22xf32, #tpu.memory_space<vmem>>, vector<2x22x22xf32>,
      %c0_27 = arith.constant 0 : index
      %c0_28 = arith.constant 0 : index
      %26 = vector.load %arg5[%c0_27, %c0_28] : memref<8x256xf32, #tpu.memory_space<vmem>>, vector<1x16xf32>
      %27 = vector.shape_cast %26 : vector<1x16xf32> to vector<16xf32>
      %c0_29 = arith.constant 0 : index
      %c3 = arith.constant 3 : index
      %c3_30 = arith.constant 3 : index
      %28 = vector.load %arg7[%c0_29, %c3, %c3_30] : memref<2x22x22xf32, #tpu.memory_space<vmem>>, vector<1x1x16xf32>
      %29 = vector.shape_cast %28 : vector<1x1x16xf32> to vector<16xf32>
      %30 = vector.shape_cast %27 : vector<16xf32> to vector<1x1x16xf32>
      tpu.vector_store %arg7[%c0_29, %c3, %c3_30], %30 {strides = array<i32>} : memref<2x22x22xf32, #tpu.memory_space<vmem>>, vector<1x1x16xf32>,
      %c0_31 = arith.constant 0 : index
      %c0_32 = arith.constant 0 : index
      %31 = vector.load %arg6[%c0_31, %c0_32] : memref<8x256xf32, #tpu.memory_space<vmem>>, vector<1x16xf32>
      %32 = vector.shape_cast %31 : vector<1x16xf32> to vector<16xf32>
      %c1 = arith.constant 1 : index
      %c3_33 = arith.constant 3 : index
      %c3_34 = arith.constant 3 : index
      %33 = vector.load %arg7[%c1, %c3_33, %c3_34] : memref<2x22x22xf32, #tpu.memory_space<vmem>>, vector<1x1x16xf32>
      %34 = vector.shape_cast %33 : vector<1x1x16xf32> to vector<16xf32>
      %35 = vector.shape_cast %32 : vector<16xf32> to vector<1x1x16xf32>
      tpu.vector_store %arg7[%c1, %c3_33, %c3_34], %35 {strides = array<i32>} : memref<2x22x22xf32, #tpu.memory_space<vmem>>, vector<1x1x16xf32>,
      %c0_35 = arith.constant 0 : index
      %c16 = arith.constant 16 : index
      %36 = vector.load %arg5[%c0_35, %c16] : memref<8x256xf32, #tpu.memory_space<vmem>>, vector<1x16xf32>
      %37 = vector.shape_cast %36 : vector<1x16xf32> to vector<16xf32>
      %c0_36 = arith.constant 0 : index
      %c4 = arith.constant 4 : index
      %c3_37 = arith.constant 3 : index
      %38 = vector.load %arg7[%c0_36, %c4, %c3_37] : memref<2x22x22xf32, #tpu.memory_space<vmem>>, vector<1x1x16xf32>
      %39 = vector.shape_cast %38 : vector<1x1x16xf32> to vector<16xf32>
      %40 = vector.shape_cast %37 : vector<16xf32> to vector<1x1x16xf32>
      tpu.vector_store %arg7[%c0_36, %c4, %c3_37], %40 {strides = array<i32>} : memref<2x22x22xf32, #tpu.memory_space<vmem>>, vector<1x1x16xf32>,
      %c0_38 = arith.constant 0 : index
      %c16_39 = arith.constant 16 : index
      %41 = vector.load %arg6[%c0_38, %c16_39] : memref<8x256xf32, #tpu.memory_space<vmem>>, vector<1x16xf32>
      %42 = vector.shape_cast %41 : vector<1x16xf32> to vector<16xf32>
      %c1_40 = arith.constant 1 : index
      %c4_41 = arith.constant 4 : index
      %c3_42 = arith.constant 3 : index
      %43 = vector.load %arg7[%c1_40, %c4_41, %c3_42] : memref<2x22x22xf32, #tpu.memory_space<vmem>>, vector<1x1x16xf32>
      %44 = vector.shape_cast %43 : vector<1x1x16xf32> to vector<16xf32>
      %45 = vector.shape_cast %42 : vector<16xf32> to vector<1x1x16xf32>
      tpu.vector_store %arg7[%c1_40, %c4_41, %c3_42], %45 {strides = array<i32>} : memref<2x22x22xf32, #tpu.memory_space<vmem>>, vector<1x1x16xf32>,
      %c0_43 = arith.constant 0 : index
      %c32 = arith.constant 32 : index
      %46 = vector.load %arg5[%c0_43, %c32] : memref<8x256xf32, #tpu.memory_space<vmem>>, vector<1x16xf32>
      %47 = vector.shape_cast %46 : vector<1x16xf32> to vector<16xf32>
      %c0_44 = arith.constant 0 : index
      %c5 = arith.constant 5 : index
      %c3_45 = arith.constant 3 : index
      %48 = vector.load %arg7[%c0_44, %c5, %c3_45] : memref<2x22x22xf32, #tpu.memory_space<vmem>>, vector<1x1x16xf32>
      %49 = vector.shape_cast %48 : vector<1x1x16xf32> to vector<16xf32>
      %50 = vector.shape_cast %47 : vector<16xf32> to vector<1x1x16xf32>
      tpu.vector_store %arg7[%c0_44, %c5, %c3_45], %50 {strides = array<i32>} : memref<2x22x22xf32, #tpu.memory_space<vmem>>, vector<1x1x16xf32>,
      %c0_46 = arith.constant 0 : index
      %c32_47 = arith.constant 32 : index
      %51 = vector.load %arg6[%c0_46, %c32_47] : memref<8x256xf32, #tpu.memory_space<vmem>>, vector<1x16xf32>
      %52 = vector.shape_cast %51 : vector<1x16xf32> to vector<16xf32>
      %c1_48 = arith.constant 1 : index
      %c5_49 = arith.constant 5 : index
      %c3_50 = arith.constant 3 : index
      %53 = vector.load %arg7[%c1_48, %c5_49, %c3_50] : memref<2x22x22xf32, #tpu.memory_space<vmem>>, vector<1x1x16xf32>
      %54 = vector.shape_cast %53 : vector<1x1x16xf32> to vector<16xf32>
      %55 = vector.shape_cast %52 : vector<16xf32> to vector<1x1x16xf32>
      tpu.vector_store %arg7[%c1_48, %c5_49, %c3_50], %55 {strides = array<i32>} : memref<2x22x22xf32, #tpu.memory_space<vmem>>, vector<1x1x16xf32>,
      %c0_51 = arith.constant 0 : index
      %c48 = arith.constant 48 : index
      %56 = vector.load %arg5[%c0_51, %c48] : memref<8x256xf32, #tpu.memory_space<vmem>>, vector<1x16xf32>
      %57 = vector.shape_cast %56 : vector<1x16xf32> to vector<16xf32>
      %c0_52 = arith.constant 0 : index
      %c6 = arith.constant 6 : index
      %c3_53 = arith.constant 3 : index
      %58 = vector.load %arg7[%c0_52, %c6, %c3_53] : memref<2x22x22xf32, #tpu.memory_space<vmem>>, vector<1x1x16xf32>
      %59 = vector.shape_cast %58 : vector<1x1x16xf32> to vector<16xf32>
      %60 = vector.shape_cast %57 : vector<16xf32> to vector<1x1x16xf32>
      tpu.vector_store %arg7[%c0_52, %c6, %c3_53], %60 {strides = array<i32>} : memref<2x22x22xf32, #tpu.memory_space<vmem>>, vector<1x1x16xf32>,
      %c0_54 = arith.constant 0 : index
      %c48_55 = arith.constant 48 : index
      %61 = vector.load %arg6[%c0_54, %c48_55] : memref<8x256xf32, #tpu.memory_space<vmem>>, vector<1x16xf32>
      %62 = vector.shape_cast %61 : vector<1x16xf32> to vector<16xf32>
      %c1_56 = arith.constant 1 : index
      %c6_57 = arith.constant 6 : index
      %c3_58 = arith.constant 3 : index
      %63 = vector.load %arg7[%c1_56, %c6_57, %c3_58] : memref<2x22x22xf32, #tpu.memory_space<vmem>>, vector<1x1x16xf32>
      %64 = vector.shape_cast %63 : vector<1x1x16xf32> to vector<16xf32>
      %65 = vector.shape_cast %62 : vector<16xf32> to vector<1x1x16xf32>
      tpu.vector_store %arg7[%c1_56, %c6_57, %c3_58], %65 {strides = array<i32>} : memref<2x22x22xf32, #tpu.memory_space<vmem>>, vector<1x1x16xf32>,
      %c0_59 = arith.constant 0 : index
      %c64 = arith.constant 64 : index
      %66 = vector.load %arg5[%c0_59, %c64] : memref<8x256xf32, #tpu.memory_space<vmem>>, vector<1x16xf32>
      %67 = vector.shape_cast %66 : vector<1x16xf32> to vector<16xf32>
      %c0_60 = arith.constant 0 : index
      %c7 = arith.constant 7 : index
      %c3_61 = arith.constant 3 : index
      %68 = vector.load %arg7[%c0_60, %c7, %c3_61] : memref<2x22x22xf32, #tpu.memory_space<vmem>>, vector<1x1x16xf32>
      %69 = vector.shape_cast %68 : vector<1x1x16xf32> to vector<16xf32>
      %70 = vector.shape_cast %67 : vector<16xf32> to vector<1x1x16xf32>
      tpu.vector_store %arg7[%c0_60, %c7, %c3_61], %70 {strides = array<i32>} : memref<2x22x22xf32, #tpu.memory_space<vmem>>, vector<1x1x16xf32>,
      %c0_62 = arith.constant 0 : index
      %c64_63 = arith.constant 64 : index
      %71 = vector.load %arg6[%c0_62, %c64_63] : memref<8x256xf32, #tpu.memory_space<vmem>>, vector<1x16xf32>
      %72 = vector.shape_cast %71 : vector<1x16xf32> to vector<16xf32>
      %c1_64 = arith.constant 1 : index
      %c7_65 = arith.constant 7 : index
      %c3_66 = arith.constant 3 : index
      %73 = vector.load %arg7[%c1_64, %c7_65, %c3_66] : memref<2x22x22xf32, #tpu.memory_space<vmem>>, vector<1x1x16xf32>
      %74 = vector.shape_cast %73 : vector<1x1x16xf32> to vector<16xf32>
      %75 = vector.shape_cast %72 : vector<16xf32> to vector<1x1x16xf32>
      tpu.vector_store %arg7[%c1_64, %c7_65, %c3_66], %75 {strides = array<i32>} : memref<2x22x22xf32, #tpu.memory_space<vmem>>, vector<1x1x16xf32>,
      %c0_67 = arith.constant 0 : index
      %c80 = arith.constant 80 : index
      %76 = vector.load %arg5[%c0_67, %c80] : memref<8x256xf32, #tpu.memory_space<vmem>>, vector<1x16xf32>
      %77 = vector.shape_cast %76 : vector<1x16xf32> to vector<16xf32>
      %c0_68 = arith.constant 0 : index
      %c8 = arith.constant 8 : index
      %c3_69 = arith.constant 3 : index
      %78 = vector.load %arg7[%c0_68, %c8, %c3_69] : memref<2x22x22xf32, #tpu.memory_space<vmem>>, vector<1x1x16xf32>
      %79 = vector.shape_cast %78 : vector<1x1x16xf32> to vector<16xf32>
      %80 = vector.shape_cast %77 : vector<16xf32> to vector<1x1x16xf32>
      tpu.vector_store %arg7[%c0_68, %c8, %c3_69], %80 {strides = array<i32>} : memref<2x22x22xf32, #tpu.memory_space<vmem>>, vector<1x1x16xf32>,
      %c0_70 = arith.constant 0 : index
      %c80_71 = arith.constant 80 : index
      %81 = vector.load %arg6[%c0_70, %c80_71] : memref<8x256xf32, #tpu.memory_space<vmem>>, vector<1x16xf32>
      %82 = vector.shape_cast %81 : vector<1x16xf32> to vector<16xf32>
      %c1_72 = arith.constant 1 : index
      %c8_73 = arith.constant 8 : index
      %c3_74 = arith.constant 3 : index
      %83 = vector.load %arg7[%c1_72, %c8_73, %c3_74] : memref<2x22x22xf32, #tpu.memory_space<vmem>>, vector<1x1x16xf32>
      %84 = vector.shape_cast %83 : vector<1x1x16xf32> to vector<16xf32>
      %85 = vector.shape_cast %82 : vector<16xf32> to vector<1x1x16xf32>
      tpu.vector_store %arg7[%c1_72, %c8_73, %c3_74], %85 {strides = array<i32>} : memref<2x22x22xf32, #tpu.memory_space<vmem>>, vector<1x1x16xf32>,
      %c0_75 = arith.constant 0 : index
      %c96 = arith.constant 96 : index
      %86 = vector.load %arg5[%c0_75, %c96] : memref<8x256xf32, #tpu.memory_space<vmem>>, vector<1x16xf32>
      %87 = vector.shape_cast %86 : vector<1x16xf32> to vector<16xf32>
      %c0_76 = arith.constant 0 : index
      %c9 = arith.constant 9 : index
      %c3_77 = arith.constant 3 : index
      %88 = vector.load %arg7[%c0_76, %c9, %c3_77] : memref<2x22x22xf32, #tpu.memory_space<vmem>>, vector<1x1x16xf32>
      %89 = vector.shape_cast %88 : vector<1x1x16xf32> to vector<16xf32>
      %90 = vector.shape_cast %87 : vector<16xf32> to vector<1x1x16xf32>
      tpu.vector_store %arg7[%c0_76, %c9, %c3_77], %90 {strides = array<i32>} : memref<2x22x22xf32, #tpu.memory_space<vmem>>, vector<1x1x16xf32>,
      %c0_78 = arith.constant 0 : index
      %c96_79 = arith.constant 96 : index
      %91 = vector.load %arg6[%c0_78, %c96_79] : memref<8x256xf32, #tpu.memory_space<vmem>>, vector<1x16xf32>
      %92 = vector.shape_cast %91 : vector<1x16xf32> to vector<16xf32>
      %c1_80 = arith.constant 1 : index
      %c9_81 = arith.constant 9 : index
      %c3_82 = arith.constant 3 : index
      %93 = vector.load %arg7[%c1_80, %c9_81, %c3_82] : memref<2x22x22xf32, #tpu.memory_space<vmem>>, vector<1x1x16xf32>
      %94 = vector.shape_cast %93 : vector<1x1x16xf32> to vector<16xf32>
      %95 = vector.shape_cast %92 : vector<16xf32> to vector<1x1x16xf32>
      tpu.vector_store %arg7[%c1_80, %c9_81, %c3_82], %95 {strides = array<i32>} : memref<2x22x22xf32, #tpu.memory_space<vmem>>, vector<1x1x16xf32>,
      %c0_83 = arith.constant 0 : index
      %c112 = arith.constant 112 : index
      %96 = vector.load %arg5[%c0_83, %c112] : memref<8x256xf32, #tpu.memory_space<vmem>>, vector<1x16xf32>
      %97 = vector.shape_cast %96 : vector<1x16xf32> to vector<16xf32>
      %c0_84 = arith.constant 0 : index
      %c10 = arith.constant 10 : index
      %c3_85 = arith.constant 3 : index
      %98 = vector.load %arg7[%c0_84, %c10, %c3_85] : memref<2x22x22xf32, #tpu.memory_space<vmem>>, vector<1x1x16xf32>
      %99 = vector.shape_cast %98 : vector<1x1x16xf32> to vector<16xf32>
      %100 = vector.shape_cast %97 : vector<16xf32> to vector<1x1x16xf32>
      tpu.vector_store %arg7[%c0_84, %c10, %c3_85], %100 {strides = array<i32>} : memref<2x22x22xf32, #tpu.memory_space<vmem>>, vector<1x1x16xf32>,
      %c0_86 = arith.constant 0 : index
      %c112_87 = arith.constant 112 : index
      %101 = vector.load %arg6[%c0_86, %c112_87] : memref<8x256xf32, #tpu.memory_space<vmem>>, vector<1x16xf32>
      %102 = vector.shape_cast %101 : vector<1x16xf32> to vector<16xf32>
      %c1_88 = arith.constant 1 : index
      %c10_89 = arith.constant 10 : index
      %c3_90 = arith.constant 3 : index
      %103 = vector.load %arg7[%c1_88, %c10_89, %c3_90] : memref<2x22x22xf32, #tpu.memory_space<vmem>>, vector<1x1x16xf32>
      %104 = vector.shape_cast %103 : vector<1x1x16xf32> to vector<16xf32>
      %105 = vector.shape_cast %102 : vector<16xf32> to vector<1x1x16xf32>
      tpu.vector_store %arg7[%c1_88, %c10_89, %c3_90], %105 {strides = array<i32>} : memref<2x22x22xf32, #tpu.memory_space<vmem>>, vector<1x1x16xf32>,
      %c0_91 = arith.constant 0 : index
      %c128 = arith.constant 128 : index
      %106 = vector.load %arg5[%c0_91, %c128] : memref<8x256xf32, #tpu.memory_space<vmem>>, vector<1x16xf32>
      %107 = vector.shape_cast %106 : vector<1x16xf32> to vector<16xf32>
      %c0_92 = arith.constant 0 : index
      %c11 = arith.constant 11 : index
      %c3_93 = arith.constant 3 : index
      %108 = vector.load %arg7[%c0_92, %c11, %c3_93] : memref<2x22x22xf32, #tpu.memory_space<vmem>>, vector<1x1x16xf32>
      %109 = vector.shape_cast %108 : vector<1x1x16xf32> to vector<16xf32>
      %110 = vector.shape_cast %107 : vector<16xf32> to vector<1x1x16xf32>
      tpu.vector_store %arg7[%c0_92, %c11, %c3_93], %110 {strides = array<i32>} : memref<2x22x22xf32, #tpu.memory_space<vmem>>, vector<1x1x16xf32>,
      %c0_94 = arith.constant 0 : index
      %c128_95 = arith.constant 128 : index
      %111 = vector.load %arg6[%c0_94, %c128_95] : memref<8x256xf32, #tpu.memory_space<vmem>>, vector<1x16xf32>
      %112 = vector.shape_cast %111 : vector<1x16xf32> to vector<16xf32>
      %c1_96 = arith.constant 1 : index
      %c11_97 = arith.constant 11 : index
      %c3_98 = arith.constant 3 : index
      %113 = vector.load %arg7[%c1_96, %c11_97, %c3_98] : memref<2x22x22xf32, #tpu.memory_space<vmem>>, vector<1x1x16xf32>
      %114 = vector.shape_cast %113 : vector<1x1x16xf32> to vector<16xf32>
      %115 = vector.shape_cast %112 : vector<16xf32> to vector<1x1x16xf32>
      tpu.vector_store %arg7[%c1_96, %c11_97, %c3_98], %115 {strides = array<i32>} : memref<2x22x22xf32, #tpu.memory_space<vmem>>, vector<1x1x16xf32>,
      %c0_99 = arith.constant 0 : index
      %c144 = arith.constant 144 : index
      %116 = vector.load %arg5[%c0_99, %c144] : memref<8x256xf32, #tpu.memory_space<vmem>>, vector<1x16xf32>
      %117 = vector.shape_cast %116 : vector<1x16xf32> to vector<16xf32>
      %c0_100 = arith.constant 0 : index
      %c12 = arith.constant 12 : index
      %c3_101 = arith.constant 3 : index
      %118 = vector.load %arg7[%c0_100, %c12, %c3_101] : memref<2x22x22xf32, #tpu.memory_space<vmem>>, vector<1x1x16xf32>
      %119 = vector.shape_cast %118 : vector<1x1x16xf32> to vector<16xf32>
      %120 = vector.shape_cast %117 : vector<16xf32> to vector<1x1x16xf32>
      tpu.vector_store %arg7[%c0_100, %c12, %c3_101], %120 {strides = array<i32>} : memref<2x22x22xf32, #tpu.memory_space<vmem>>, vector<1x1x16xf32>,
      %c0_102 = arith.constant 0 : index
      %c144_103 = arith.constant 144 : index
      %121 = vector.load %arg6[%c0_102, %c144_103] : memref<8x256xf32, #tpu.memory_space<vmem>>, vector<1x16xf32>
      %122 = vector.shape_cast %121 : vector<1x16xf32> to vector<16xf32>
      %c1_104 = arith.constant 1 : index
      %c12_105 = arith.constant 12 : index
      %c3_106 = arith.constant 3 : index
      %123 = vector.load %arg7[%c1_104, %c12_105, %c3_106] : memref<2x22x22xf32, #tpu.memory_space<vmem>>, vector<1x1x16xf32>
      %124 = vector.shape_cast %123 : vector<1x1x16xf32> to vector<16xf32>
      %125 = vector.shape_cast %122 : vector<16xf32> to vector<1x1x16xf32>
      tpu.vector_store %arg7[%c1_104, %c12_105, %c3_106], %125 {strides = array<i32>} : memref<2x22x22xf32, #tpu.memory_space<vmem>>, vector<1x1x16xf32>,
      %c0_107 = arith.constant 0 : index
      %c160 = arith.constant 160 : index
      %126 = vector.load %arg5[%c0_107, %c160] : memref<8x256xf32, #tpu.memory_space<vmem>>, vector<1x16xf32>
      %127 = vector.shape_cast %126 : vector<1x16xf32> to vector<16xf32>
      %c0_108 = arith.constant 0 : index
      %c13 = arith.constant 13 : index
      %c3_109 = arith.constant 3 : index
      %128 = vector.load %arg7[%c0_108, %c13, %c3_109] : memref<2x22x22xf32, #tpu.memory_space<vmem>>, vector<1x1x16xf32>
      %129 = vector.shape_cast %128 : vector<1x1x16xf32> to vector<16xf32>
      %130 = vector.shape_cast %127 : vector<16xf32> to vector<1x1x16xf32>
      tpu.vector_store %arg7[%c0_108, %c13, %c3_109], %130 {strides = array<i32>} : memref<2x22x22xf32, #tpu.memory_space<vmem>>, vector<1x1x16xf32>,
      %c0_110 = arith.constant 0 : index
      %c160_111 = arith.constant 160 : index
      %131 = vector.load %arg6[%c0_110, %c160_111] : memref<8x256xf32, #tpu.memory_space<vmem>>, vector<1x16xf32>
      %132 = vector.shape_cast %131 : vector<1x16xf32> to vector<16xf32>
      %c1_112 = arith.constant 1 : index
      %c13_113 = arith.constant 13 : index
      %c3_114 = arith.constant 3 : index
      %133 = vector.load %arg7[%c1_112, %c13_113, %c3_114] : memref<2x22x22xf32, #tpu.memory_space<vmem>>, vector<1x1x16xf32>
      %134 = vector.shape_cast %133 : vector<1x1x16xf32> to vector<16xf32>
      %135 = vector.shape_cast %132 : vector<16xf32> to vector<1x1x16xf32>
      tpu.vector_store %arg7[%c1_112, %c13_113, %c3_114], %135 {strides = array<i32>} : memref<2x22x22xf32, #tpu.memory_space<vmem>>, vector<1x1x16xf32>,
      %c0_115 = arith.constant 0 : index
      %c176 = arith.constant 176 : index
      %136 = vector.load %arg5[%c0_115, %c176] : memref<8x256xf32, #tpu.memory_space<vmem>>, vector<1x16xf32>
      %137 = vector.shape_cast %136 : vector<1x16xf32> to vector<16xf32>
      %c0_116 = arith.constant 0 : index
      %c14 = arith.constant 14 : index
      %c3_117 = arith.constant 3 : index
      %138 = vector.load %arg7[%c0_116, %c14, %c3_117] : memref<2x22x22xf32, #tpu.memory_space<vmem>>, vector<1x1x16xf32>
      %139 = vector.shape_cast %138 : vector<1x1x16xf32> to vector<16xf32>
      %140 = vector.shape_cast %137 : vector<16xf32> to vector<1x1x16xf32>
      tpu.vector_store %arg7[%c0_116, %c14, %c3_117], %140 {strides = array<i32>} : memref<2x22x22xf32, #tpu.memory_space<vmem>>, vector<1x1x16xf32>,
      %c0_118 = arith.constant 0 : index
      %c176_119 = arith.constant 176 : index
      %141 = vector.load %arg6[%c0_118, %c176_119] : memref<8x256xf32, #tpu.memory_space<vmem>>, vector<1x16xf32>
      %142 = vector.shape_cast %141 : vector<1x16xf32> to vector<16xf32>
      %c1_120 = arith.constant 1 : index
      %c14_121 = arith.constant 14 : index
      %c3_122 = arith.constant 3 : index
      %143 = vector.load %arg7[%c1_120, %c14_121, %c3_122] : memref<2x22x22xf32, #tpu.memory_space<vmem>>, vector<1x1x16xf32>
      %144 = vector.shape_cast %143 : vector<1x1x16xf32> to vector<16xf32>
      %145 = vector.shape_cast %142 : vector<16xf32> to vector<1x1x16xf32>
      tpu.vector_store %arg7[%c1_120, %c14_121, %c3_122], %145 {strides = array<i32>} : memref<2x22x22xf32, #tpu.memory_space<vmem>>, vector<1x1x16xf32>,
      %c0_123 = arith.constant 0 : index
      %c192 = arith.constant 192 : index
      %146 = vector.load %arg5[%c0_123, %c192] : memref<8x256xf32, #tpu.memory_space<vmem>>, vector<1x16xf32>
      %147 = vector.shape_cast %146 : vector<1x16xf32> to vector<16xf32>
      %c0_124 = arith.constant 0 : index
      %c15 = arith.constant 15 : index
      %c3_125 = arith.constant 3 : index
      %148 = vector.load %arg7[%c0_124, %c15, %c3_125] : memref<2x22x22xf32, #tpu.memory_space<vmem>>, vector<1x1x16xf32>
      %149 = vector.shape_cast %148 : vector<1x1x16xf32> to vector<16xf32>
      %150 = vector.shape_cast %147 : vector<16xf32> to vector<1x1x16xf32>
      tpu.vector_store %arg7[%c0_124, %c15, %c3_125], %150 {strides = array<i32>} : memref<2x22x22xf32, #tpu.memory_space<vmem>>, vector<1x1x16xf32>,
      %c0_126 = arith.constant 0 : index
      %c192_127 = arith.constant 192 : index
      %151 = vector.load %arg6[%c0_126, %c192_127] : memref<8x256xf32, #tpu.memory_space<vmem>>, vector<1x16xf32>
      %152 = vector.shape_cast %151 : vector<1x16xf32> to vector<16xf32>
      %c1_128 = arith.constant 1 : index
      %c15_129 = arith.constant 15 : index
      %c3_130 = arith.constant 3 : index
      %153 = vector.load %arg7[%c1_128, %c15_129, %c3_130] : memref<2x22x22xf32, #tpu.memory_space<vmem>>, vector<1x1x16xf32>
      %154 = vector.shape_cast %153 : vector<1x1x16xf32> to vector<16xf32>
      %155 = vector.shape_cast %152 : vector<16xf32> to vector<1x1x16xf32>
      tpu.vector_store %arg7[%c1_128, %c15_129, %c3_130], %155 {strides = array<i32>} : memref<2x22x22xf32, #tpu.memory_space<vmem>>, vector<1x1x16xf32>,
      %c0_131 = arith.constant 0 : index
      %c208 = arith.constant 208 : index
      %156 = vector.load %arg5[%c0_131, %c208] : memref<8x256xf32, #tpu.memory_space<vmem>>, vector<1x16xf32>
      %157 = vector.shape_cast %156 : vector<1x16xf32> to vector<16xf32>
      %c0_132 = arith.constant 0 : index
      %c16_133 = arith.constant 16 : index
      %c3_134 = arith.constant 3 : index
      %158 = vector.load %arg7[%c0_132, %c16_133, %c3_134] : memref<2x22x22xf32, #tpu.memory_space<vmem>>, vector<1x1x16xf32>
      %159 = vector.shape_cast %158 : vector<1x1x16xf32> to vector<16xf32>
      %160 = vector.shape_cast %157 : vector<16xf32> to vector<1x1x16xf32>
      tpu.vector_store %arg7[%c0_132, %c16_133, %c3_134], %160 {strides = array<i32>} : memref<2x22x22xf32, #tpu.memory_space<vmem>>, vector<1x1x16xf32>,
      %c0_135 = arith.constant 0 : index
      %c208_136 = arith.constant 208 : index
      %161 = vector.load %arg6[%c0_135, %c208_136] : memref<8x256xf32, #tpu.memory_space<vmem>>, vector<1x16xf32>
      %162 = vector.shape_cast %161 : vector<1x16xf32> to vector<16xf32>
      %c1_137 = arith.constant 1 : index
      %c16_138 = arith.constant 16 : index
      %c3_139 = arith.constant 3 : index
      %163 = vector.load %arg7[%c1_137, %c16_138, %c3_139] : memref<2x22x22xf32, #tpu.memory_space<vmem>>, vector<1x1x16xf32>
      %164 = vector.shape_cast %163 : vector<1x1x16xf32> to vector<16xf32>
      %165 = vector.shape_cast %162 : vector<16xf32> to vector<1x1x16xf32>
      tpu.vector_store %arg7[%c1_137, %c16_138, %c3_139], %165 {strides = array<i32>} : memref<2x22x22xf32, #tpu.memory_space<vmem>>, vector<1x1x16xf32>,
      %c0_140 = arith.constant 0 : index
      %c224 = arith.constant 224 : index
      %166 = vector.load %arg5[%c0_140, %c224] : memref<8x256xf32, #tpu.memory_space<vmem>>, vector<1x16xf32>
      %167 = vector.shape_cast %166 : vector<1x16xf32> to vector<16xf32>
      %c0_141 = arith.constant 0 : index
      %c17 = arith.constant 17 : index
      %c3_142 = arith.constant 3 : index
      %168 = vector.load %arg7[%c0_141, %c17, %c3_142] : memref<2x22x22xf32, #tpu.memory_space<vmem>>, vector<1x1x16xf32>
      %169 = vector.shape_cast %168 : vector<1x1x16xf32> to vector<16xf32>
      %170 = vector.shape_cast %167 : vector<16xf32> to vector<1x1x16xf32>
      tpu.vector_store %arg7[%c0_141, %c17, %c3_142], %170 {strides = array<i32>} : memref<2x22x22xf32, #tpu.memory_space<vmem>>, vector<1x1x16xf32>,
      %c0_143 = arith.constant 0 : index
      %c224_144 = arith.constant 224 : index
      %171 = vector.load %arg6[%c0_143, %c224_144] : memref<8x256xf32, #tpu.memory_space<vmem>>, vector<1x16xf32>
      %172 = vector.shape_cast %171 : vector<1x16xf32> to vector<16xf32>
      %c1_145 = arith.constant 1 : index
      %c17_146 = arith.constant 17 : index
      %c3_147 = arith.constant 3 : index
      %173 = vector.load %arg7[%c1_145, %c17_146, %c3_147] : memref<2x22x22xf32, #tpu.memory_space<vmem>>, vector<1x1x16xf32>
      %174 = vector.shape_cast %173 : vector<1x1x16xf32> to vector<16xf32>
      %175 = vector.shape_cast %172 : vector<16xf32> to vector<1x1x16xf32>
      tpu.vector_store %arg7[%c1_145, %c17_146, %c3_147], %175 {strides = array<i32>} : memref<2x22x22xf32, #tpu.memory_space<vmem>>, vector<1x1x16xf32>,
      %c0_148 = arith.constant 0 : index
      %c240 = arith.constant 240 : index
      %176 = vector.load %arg5[%c0_148, %c240] : memref<8x256xf32, #tpu.memory_space<vmem>>, vector<1x16xf32>
      %177 = vector.shape_cast %176 : vector<1x16xf32> to vector<16xf32>
      %c0_149 = arith.constant 0 : index
      %c18 = arith.constant 18 : index
      %c3_150 = arith.constant 3 : index
      %178 = vector.load %arg7[%c0_149, %c18, %c3_150] : memref<2x22x22xf32, #tpu.memory_space<vmem>>, vector<1x1x16xf32>
      %179 = vector.shape_cast %178 : vector<1x1x16xf32> to vector<16xf32>
      %180 = vector.shape_cast %177 : vector<16xf32> to vector<1x1x16xf32>
      tpu.vector_store %arg7[%c0_149, %c18, %c3_150], %180 {strides = array<i32>} : memref<2x22x22xf32, #tpu.memory_space<vmem>>, vector<1x1x16xf32>,
      %c0_151 = arith.constant 0 : index
      %c240_152 = arith.constant 240 : index
      %181 = vector.load %arg6[%c0_151, %c240_152] : memref<8x256xf32, #tpu.memory_space<vmem>>, vector<1x16xf32>
      %182 = vector.shape_cast %181 : vector<1x16xf32> to vector<16xf32>
      %c1_153 = arith.constant 1 : index
      %c18_154 = arith.constant 18 : index
      %c3_155 = arith.constant 3 : index
      %183 = vector.load %arg7[%c1_153, %c18_154, %c3_155] : memref<2x22x22xf32, #tpu.memory_space<vmem>>, vector<1x1x16xf32>
      %184 = vector.shape_cast %183 : vector<1x1x16xf32> to vector<16xf32>
      %185 = vector.shape_cast %182 : vector<16xf32> to vector<1x1x16xf32>
      tpu.vector_store %arg7[%c1_153, %c18_154, %c3_155], %185 {strides = array<i32>} : memref<2x22x22xf32, #tpu.memory_space<vmem>>, vector<1x1x16xf32>,
      %cst_156 = arith.constant 0.000000e+00 : f32
      %186 = vector.broadcast %cst_156 : f32 to vector<16x16xf32>
      %c0_157 = arith.constant 0 : index
      %c0_158 = arith.constant 0 : index
      %187 = vector.load %arg9[%c0_157, %c0_158] : memref<16x16xf32, #tpu.memory_space<vmem>>, vector<16x16xf32>
      tpu.vector_store %arg9[%c0_157, %c0_158], %186 {strides = array<i32>} : memref<16x16xf32, #tpu.memory_space<vmem>>, vector<16x16xf32>,
      %c0_159 = arith.constant 0 : index
      %c0_160 = arith.constant 0 : index
      %c0_161 = arith.constant 0 : index
      %188 = vector.load %arg7[%c0_159, %c0_160, %c0_161] : memref<2x22x22xf32, #tpu.memory_space<vmem>>, vector<1x22x16xf32>
      %189 = vector.shape_cast %188 : vector<1x22x16xf32> to vector<22x16xf32>
      %c0_162 = arith.constant 0 : index
      %c0_163 = arith.constant 0 : index
      %190 = vector.load %arg8[%c0_162, %c0_163] : memref<22x16xf32, #tpu.memory_space<vmem>>, vector<22x16xf32>
      tpu.vector_store %arg8[%c0_162, %c0_163], %189 {strides = array<i32>} : memref<22x16xf32, #tpu.memory_space<vmem>>, vector<22x16xf32>,
      %c0_164 = arith.constant 0 : index
      %191 = memref.load %arg2[%c0_164] : memref<98xf32, #tpu.memory_space<smem>>
      %c0_165 = arith.constant 0 : index
      %c0_166 = arith.constant 0 : index
      %192 = vector.load %arg9[%c0_165, %c0_166] : memref<16x16xf32, #tpu.memory_space<vmem>>, vector<16x16xf32>
      %c0_167 = arith.constant 0 : index
      %c0_168 = arith.constant 0 : index
      %193 = vector.load %arg8[%c0_167, %c0_168] : memref<22x16xf32, #tpu.memory_space<vmem>>, vector<16x16xf32>
      %194 = vector.broadcast %191 : f32 to vector<16x16xf32>
      %195 = arith.mulf %194, %193 : vector<16x16xf32>
      %196 = arith.addf %192, %195 : vector<16x16xf32>
      %c0_169 = arith.constant 0 : index
      %c0_170 = arith.constant 0 : index
      %197 = vector.load %arg9[%c0_169, %c0_170] : memref<16x16xf32, #tpu.memory_space<vmem>>, vector<16x16xf32>
      tpu.vector_store %arg9[%c0_169, %c0_170], %196 {strides = array<i32>} : memref<16x16xf32, #tpu.memory_space<vmem>>, vector<16x16xf32>,
      %c7_171 = arith.constant 7 : index
      %198 = memref.load %arg2[%c7_171] : memref<98xf32, #tpu.memory_space<smem>>
      %c0_172 = arith.constant 0 : index
      %c0_173 = arith.constant 0 : index
      %199 = vector.load %arg9[%c0_172, %c0_173] : memref<16x16xf32, #tpu.memory_space<vmem>>, vector<16x16xf32>
      %c1_174 = arith.constant 1 : index
      %c0_175 = arith.constant 0 : index
      %200 = vector.load %arg8[%c1_174, %c0_175] : memref<22x16xf32, #tpu.memory_space<vmem>>, vector<16x16xf32>
      %201 = vector.broadcast %198 : f32 to vector<16x16xf32>
      %202 = arith.mulf %201, %200 : vector<16x16xf32>
      %203 = arith.addf %199, %202 : vector<16x16xf32>
      %c0_176 = arith.constant 0 : index
      %c0_177 = arith.constant 0 : index
      %204 = vector.load %arg9[%c0_176, %c0_177] : memref<16x16xf32, #tpu.memory_space<vmem>>, vector<16x16xf32>
      tpu.vector_store %arg9[%c0_176, %c0_177], %203 {strides = array<i32>} : memref<16x16xf32, #tpu.memory_space<vmem>>, vector<16x16xf32>,
      %c14_178 = arith.constant 14 : index
      %205 = memref.load %arg2[%c14_178] : memref<98xf32, #tpu.memory_space<smem>>
      %c0_179 = arith.constant 0 : index
      %c0_180 = arith.constant 0 : index
      %206 = vector.load %arg9[%c0_179, %c0_180] : memref<16x16xf32, #tpu.memory_space<vmem>>, vector<16x16xf32>
      %c2 = arith.constant 2 : index
      %c0_181 = arith.constant 0 : index
      %207 = vector.load %arg8[%c2, %c0_181] : memref<22x16xf32, #tpu.memory_space<vmem>>, vector<16x16xf32>
      %208 = vector.broadcast %205 : f32 to vector<16x16xf32>
      %209 = arith.mulf %208, %207 : vector<16x16xf32>
      %210 = arith.addf %206, %209 : vector<16x16xf32>
      %c0_182 = arith.constant 0 : index
      %c0_183 = arith.constant 0 : index
      %211 = vector.load %arg9[%c0_182, %c0_183] : memref<16x16xf32, #tpu.memory_space<vmem>>, vector<16x16xf32>
      tpu.vector_store %arg9[%c0_182, %c0_183], %210 {strides = array<i32>} : memref<16x16xf32, #tpu.memory_space<vmem>>, vector<16x16xf32>,
      %c21 = arith.constant 21 : index
      %212 = memref.load %arg2[%c21] : memref<98xf32, #tpu.memory_space<smem>>
      %c0_184 = arith.constant 0 : index
      %c0_185 = arith.constant 0 : index
      %213 = vector.load %arg9[%c0_184, %c0_185] : memref<16x16xf32, #tpu.memory_space<vmem>>, vector<16x16xf32>
      %c3_186 = arith.constant 3 : index
      %c0_187 = arith.constant 0 : index
      %214 = vector.load %arg8[%c3_186, %c0_187] : memref<22x16xf32, #tpu.memory_space<vmem>>, vector<16x16xf32>
      %215 = vector.broadcast %212 : f32 to vector<16x16xf32>
      %216 = arith.mulf %215, %214 : vector<16x16xf32>
      %217 = arith.addf %213, %216 : vector<16x16xf32>
      %c0_188 = arith.constant 0 : index
      %c0_189 = arith.constant 0 : index
      %218 = vector.load %arg9[%c0_188, %c0_189] : memref<16x16xf32, #tpu.memory_space<vmem>>, vector<16x16xf32>
      tpu.vector_store %arg9[%c0_188, %c0_189], %217 {strides = array<i32>} : memref<16x16xf32, #tpu.memory_space<vmem>>, vector<16x16xf32>,
      %c28 = arith.constant 28 : index
      %219 = memref.load %arg2[%c28] : memref<98xf32, #tpu.memory_space<smem>>
      %c0_190 = arith.constant 0 : index
      %c0_191 = arith.constant 0 : index
      %220 = vector.load %arg9[%c0_190, %c0_191] : memref<16x16xf32, #tpu.memory_space<vmem>>, vector<16x16xf32>
      %c4_192 = arith.constant 4 : index
      %c0_193 = arith.constant 0 : index
      %221 = vector.load %arg8[%c4_192, %c0_193] : memref<22x16xf32, #tpu.memory_space<vmem>>, vector<16x16xf32>
      %222 = vector.broadcast %219 : f32 to vector<16x16xf32>
      %223 = arith.mulf %222, %221 : vector<16x16xf32>
      %224 = arith.addf %220, %223 : vector<16x16xf32>
      %c0_194 = arith.constant 0 : index
      %c0_195 = arith.constant 0 : index
      %225 = vector.load %arg9[%c0_194, %c0_195] : memref<16x16xf32, #tpu.memory_space<vmem>>, vector<16x16xf32>
      tpu.vector_store %arg9[%c0_194, %c0_195], %224 {strides = array<i32>} : memref<16x16xf32, #tpu.memory_space<vmem>>, vector<16x16xf32>,
      %c35 = arith.constant 35 : index
      %226 = memref.load %arg2[%c35] : memref<98xf32, #tpu.memory_space<smem>>
      %c0_196 = arith.constant 0 : index
      %c0_197 = arith.constant 0 : index
      %227 = vector.load %arg9[%c0_196, %c0_197] : memref<16x16xf32, #tpu.memory_space<vmem>>, vector<16x16xf32>
      %c5_198 = arith.constant 5 : index
      %c0_199 = arith.constant 0 : index
      %228 = vector.load %arg8[%c5_198, %c0_199] : memref<22x16xf32, #tpu.memory_space<vmem>>, vector<16x16xf32>
      %229 = vector.broadcast %226 : f32 to vector<16x16xf32>
      %230 = arith.mulf %229, %228 : vector<16x16xf32>
      %231 = arith.addf %227, %230 : vector<16x16xf32>
      %c0_200 = arith.constant 0 : index
      %c0_201 = arith.constant 0 : index
      %232 = vector.load %arg9[%c0_200, %c0_201] : memref<16x16xf32, #tpu.memory_space<vmem>>, vector<16x16xf32>
      tpu.vector_store %arg9[%c0_200, %c0_201], %231 {strides = array<i32>} : memref<16x16xf32, #tpu.memory_space<vmem>>, vector<16x16xf32>,
      %c42 = arith.constant 42 : index
      %233 = memref.load %arg2[%c42] : memref<98xf32, #tpu.memory_space<smem>>
      %c0_202 = arith.constant 0 : index
      %c0_203 = arith.constant 0 : index
      %234 = vector.load %arg9[%c0_202, %c0_203] : memref<16x16xf32, #tpu.memory_space<vmem>>, vector<16x16xf32>
      %c6_204 = arith.constant 6 : index
      %c0_205 = arith.constant 0 : index
      %235 = vector.load %arg8[%c6_204, %c0_205] : memref<22x16xf32, #tpu.memory_space<vmem>>, vector<16x16xf32>
      %236 = vector.broadcast %233 : f32 to vector<16x16xf32>
      %237 = arith.mulf %236, %235 : vector<16x16xf32>
      %238 = arith.addf %234, %237 : vector<16x16xf32>
      %c0_206 = arith.constant 0 : index
      %c0_207 = arith.constant 0 : index
      %239 = vector.load %arg9[%c0_206, %c0_207] : memref<16x16xf32, #tpu.memory_space<vmem>>, vector<16x16xf32>
      tpu.vector_store %arg9[%c0_206, %c0_207], %238 {strides = array<i32>} : memref<16x16xf32, #tpu.memory_space<vmem>>, vector<16x16xf32>,
      %c0_208 = arith.constant 0 : index
      %c0_209 = arith.constant 0 : index
      %c1_210 = arith.constant 1 : index
      %240 = vector.load %arg7[%c0_208, %c0_209, %c1_210] : memref<2x22x22xf32, #tpu.memory_space<vmem>>, vector<1x22x16xf32>
      %241 = vector.shape_cast %240 : vector<1x22x16xf32> to vector<22x16xf32>
      %c0_211 = arith.constant 0 : index
      %c0_212 = arith.constant 0 : index
      %242 = vector.load %arg8[%c0_211, %c0_212] : memref<22x16xf32, #tpu.memory_space<vmem>>, vector<22x16xf32>
      tpu.vector_store %arg8[%c0_211, %c0_212], %241 {strides = array<i32>} : memref<22x16xf32, #tpu.memory_space<vmem>>, vector<22x16xf32>,
      %c1_213 = arith.constant 1 : index
      %243 = memref.load %arg2[%c1_213] : memref<98xf32, #tpu.memory_space<smem>>
      %c0_214 = arith.constant 0 : index
      %c0_215 = arith.constant 0 : index
      %244 = vector.load %arg9[%c0_214, %c0_215] : memref<16x16xf32, #tpu.memory_space<vmem>>, vector<16x16xf32>
      %c0_216 = arith.constant 0 : index
      %c0_217 = arith.constant 0 : index
      %245 = vector.load %arg8[%c0_216, %c0_217] : memref<22x16xf32, #tpu.memory_space<vmem>>, vector<16x16xf32>
      %246 = vector.broadcast %243 : f32 to vector<16x16xf32>
      %247 = arith.mulf %246, %245 : vector<16x16xf32>
      %248 = arith.addf %244, %247 : vector<16x16xf32>
      %c0_218 = arith.constant 0 : index
      %c0_219 = arith.constant 0 : index
      %249 = vector.load %arg9[%c0_218, %c0_219] : memref<16x16xf32, #tpu.memory_space<vmem>>, vector<16x16xf32>
      tpu.vector_store %arg9[%c0_218, %c0_219], %248 {strides = array<i32>} : memref<16x16xf32, #tpu.memory_space<vmem>>, vector<16x16xf32>,
      %c8_220 = arith.constant 8 : index
      %250 = memref.load %arg2[%c8_220] : memref<98xf32, #tpu.memory_space<smem>>
      %c0_221 = arith.constant 0 : index
      %c0_222 = arith.constant 0 : index
      %251 = vector.load %arg9[%c0_221, %c0_222] : memref<16x16xf32, #tpu.memory_space<vmem>>, vector<16x16xf32>
      %c1_223 = arith.constant 1 : index
      %c0_224 = arith.constant 0 : index
      %252 = vector.load %arg8[%c1_223, %c0_224] : memref<22x16xf32, #tpu.memory_space<vmem>>, vector<16x16xf32>
      %253 = vector.broadcast %250 : f32 to vector<16x16xf32>
      %254 = arith.mulf %253, %252 : vector<16x16xf32>
      %255 = arith.addf %251, %254 : vector<16x16xf32>
      %c0_225 = arith.constant 0 : index
      %c0_226 = arith.constant 0 : index
      %256 = vector.load %arg9[%c0_225, %c0_226] : memref<16x16xf32, #tpu.memory_space<vmem>>, vector<16x16xf32>
      tpu.vector_store %arg9[%c0_225, %c0_226], %255 {strides = array<i32>} : memref<16x16xf32, #tpu.memory_space<vmem>>, vector<16x16xf32>,
      %c15_227 = arith.constant 15 : index
      %257 = memref.load %arg2[%c15_227] : memref<98xf32, #tpu.memory_space<smem>>
      %c0_228 = arith.constant 0 : index
      %c0_229 = arith.constant 0 : index
      %258 = vector.load %arg9[%c0_228, %c0_229] : memref<16x16xf32, #tpu.memory_space<vmem>>, vector<16x16xf32>
      %c2_230 = arith.constant 2 : index
      %c0_231 = arith.constant 0 : index
      %259 = vector.load %arg8[%c2_230, %c0_231] : memref<22x16xf32, #tpu.memory_space<vmem>>, vector<16x16xf32>
      %260 = vector.broadcast %257 : f32 to vector<16x16xf32>
      %261 = arith.mulf %260, %259 : vector<16x16xf32>
      %262 = arith.addf %258, %261 : vector<16x16xf32>
      %c0_232 = arith.constant 0 : index
      %c0_233 = arith.constant 0 : index
      %263 = vector.load %arg9[%c0_232, %c0_233] : memref<16x16xf32, #tpu.memory_space<vmem>>, vector<16x16xf32>
      tpu.vector_store %arg9[%c0_232, %c0_233], %262 {strides = array<i32>} : memref<16x16xf32, #tpu.memory_space<vmem>>, vector<16x16xf32>,
      %c22 = arith.constant 22 : index
      %264 = memref.load %arg2[%c22] : memref<98xf32, #tpu.memory_space<smem>>
      %c0_234 = arith.constant 0 : index
      %c0_235 = arith.constant 0 : index
      %265 = vector.load %arg9[%c0_234, %c0_235] : memref<16x16xf32, #tpu.memory_space<vmem>>, vector<16x16xf32>
      %c3_236 = arith.constant 3 : index
      %c0_237 = arith.constant 0 : index
      %266 = vector.load %arg8[%c3_236, %c0_237] : memref<22x16xf32, #tpu.memory_space<vmem>>, vector<16x16xf32>
      %267 = vector.broadcast %264 : f32 to vector<16x16xf32>
      %268 = arith.mulf %267, %266 : vector<16x16xf32>
      %269 = arith.addf %265, %268 : vector<16x16xf32>
      %c0_238 = arith.constant 0 : index
      %c0_239 = arith.constant 0 : index
      %270 = vector.load %arg9[%c0_238, %c0_239] : memref<16x16xf32, #tpu.memory_space<vmem>>, vector<16x16xf32>
      tpu.vector_store %arg9[%c0_238, %c0_239], %269 {strides = array<i32>} : memref<16x16xf32, #tpu.memory_space<vmem>>, vector<16x16xf32>,
      %c29 = arith.constant 29 : index
      %271 = memref.load %arg2[%c29] : memref<98xf32, #tpu.memory_space<smem>>
      %c0_240 = arith.constant 0 : index
      %c0_241 = arith.constant 0 : index
      %272 = vector.load %arg9[%c0_240, %c0_241] : memref<16x16xf32, #tpu.memory_space<vmem>>, vector<16x16xf32>
      %c4_242 = arith.constant 4 : index
      %c0_243 = arith.constant 0 : index
      %273 = vector.load %arg8[%c4_242, %c0_243] : memref<22x16xf32, #tpu.memory_space<vmem>>, vector<16x16xf32>
      %274 = vector.broadcast %271 : f32 to vector<16x16xf32>
      %275 = arith.mulf %274, %273 : vector<16x16xf32>
      %276 = arith.addf %272, %275 : vector<16x16xf32>
      %c0_244 = arith.constant 0 : index
      %c0_245 = arith.constant 0 : index
      %277 = vector.load %arg9[%c0_244, %c0_245] : memref<16x16xf32, #tpu.memory_space<vmem>>, vector<16x16xf32>
      tpu.vector_store %arg9[%c0_244, %c0_245], %276 {strides = array<i32>} : memref<16x16xf32, #tpu.memory_space<vmem>>, vector<16x16xf32>,
      %c36 = arith.constant 36 : index
      %278 = memref.load %arg2[%c36] : memref<98xf32, #tpu.memory_space<smem>>
      %c0_246 = arith.constant 0 : index
      %c0_247 = arith.constant 0 : index
      %279 = vector.load %arg9[%c0_246, %c0_247] : memref<16x16xf32, #tpu.memory_space<vmem>>, vector<16x16xf32>
      %c5_248 = arith.constant 5 : index
      %c0_249 = arith.constant 0 : index
      %280 = vector.load %arg8[%c5_248, %c0_249] : memref<22x16xf32, #tpu.memory_space<vmem>>, vector<16x16xf32>
      %281 = vector.broadcast %278 : f32 to vector<16x16xf32>
      %282 = arith.mulf %281, %280 : vector<16x16xf32>
      %283 = arith.addf %279, %282 : vector<16x16xf32>
      %c0_250 = arith.constant 0 : index
      %c0_251 = arith.constant 0 : index
      %284 = vector.load %arg9[%c0_250, %c0_251] : memref<16x16xf32, #tpu.memory_space<vmem>>, vector<16x16xf32>
      tpu.vector_store %arg9[%c0_250, %c0_251], %283 {strides = array<i32>} : memref<16x16xf32, #tpu.memory_space<vmem>>, vector<16x16xf32>,
      %c43 = arith.constant 43 : index
      %285 = memref.load %arg2[%c43] : memref<98xf32, #tpu.memory_space<smem>>
      %c0_252 = arith.constant 0 : index
      %c0_253 = arith.constant 0 : index
      %286 = vector.load %arg9[%c0_252, %c0_253] : memref<16x16xf32, #tpu.memory_space<vmem>>, vector<16x16xf32>
      %c6_254 = arith.constant 6 : index
      %c0_255 = arith.constant 0 : index
      %287 = vector.load %arg8[%c6_254, %c0_255] : memref<22x16xf32, #tpu.memory_space<vmem>>, vector<16x16xf32>
      %288 = vector.broadcast %285 : f32 to vector<16x16xf32>
      %289 = arith.mulf %288, %287 : vector<16x16xf32>
      %290 = arith.addf %286, %289 : vector<16x16xf32>
      %c0_256 = arith.constant 0 : index
      %c0_257 = arith.constant 0 : index
      %291 = vector.load %arg9[%c0_256, %c0_257] : memref<16x16xf32, #tpu.memory_space<vmem>>, vector<16x16xf32>
      tpu.vector_store %arg9[%c0_256, %c0_257], %290 {strides = array<i32>} : memref<16x16xf32, #tpu.memory_space<vmem>>, vector<16x16xf32>,
      %c0_258 = arith.constant 0 : index
      %c0_259 = arith.constant 0 : index
      %c2_260 = arith.constant 2 : index
      %292 = vector.load %arg7[%c0_258, %c0_259, %c2_260] : memref<2x22x22xf32, #tpu.memory_space<vmem>>, vector<1x22x16xf32>
      %293 = vector.shape_cast %292 : vector<1x22x16xf32> to vector<22x16xf32>
      %c0_261 = arith.constant 0 : index
      %c0_262 = arith.constant 0 : index
      %294 = vector.load %arg8[%c0_261, %c0_262] : memref<22x16xf32, #tpu.memory_space<vmem>>, vector<22x16xf32>
      tpu.vector_store %arg8[%c0_261, %c0_262], %293 {strides = array<i32>} : memref<22x16xf32, #tpu.memory_space<vmem>>, vector<22x16xf32>,
      %c2_263 = arith.constant 2 : index
      %295 = memref.load %arg2[%c2_263] : memref<98xf32, #tpu.memory_space<smem>>
      %c0_264 = arith.constant 0 : index
      %c0_265 = arith.constant 0 : index
      %296 = vector.load %arg9[%c0_264, %c0_265] : memref<16x16xf32, #tpu.memory_space<vmem>>, vector<16x16xf32>
      %c0_266 = arith.constant 0 : index
      %c0_267 = arith.constant 0 : index
      %297 = vector.load %arg8[%c0_266, %c0_267] : memref<22x16xf32, #tpu.memory_space<vmem>>, vector<16x16xf32>
      %298 = vector.broadcast %295 : f32 to vector<16x16xf32>
      %299 = arith.mulf %298, %297 : vector<16x16xf32>
      %300 = arith.addf %296, %299 : vector<16x16xf32>
      %c0_268 = arith.constant 0 : index
      %c0_269 = arith.constant 0 : index
      %301 = vector.load %arg9[%c0_268, %c0_269] : memref<16x16xf32, #tpu.memory_space<vmem>>, vector<16x16xf32>
      tpu.vector_store %arg9[%c0_268, %c0_269], %300 {strides = array<i32>} : memref<16x16xf32, #tpu.memory_space<vmem>>, vector<16x16xf32>,
      %c9_270 = arith.constant 9 : index
      %302 = memref.load %arg2[%c9_270] : memref<98xf32, #tpu.memory_space<smem>>
      %c0_271 = arith.constant 0 : index
      %c0_272 = arith.constant 0 : index
      %303 = vector.load %arg9[%c0_271, %c0_272] : memref<16x16xf32, #tpu.memory_space<vmem>>, vector<16x16xf32>
      %c1_273 = arith.constant 1 : index
      %c0_274 = arith.constant 0 : index
      %304 = vector.load %arg8[%c1_273, %c0_274] : memref<22x16xf32, #tpu.memory_space<vmem>>, vector<16x16xf32>
      %305 = vector.broadcast %302 : f32 to vector<16x16xf32>
      %306 = arith.mulf %305, %304 : vector<16x16xf32>
      %307 = arith.addf %303, %306 : vector<16x16xf32>
      %c0_275 = arith.constant 0 : index
      %c0_276 = arith.constant 0 : index
      %308 = vector.load %arg9[%c0_275, %c0_276] : memref<16x16xf32, #tpu.memory_space<vmem>>, vector<16x16xf32>
      tpu.vector_store %arg9[%c0_275, %c0_276], %307 {strides = array<i32>} : memref<16x16xf32, #tpu.memory_space<vmem>>, vector<16x16xf32>,
      %c16_277 = arith.constant 16 : index
      %309 = memref.load %arg2[%c16_277] : memref<98xf32, #tpu.memory_space<smem>>
      %c0_278 = arith.constant 0 : index
      %c0_279 = arith.constant 0 : index
      %310 = vector.load %arg9[%c0_278, %c0_279] : memref<16x16xf32, #tpu.memory_space<vmem>>, vector<16x16xf32>
      %c2_280 = arith.constant 2 : index
      %c0_281 = arith.constant 0 : index
      %311 = vector.load %arg8[%c2_280, %c0_281] : memref<22x16xf32, #tpu.memory_space<vmem>>, vector<16x16xf32>
      %312 = vector.broadcast %309 : f32 to vector<16x16xf32>
      %313 = arith.mulf %312, %311 : vector<16x16xf32>
      %314 = arith.addf %310, %313 : vector<16x16xf32>
      %c0_282 = arith.constant 0 : index
      %c0_283 = arith.constant 0 : index
      %315 = vector.load %arg9[%c0_282, %c0_283] : memref<16x16xf32, #tpu.memory_space<vmem>>, vector<16x16xf32>
      tpu.vector_store %arg9[%c0_282, %c0_283], %314 {strides = array<i32>} : memref<16x16xf32, #tpu.memory_space<vmem>>, vector<16x16xf32>,
      %c23 = arith.constant 23 : index
      %316 = memref.load %arg2[%c23] : memref<98xf32, #tpu.memory_space<smem>>
      %c0_284 = arith.constant 0 : index
      %c0_285 = arith.constant 0 : index
      %317 = vector.load %arg9[%c0_284, %c0_285] : memref<16x16xf32, #tpu.memory_space<vmem>>, vector<16x16xf32>
      %c3_286 = arith.constant 3 : index
      %c0_287 = arith.constant 0 : index
      %318 = vector.load %arg8[%c3_286, %c0_287] : memref<22x16xf32, #tpu.memory_space<vmem>>, vector<16x16xf32>
      %319 = vector.broadcast %316 : f32 to vector<16x16xf32>
      %320 = arith.mulf %319, %318 : vector<16x16xf32>
      %321 = arith.addf %317, %320 : vector<16x16xf32>
      %c0_288 = arith.constant 0 : index
      %c0_289 = arith.constant 0 : index
      %322 = vector.load %arg9[%c0_288, %c0_289] : memref<16x16xf32, #tpu.memory_space<vmem>>, vector<16x16xf32>
      tpu.vector_store %arg9[%c0_288, %c0_289], %321 {strides = array<i32>} : memref<16x16xf32, #tpu.memory_space<vmem>>, vector<16x16xf32>,
      %c30 = arith.constant 30 : index
      %323 = memref.load %arg2[%c30] : memref<98xf32, #tpu.memory_space<smem>>
      %c0_290 = arith.constant 0 : index
      %c0_291 = arith.constant 0 : index
      %324 = vector.load %arg9[%c0_290, %c0_291] : memref<16x16xf32, #tpu.memory_space<vmem>>, vector<16x16xf32>
      %c4_292 = arith.constant 4 : index
      %c0_293 = arith.constant 0 : index
      %325 = vector.load %arg8[%c4_292, %c0_293] : memref<22x16xf32, #tpu.memory_space<vmem>>, vector<16x16xf32>
      %326 = vector.broadcast %323 : f32 to vector<16x16xf32>
      %327 = arith.mulf %326, %325 : vector<16x16xf32>
      %328 = arith.addf %324, %327 : vector<16x16xf32>
      %c0_294 = arith.constant 0 : index
      %c0_295 = arith.constant 0 : index
      %329 = vector.load %arg9[%c0_294, %c0_295] : memref<16x16xf32, #tpu.memory_space<vmem>>, vector<16x16xf32>
      tpu.vector_store %arg9[%c0_294, %c0_295], %328 {strides = array<i32>} : memref<16x16xf32, #tpu.memory_space<vmem>>, vector<16x16xf32>,
      %c37 = arith.constant 37 : index
      %330 = memref.load %arg2[%c37] : memref<98xf32, #tpu.memory_space<smem>>
      %c0_296 = arith.constant 0 : index
      %c0_297 = arith.constant 0 : index
      %331 = vector.load %arg9[%c0_296, %c0_297] : memref<16x16xf32, #tpu.memory_space<vmem>>, vector<16x16xf32>
      %c5_298 = arith.constant 5 : index
      %c0_299 = arith.constant 0 : index
      %332 = vector.load %arg8[%c5_298, %c0_299] : memref<22x16xf32, #tpu.memory_space<vmem>>, vector<16x16xf32>
      %333 = vector.broadcast %330 : f32 to vector<16x16xf32>
      %334 = arith.mulf %333, %332 : vector<16x16xf32>
      %335 = arith.addf %331, %334 : vector<16x16xf32>
      %c0_300 = arith.constant 0 : index
      %c0_301 = arith.constant 0 : index
      %336 = vector.load %arg9[%c0_300, %c0_301] : memref<16x16xf32, #tpu.memory_space<vmem>>, vector<16x16xf32>
      tpu.vector_store %arg9[%c0_300, %c0_301], %335 {strides = array<i32>} : memref<16x16xf32, #tpu.memory_space<vmem>>, vector<16x16xf32>,
      %c44 = arith.constant 44 : index
      %337 = memref.load %arg2[%c44] : memref<98xf32, #tpu.memory_space<smem>>
      %c0_302 = arith.constant 0 : index
      %c0_303 = arith.constant 0 : index
      %338 = vector.load %arg9[%c0_302, %c0_303] : memref<16x16xf32, #tpu.memory_space<vmem>>, vector<16x16xf32>
      %c6_304 = arith.constant 6 : index
      %c0_305 = arith.constant 0 : index
      %339 = vector.load %arg8[%c6_304, %c0_305] : memref<22x16xf32, #tpu.memory_space<vmem>>, vector<16x16xf32>
      %340 = vector.broadcast %337 : f32 to vector<16x16xf32>
      %341 = arith.mulf %340, %339 : vector<16x16xf32>
      %342 = arith.addf %338, %341 : vector<16x16xf32>
      %c0_306 = arith.constant 0 : index
      %c0_307 = arith.constant 0 : index
      %343 = vector.load %arg9[%c0_306, %c0_307] : memref<16x16xf32, #tpu.memory_space<vmem>>, vector<16x16xf32>
      tpu.vector_store %arg9[%c0_306, %c0_307], %342 {strides = array<i32>} : memref<16x16xf32, #tpu.memory_space<vmem>>, vector<16x16xf32>,
      %c0_308 = arith.constant 0 : index
      %c0_309 = arith.constant 0 : index
      %c3_310 = arith.constant 3 : index
      %344 = vector.load %arg7[%c0_308, %c0_309, %c3_310] : memref<2x22x22xf32, #tpu.memory_space<vmem>>, vector<1x22x16xf32>
      %345 = vector.shape_cast %344 : vector<1x22x16xf32> to vector<22x16xf32>
      %c0_311 = arith.constant 0 : index
      %c0_312 = arith.constant 0 : index
      %346 = vector.load %arg8[%c0_311, %c0_312] : memref<22x16xf32, #tpu.memory_space<vmem>>, vector<22x16xf32>
      tpu.vector_store %arg8[%c0_311, %c0_312], %345 {strides = array<i32>} : memref<22x16xf32, #tpu.memory_space<vmem>>, vector<22x16xf32>,
      %c3_313 = arith.constant 3 : index
      %347 = memref.load %arg2[%c3_313] : memref<98xf32, #tpu.memory_space<smem>>
      %c0_314 = arith.constant 0 : index
      %c0_315 = arith.constant 0 : index
      %348 = vector.load %arg9[%c0_314, %c0_315] : memref<16x16xf32, #tpu.memory_space<vmem>>, vector<16x16xf32>
      %c0_316 = arith.constant 0 : index
      %c0_317 = arith.constant 0 : index
      %349 = vector.load %arg8[%c0_316, %c0_317] : memref<22x16xf32, #tpu.memory_space<vmem>>, vector<16x16xf32>
      %350 = vector.broadcast %347 : f32 to vector<16x16xf32>
      %351 = arith.mulf %350, %349 : vector<16x16xf32>
      %352 = arith.addf %348, %351 : vector<16x16xf32>
      %c0_318 = arith.constant 0 : index
      %c0_319 = arith.constant 0 : index
      %353 = vector.load %arg9[%c0_318, %c0_319] : memref<16x16xf32, #tpu.memory_space<vmem>>, vector<16x16xf32>
      tpu.vector_store %arg9[%c0_318, %c0_319], %352 {strides = array<i32>} : memref<16x16xf32, #tpu.memory_space<vmem>>, vector<16x16xf32>,
      %c10_320 = arith.constant 10 : index
      %354 = memref.load %arg2[%c10_320] : memref<98xf32, #tpu.memory_space<smem>>
      %c0_321 = arith.constant 0 : index
      %c0_322 = arith.constant 0 : index
      %355 = vector.load %arg9[%c0_321, %c0_322] : memref<16x16xf32, #tpu.memory_space<vmem>>, vector<16x16xf32>
      %c1_323 = arith.constant 1 : index
      %c0_324 = arith.constant 0 : index
      %356 = vector.load %arg8[%c1_323, %c0_324] : memref<22x16xf32, #tpu.memory_space<vmem>>, vector<16x16xf32>
      %357 = vector.broadcast %354 : f32 to vector<16x16xf32>
      %358 = arith.mulf %357, %356 : vector<16x16xf32>
      %359 = arith.addf %355, %358 : vector<16x16xf32>
      %c0_325 = arith.constant 0 : index
      %c0_326 = arith.constant 0 : index
      %360 = vector.load %arg9[%c0_325, %c0_326] : memref<16x16xf32, #tpu.memory_space<vmem>>, vector<16x16xf32>
      tpu.vector_store %arg9[%c0_325, %c0_326], %359 {strides = array<i32>} : memref<16x16xf32, #tpu.memory_space<vmem>>, vector<16x16xf32>,
      %c17_327 = arith.constant 17 : index
      %361 = memref.load %arg2[%c17_327] : memref<98xf32, #tpu.memory_space<smem>>
      %c0_328 = arith.constant 0 : index
      %c0_329 = arith.constant 0 : index
      %362 = vector.load %arg9[%c0_328, %c0_329] : memref<16x16xf32, #tpu.memory_space<vmem>>, vector<16x16xf32>
      %c2_330 = arith.constant 2 : index
      %c0_331 = arith.constant 0 : index
      %363 = vector.load %arg8[%c2_330, %c0_331] : memref<22x16xf32, #tpu.memory_space<vmem>>, vector<16x16xf32>
      %364 = vector.broadcast %361 : f32 to vector<16x16xf32>
      %365 = arith.mulf %364, %363 : vector<16x16xf32>
      %366 = arith.addf %362, %365 : vector<16x16xf32>
      %c0_332 = arith.constant 0 : index
      %c0_333 = arith.constant 0 : index
      %367 = vector.load %arg9[%c0_332, %c0_333] : memref<16x16xf32, #tpu.memory_space<vmem>>, vector<16x16xf32>
      tpu.vector_store %arg9[%c0_332, %c0_333], %366 {strides = array<i32>} : memref<16x16xf32, #tpu.memory_space<vmem>>, vector<16x16xf32>,
      %c24 = arith.constant 24 : index
      %368 = memref.load %arg2[%c24] : memref<98xf32, #tpu.memory_space<smem>>
      %c0_334 = arith.constant 0 : index
      %c0_335 = arith.constant 0 : index
      %369 = vector.load %arg9[%c0_334, %c0_335] : memref<16x16xf32, #tpu.memory_space<vmem>>, vector<16x16xf32>
      %c3_336 = arith.constant 3 : index
      %c0_337 = arith.constant 0 : index
      %370 = vector.load %arg8[%c3_336, %c0_337] : memref<22x16xf32, #tpu.memory_space<vmem>>, vector<16x16xf32>
      %371 = vector.broadcast %368 : f32 to vector<16x16xf32>
      %372 = arith.mulf %371, %370 : vector<16x16xf32>
      %373 = arith.addf %369, %372 : vector<16x16xf32>
      %c0_338 = arith.constant 0 : index
      %c0_339 = arith.constant 0 : index
      %374 = vector.load %arg9[%c0_338, %c0_339] : memref<16x16xf32, #tpu.memory_space<vmem>>, vector<16x16xf32>
      tpu.vector_store %arg9[%c0_338, %c0_339], %373 {strides = array<i32>} : memref<16x16xf32, #tpu.memory_space<vmem>>, vector<16x16xf32>,
      %c31 = arith.constant 31 : index
      %375 = memref.load %arg2[%c31] : memref<98xf32, #tpu.memory_space<smem>>
      %c0_340 = arith.constant 0 : index
      %c0_341 = arith.constant 0 : index
      %376 = vector.load %arg9[%c0_340, %c0_341] : memref<16x16xf32, #tpu.memory_space<vmem>>, vector<16x16xf32>
      %c4_342 = arith.constant 4 : index
      %c0_343 = arith.constant 0 : index
      %377 = vector.load %arg8[%c4_342, %c0_343] : memref<22x16xf32, #tpu.memory_space<vmem>>, vector<16x16xf32>
      %378 = vector.broadcast %375 : f32 to vector<16x16xf32>
      %379 = arith.mulf %378, %377 : vector<16x16xf32>
      %380 = arith.addf %376, %379 : vector<16x16xf32>
      %c0_344 = arith.constant 0 : index
      %c0_345 = arith.constant 0 : index
      %381 = vector.load %arg9[%c0_344, %c0_345] : memref<16x16xf32, #tpu.memory_space<vmem>>, vector<16x16xf32>
      tpu.vector_store %arg9[%c0_344, %c0_345], %380 {strides = array<i32>} : memref<16x16xf32, #tpu.memory_space<vmem>>, vector<16x16xf32>,
      %c38 = arith.constant 38 : index
      %382 = memref.load %arg2[%c38] : memref<98xf32, #tpu.memory_space<smem>>
      %c0_346 = arith.constant 0 : index
      %c0_347 = arith.constant 0 : index
      %383 = vector.load %arg9[%c0_346, %c0_347] : memref<16x16xf32, #tpu.memory_space<vmem>>, vector<16x16xf32>
      %c5_348 = arith.constant 5 : index
      %c0_349 = arith.constant 0 : index
      %384 = vector.load %arg8[%c5_348, %c0_349] : memref<22x16xf32, #tpu.memory_space<vmem>>, vector<16x16xf32>
      %385 = vector.broadcast %382 : f32 to vector<16x16xf32>
      %386 = arith.mulf %385, %384 : vector<16x16xf32>
      %387 = arith.addf %383, %386 : vector<16x16xf32>
      %c0_350 = arith.constant 0 : index
      %c0_351 = arith.constant 0 : index
      %388 = vector.load %arg9[%c0_350, %c0_351] : memref<16x16xf32, #tpu.memory_space<vmem>>, vector<16x16xf32>
      tpu.vector_store %arg9[%c0_350, %c0_351], %387 {strides = array<i32>} : memref<16x16xf32, #tpu.memory_space<vmem>>, vector<16x16xf32>,
      %c45 = arith.constant 45 : index
      %389 = memref.load %arg2[%c45] : memref<98xf32, #tpu.memory_space<smem>>
      %c0_352 = arith.constant 0 : index
      %c0_353 = arith.constant 0 : index
      %390 = vector.load %arg9[%c0_352, %c0_353] : memref<16x16xf32, #tpu.memory_space<vmem>>, vector<16x16xf32>
      %c6_354 = arith.constant 6 : index
      %c0_355 = arith.constant 0 : index
      %391 = vector.load %arg8[%c6_354, %c0_355] : memref<22x16xf32, #tpu.memory_space<vmem>>, vector<16x16xf32>
      %392 = vector.broadcast %389 : f32 to vector<16x16xf32>
      %393 = arith.mulf %392, %391 : vector<16x16xf32>
      %394 = arith.addf %390, %393 : vector<16x16xf32>
      %c0_356 = arith.constant 0 : index
      %c0_357 = arith.constant 0 : index
      %395 = vector.load %arg9[%c0_356, %c0_357] : memref<16x16xf32, #tpu.memory_space<vmem>>, vector<16x16xf32>
      tpu.vector_store %arg9[%c0_356, %c0_357], %394 {strides = array<i32>} : memref<16x16xf32, #tpu.memory_space<vmem>>, vector<16x16xf32>,
      %c0_358 = arith.constant 0 : index
      %c0_359 = arith.constant 0 : index
      %c4_360 = arith.constant 4 : index
      %396 = vector.load %arg7[%c0_358, %c0_359, %c4_360] : memref<2x22x22xf32, #tpu.memory_space<vmem>>, vector<1x22x16xf32>
      %397 = vector.shape_cast %396 : vector<1x22x16xf32> to vector<22x16xf32>
      %c0_361 = arith.constant 0 : index
      %c0_362 = arith.constant 0 : index
      %398 = vector.load %arg8[%c0_361, %c0_362] : memref<22x16xf32, #tpu.memory_space<vmem>>, vector<22x16xf32>
      tpu.vector_store %arg8[%c0_361, %c0_362], %397 {strides = array<i32>} : memref<22x16xf32, #tpu.memory_space<vmem>>, vector<22x16xf32>,
      %c4_363 = arith.constant 4 : index
      %399 = memref.load %arg2[%c4_363] : memref<98xf32, #tpu.memory_space<smem>>
      %c0_364 = arith.constant 0 : index
      %c0_365 = arith.constant 0 : index
      %400 = vector.load %arg9[%c0_364, %c0_365] : memref<16x16xf32, #tpu.memory_space<vmem>>, vector<16x16xf32>
      %c0_366 = arith.constant 0 : index
      %c0_367 = arith.constant 0 : index
      %401 = vector.load %arg8[%c0_366, %c0_367] : memref<22x16xf32, #tpu.memory_space<vmem>>, vector<16x16xf32>
      %402 = vector.broadcast %399 : f32 to vector<16x16xf32>
      %403 = arith.mulf %402, %401 : vector<16x16xf32>
      %404 = arith.addf %400, %403 : vector<16x16xf32>
      %c0_368 = arith.constant 0 : index
      %c0_369 = arith.constant 0 : index
      %405 = vector.load %arg9[%c0_368, %c0_369] : memref<16x16xf32, #tpu.memory_space<vmem>>, vector<16x16xf32>
      tpu.vector_store %arg9[%c0_368, %c0_369], %404 {strides = array<i32>} : memref<16x16xf32, #tpu.memory_space<vmem>>, vector<16x16xf32>,
      %c11_370 = arith.constant 11 : index
      %406 = memref.load %arg2[%c11_370] : memref<98xf32, #tpu.memory_space<smem>>
      %c0_371 = arith.constant 0 : index
      %c0_372 = arith.constant 0 : index
      %407 = vector.load %arg9[%c0_371, %c0_372] : memref<16x16xf32, #tpu.memory_space<vmem>>, vector<16x16xf32>
      %c1_373 = arith.constant 1 : index
      %c0_374 = arith.constant 0 : index
      %408 = vector.load %arg8[%c1_373, %c0_374] : memref<22x16xf32, #tpu.memory_space<vmem>>, vector<16x16xf32>
      %409 = vector.broadcast %406 : f32 to vector<16x16xf32>
      %410 = arith.mulf %409, %408 : vector<16x16xf32>
      %411 = arith.addf %407, %410 : vector<16x16xf32>
      %c0_375 = arith.constant 0 : index
      %c0_376 = arith.constant 0 : index
      %412 = vector.load %arg9[%c0_375, %c0_376] : memref<16x16xf32, #tpu.memory_space<vmem>>, vector<16x16xf32>
      tpu.vector_store %arg9[%c0_375, %c0_376], %411 {strides = array<i32>} : memref<16x16xf32, #tpu.memory_space<vmem>>, vector<16x16xf32>,
      %c18_377 = arith.constant 18 : index
      %413 = memref.load %arg2[%c18_377] : memref<98xf32, #tpu.memory_space<smem>>
      %c0_378 = arith.constant 0 : index
      %c0_379 = arith.constant 0 : index
      %414 = vector.load %arg9[%c0_378, %c0_379] : memref<16x16xf32, #tpu.memory_space<vmem>>, vector<16x16xf32>
      %c2_380 = arith.constant 2 : index
      %c0_381 = arith.constant 0 : index
      %415 = vector.load %arg8[%c2_380, %c0_381] : memref<22x16xf32, #tpu.memory_space<vmem>>, vector<16x16xf32>
      %416 = vector.broadcast %413 : f32 to vector<16x16xf32>
      %417 = arith.mulf %416, %415 : vector<16x16xf32>
      %418 = arith.addf %414, %417 : vector<16x16xf32>
      %c0_382 = arith.constant 0 : index
      %c0_383 = arith.constant 0 : index
      %419 = vector.load %arg9[%c0_382, %c0_383] : memref<16x16xf32, #tpu.memory_space<vmem>>, vector<16x16xf32>
      tpu.vector_store %arg9[%c0_382, %c0_383], %418 {strides = array<i32>} : memref<16x16xf32, #tpu.memory_space<vmem>>, vector<16x16xf32>,
      %c25 = arith.constant 25 : index
      %420 = memref.load %arg2[%c25] : memref<98xf32, #tpu.memory_space<smem>>
      %c0_384 = arith.constant 0 : index
      %c0_385 = arith.constant 0 : index
      %421 = vector.load %arg9[%c0_384, %c0_385] : memref<16x16xf32, #tpu.memory_space<vmem>>, vector<16x16xf32>
      %c3_386 = arith.constant 3 : index
      %c0_387 = arith.constant 0 : index
      %422 = vector.load %arg8[%c3_386, %c0_387] : memref<22x16xf32, #tpu.memory_space<vmem>>, vector<16x16xf32>
      %423 = vector.broadcast %420 : f32 to vector<16x16xf32>
      %424 = arith.mulf %423, %422 : vector<16x16xf32>
      %425 = arith.addf %421, %424 : vector<16x16xf32>
      %c0_388 = arith.constant 0 : index
      %c0_389 = arith.constant 0 : index
      %426 = vector.load %arg9[%c0_388, %c0_389] : memref<16x16xf32, #tpu.memory_space<vmem>>, vector<16x16xf32>
      tpu.vector_store %arg9[%c0_388, %c0_389], %425 {strides = array<i32>} : memref<16x16xf32, #tpu.memory_space<vmem>>, vector<16x16xf32>,
      %c32_390 = arith.constant 32 : index
      %427 = memref.load %arg2[%c32_390] : memref<98xf32, #tpu.memory_space<smem>>
      %c0_391 = arith.constant 0 : index
      %c0_392 = arith.constant 0 : index
      %428 = vector.load %arg9[%c0_391, %c0_392] : memref<16x16xf32, #tpu.memory_space<vmem>>, vector<16x16xf32>
      %c4_393 = arith.constant 4 : index
      %c0_394 = arith.constant 0 : index
      %429 = vector.load %arg8[%c4_393, %c0_394] : memref<22x16xf32, #tpu.memory_space<vmem>>, vector<16x16xf32>
      %430 = vector.broadcast %427 : f32 to vector<16x16xf32>
      %431 = arith.mulf %430, %429 : vector<16x16xf32>
      %432 = arith.addf %428, %431 : vector<16x16xf32>
      %c0_395 = arith.constant 0 : index
      %c0_396 = arith.constant 0 : index
      %433 = vector.load %arg9[%c0_395, %c0_396] : memref<16x16xf32, #tpu.memory_space<vmem>>, vector<16x16xf32>
      tpu.vector_store %arg9[%c0_395, %c0_396], %432 {strides = array<i32>} : memref<16x16xf32, #tpu.memory_space<vmem>>, vector<16x16xf32>,
      %c39 = arith.constant 39 : index
      %434 = memref.load %arg2[%c39] : memref<98xf32, #tpu.memory_space<smem>>
      %c0_397 = arith.constant 0 : index
      %c0_398 = arith.constant 0 : index
      %435 = vector.load %arg9[%c0_397, %c0_398] : memref<16x16xf32, #tpu.memory_space<vmem>>, vector<16x16xf32>
      %c5_399 = arith.constant 5 : index
      %c0_400 = arith.constant 0 : index
      %436 = vector.load %arg8[%c5_399, %c0_400] : memref<22x16xf32, #tpu.memory_space<vmem>>, vector<16x16xf32>
      %437 = vector.broadcast %434 : f32 to vector<16x16xf32>
      %438 = arith.mulf %437, %436 : vector<16x16xf32>
      %439 = arith.addf %435, %438 : vector<16x16xf32>
      %c0_401 = arith.constant 0 : index
      %c0_402 = arith.constant 0 : index
      %440 = vector.load %arg9[%c0_401, %c0_402] : memref<16x16xf32, #tpu.memory_space<vmem>>, vector<16x16xf32>
      tpu.vector_store %arg9[%c0_401, %c0_402], %439 {strides = array<i32>} : memref<16x16xf32, #tpu.memory_space<vmem>>, vector<16x16xf32>,
      %c46 = arith.constant 46 : index
      %441 = memref.load %arg2[%c46] : memref<98xf32, #tpu.memory_space<smem>>
      %c0_403 = arith.constant 0 : index
      %c0_404 = arith.constant 0 : index
      %442 = vector.load %arg9[%c0_403, %c0_404] : memref<16x16xf32, #tpu.memory_space<vmem>>, vector<16x16xf32>
      %c6_405 = arith.constant 6 : index
      %c0_406 = arith.constant 0 : index
      %443 = vector.load %arg8[%c6_405, %c0_406] : memref<22x16xf32, #tpu.memory_space<vmem>>, vector<16x16xf32>
      %444 = vector.broadcast %441 : f32 to vector<16x16xf32>
      %445 = arith.mulf %444, %443 : vector<16x16xf32>
      %446 = arith.addf %442, %445 : vector<16x16xf32>
      %c0_407 = arith.constant 0 : index
      %c0_408 = arith.constant 0 : index
      %447 = vector.load %arg9[%c0_407, %c0_408] : memref<16x16xf32, #tpu.memory_space<vmem>>, vector<16x16xf32>
      tpu.vector_store %arg9[%c0_407, %c0_408], %446 {strides = array<i32>} : memref<16x16xf32, #tpu.memory_space<vmem>>, vector<16x16xf32>,
      %c0_409 = arith.constant 0 : index
      %c0_410 = arith.constant 0 : index
      %c5_411 = arith.constant 5 : index
      %448 = vector.load %arg7[%c0_409, %c0_410, %c5_411] : memref<2x22x22xf32, #tpu.memory_space<vmem>>, vector<1x22x16xf32>
      %449 = vector.shape_cast %448 : vector<1x22x16xf32> to vector<22x16xf32>
      %c0_412 = arith.constant 0 : index
      %c0_413 = arith.constant 0 : index
      %450 = vector.load %arg8[%c0_412, %c0_413] : memref<22x16xf32, #tpu.memory_space<vmem>>, vector<22x16xf32>
      tpu.vector_store %arg8[%c0_412, %c0_413], %449 {strides = array<i32>} : memref<22x16xf32, #tpu.memory_space<vmem>>, vector<22x16xf32>,
      %c5_414 = arith.constant 5 : index
      %451 = memref.load %arg2[%c5_414] : memref<98xf32, #tpu.memory_space<smem>>
      %c0_415 = arith.constant 0 : index
      %c0_416 = arith.constant 0 : index
      %452 = vector.load %arg9[%c0_415, %c0_416] : memref<16x16xf32, #tpu.memory_space<vmem>>, vector<16x16xf32>
      %c0_417 = arith.constant 0 : index
      %c0_418 = arith.constant 0 : index
      %453 = vector.load %arg8[%c0_417, %c0_418] : memref<22x16xf32, #tpu.memory_space<vmem>>, vector<16x16xf32>
      %454 = vector.broadcast %451 : f32 to vector<16x16xf32>
      %455 = arith.mulf %454, %453 : vector<16x16xf32>
      %456 = arith.addf %452, %455 : vector<16x16xf32>
      %c0_419 = arith.constant 0 : index
      %c0_420 = arith.constant 0 : index
      %457 = vector.load %arg9[%c0_419, %c0_420] : memref<16x16xf32, #tpu.memory_space<vmem>>, vector<16x16xf32>
      tpu.vector_store %arg9[%c0_419, %c0_420], %456 {strides = array<i32>} : memref<16x16xf32, #tpu.memory_space<vmem>>, vector<16x16xf32>,
      %c12_421 = arith.constant 12 : index
      %458 = memref.load %arg2[%c12_421] : memref<98xf32, #tpu.memory_space<smem>>
      %c0_422 = arith.constant 0 : index
      %c0_423 = arith.constant 0 : index
      %459 = vector.load %arg9[%c0_422, %c0_423] : memref<16x16xf32, #tpu.memory_space<vmem>>, vector<16x16xf32>
      %c1_424 = arith.constant 1 : index
      %c0_425 = arith.constant 0 : index
      %460 = vector.load %arg8[%c1_424, %c0_425] : memref<22x16xf32, #tpu.memory_space<vmem>>, vector<16x16xf32>
      %461 = vector.broadcast %458 : f32 to vector<16x16xf32>
      %462 = arith.mulf %461, %460 : vector<16x16xf32>
      %463 = arith.addf %459, %462 : vector<16x16xf32>
      %c0_426 = arith.constant 0 : index
      %c0_427 = arith.constant 0 : index
      %464 = vector.load %arg9[%c0_426, %c0_427] : memref<16x16xf32, #tpu.memory_space<vmem>>, vector<16x16xf32>
      tpu.vector_store %arg9[%c0_426, %c0_427], %463 {strides = array<i32>} : memref<16x16xf32, #tpu.memory_space<vmem>>, vector<16x16xf32>,
      %c19 = arith.constant 19 : index
      %465 = memref.load %arg2[%c19] : memref<98xf32, #tpu.memory_space<smem>>
      %c0_428 = arith.constant 0 : index
      %c0_429 = arith.constant 0 : index
      %466 = vector.load %arg9[%c0_428, %c0_429] : memref<16x16xf32, #tpu.memory_space<vmem>>, vector<16x16xf32>
      %c2_430 = arith.constant 2 : index
      %c0_431 = arith.constant 0 : index
      %467 = vector.load %arg8[%c2_430, %c0_431] : memref<22x16xf32, #tpu.memory_space<vmem>>, vector<16x16xf32>
      %468 = vector.broadcast %465 : f32 to vector<16x16xf32>
      %469 = arith.mulf %468, %467 : vector<16x16xf32>
      %470 = arith.addf %466, %469 : vector<16x16xf32>
      %c0_432 = arith.constant 0 : index
      %c0_433 = arith.constant 0 : index
      %471 = vector.load %arg9[%c0_432, %c0_433] : memref<16x16xf32, #tpu.memory_space<vmem>>, vector<16x16xf32>
      tpu.vector_store %arg9[%c0_432, %c0_433], %470 {strides = array<i32>} : memref<16x16xf32, #tpu.memory_space<vmem>>, vector<16x16xf32>,
      %c26 = arith.constant 26 : index
      %472 = memref.load %arg2[%c26] : memref<98xf32, #tpu.memory_space<smem>>
      %c0_434 = arith.constant 0 : index
      %c0_435 = arith.constant 0 : index
      %473 = vector.load %arg9[%c0_434, %c0_435] : memref<16x16xf32, #tpu.memory_space<vmem>>, vector<16x16xf32>
      %c3_436 = arith.constant 3 : index
      %c0_437 = arith.constant 0 : index
      %474 = vector.load %arg8[%c3_436, %c0_437] : memref<22x16xf32, #tpu.memory_space<vmem>>, vector<16x16xf32>
      %475 = vector.broadcast %472 : f32 to vector<16x16xf32>
      %476 = arith.mulf %475, %474 : vector<16x16xf32>
      %477 = arith.addf %473, %476 : vector<16x16xf32>
      %c0_438 = arith.constant 0 : index
      %c0_439 = arith.constant 0 : index
      %478 = vector.load %arg9[%c0_438, %c0_439] : memref<16x16xf32, #tpu.memory_space<vmem>>, vector<16x16xf32>
      tpu.vector_store %arg9[%c0_438, %c0_439], %477 {strides = array<i32>} : memref<16x16xf32, #tpu.memory_space<vmem>>, vector<16x16xf32>,
      %c33 = arith.constant 33 : index
      %479 = memref.load %arg2[%c33] : memref<98xf32, #tpu.memory_space<smem>>
      %c0_440 = arith.constant 0 : index
      %c0_441 = arith.constant 0 : index
      %480 = vector.load %arg9[%c0_440, %c0_441] : memref<16x16xf32, #tpu.memory_space<vmem>>, vector<16x16xf32>
      %c4_442 = arith.constant 4 : index
      %c0_443 = arith.constant 0 : index
      %481 = vector.load %arg8[%c4_442, %c0_443] : memref<22x16xf32, #tpu.memory_space<vmem>>, vector<16x16xf32>
      %482 = vector.broadcast %479 : f32 to vector<16x16xf32>
      %483 = arith.mulf %482, %481 : vector<16x16xf32>
      %484 = arith.addf %480, %483 : vector<16x16xf32>
      %c0_444 = arith.constant 0 : index
      %c0_445 = arith.constant 0 : index
      %485 = vector.load %arg9[%c0_444, %c0_445] : memref<16x16xf32, #tpu.memory_space<vmem>>, vector<16x16xf32>
      tpu.vector_store %arg9[%c0_444, %c0_445], %484 {strides = array<i32>} : memref<16x16xf32, #tpu.memory_space<vmem>>, vector<16x16xf32>,
      %c40 = arith.constant 40 : index
      %486 = memref.load %arg2[%c40] : memref<98xf32, #tpu.memory_space<smem>>
      %c0_446 = arith.constant 0 : index
      %c0_447 = arith.constant 0 : index
      %487 = vector.load %arg9[%c0_446, %c0_447] : memref<16x16xf32, #tpu.memory_space<vmem>>, vector<16x16xf32>
      %c5_448 = arith.constant 5 : index
      %c0_449 = arith.constant 0 : index
      %488 = vector.load %arg8[%c5_448, %c0_449] : memref<22x16xf32, #tpu.memory_space<vmem>>, vector<16x16xf32>
      %489 = vector.broadcast %486 : f32 to vector<16x16xf32>
      %490 = arith.mulf %489, %488 : vector<16x16xf32>
      %491 = arith.addf %487, %490 : vector<16x16xf32>
      %c0_450 = arith.constant 0 : index
      %c0_451 = arith.constant 0 : index
      %492 = vector.load %arg9[%c0_450, %c0_451] : memref<16x16xf32, #tpu.memory_space<vmem>>, vector<16x16xf32>
      tpu.vector_store %arg9[%c0_450, %c0_451], %491 {strides = array<i32>} : memref<16x16xf32, #tpu.memory_space<vmem>>, vector<16x16xf32>,
      %c47 = arith.constant 47 : index
      %493 = memref.load %arg2[%c47] : memref<98xf32, #tpu.memory_space<smem>>
      %c0_452 = arith.constant 0 : index
      %c0_453 = arith.constant 0 : index
      %494 = vector.load %arg9[%c0_452, %c0_453] : memref<16x16xf32, #tpu.memory_space<vmem>>, vector<16x16xf32>
      %c6_454 = arith.constant 6 : index
      %c0_455 = arith.constant 0 : index
      %495 = vector.load %arg8[%c6_454, %c0_455] : memref<22x16xf32, #tpu.memory_space<vmem>>, vector<16x16xf32>
      %496 = vector.broadcast %493 : f32 to vector<16x16xf32>
      %497 = arith.mulf %496, %495 : vector<16x16xf32>
      %498 = arith.addf %494, %497 : vector<16x16xf32>
      %c0_456 = arith.constant 0 : index
      %c0_457 = arith.constant 0 : index
      %499 = vector.load %arg9[%c0_456, %c0_457] : memref<16x16xf32, #tpu.memory_space<vmem>>, vector<16x16xf32>
      tpu.vector_store %arg9[%c0_456, %c0_457], %498 {strides = array<i32>} : memref<16x16xf32, #tpu.memory_space<vmem>>, vector<16x16xf32>,
      %c0_458 = arith.constant 0 : index
      %c0_459 = arith.constant 0 : index
      %c6_460 = arith.constant 6 : index
      %500 = vector.load %arg7[%c0_458, %c0_459, %c6_460] : memref<2x22x22xf32, #tpu.memory_space<vmem>>, vector<1x22x16xf32>
      %501 = vector.shape_cast %500 : vector<1x22x16xf32> to vector<22x16xf32>
      %c0_461 = arith.constant 0 : index
      %c0_462 = arith.constant 0 : index
      %502 = vector.load %arg8[%c0_461, %c0_462] : memref<22x16xf32, #tpu.memory_space<vmem>>, vector<22x16xf32>
      tpu.vector_store %arg8[%c0_461, %c0_462], %501 {strides = array<i32>} : memref<22x16xf32, #tpu.memory_space<vmem>>, vector<22x16xf32>,
      %c6_463 = arith.constant 6 : index
      %503 = memref.load %arg2[%c6_463] : memref<98xf32, #tpu.memory_space<smem>>
      %c0_464 = arith.constant 0 : index
      %c0_465 = arith.constant 0 : index
      %504 = vector.load %arg9[%c0_464, %c0_465] : memref<16x16xf32, #tpu.memory_space<vmem>>, vector<16x16xf32>
      %c0_466 = arith.constant 0 : index
      %c0_467 = arith.constant 0 : index
      %505 = vector.load %arg8[%c0_466, %c0_467] : memref<22x16xf32, #tpu.memory_space<vmem>>, vector<16x16xf32>
      %506 = vector.broadcast %503 : f32 to vector<16x16xf32>
      %507 = arith.mulf %506, %505 : vector<16x16xf32>
      %508 = arith.addf %504, %507 : vector<16x16xf32>
      %c0_468 = arith.constant 0 : index
      %c0_469 = arith.constant 0 : index
      %509 = vector.load %arg9[%c0_468, %c0_469] : memref<16x16xf32, #tpu.memory_space<vmem>>, vector<16x16xf32>
      tpu.vector_store %arg9[%c0_468, %c0_469], %508 {strides = array<i32>} : memref<16x16xf32, #tpu.memory_space<vmem>>, vector<16x16xf32>,
      %c13_470 = arith.constant 13 : index
      %510 = memref.load %arg2[%c13_470] : memref<98xf32, #tpu.memory_space<smem>>
      %c0_471 = arith.constant 0 : index
      %c0_472 = arith.constant 0 : index
      %511 = vector.load %arg9[%c0_471, %c0_472] : memref<16x16xf32, #tpu.memory_space<vmem>>, vector<16x16xf32>
      %c1_473 = arith.constant 1 : index
      %c0_474 = arith.constant 0 : index
      %512 = vector.load %arg8[%c1_473, %c0_474] : memref<22x16xf32, #tpu.memory_space<vmem>>, vector<16x16xf32>
      %513 = vector.broadcast %510 : f32 to vector<16x16xf32>
      %514 = arith.mulf %513, %512 : vector<16x16xf32>
      %515 = arith.addf %511, %514 : vector<16x16xf32>
      %c0_475 = arith.constant 0 : index
      %c0_476 = arith.constant 0 : index
      %516 = vector.load %arg9[%c0_475, %c0_476] : memref<16x16xf32, #tpu.memory_space<vmem>>, vector<16x16xf32>
      tpu.vector_store %arg9[%c0_475, %c0_476], %515 {strides = array<i32>} : memref<16x16xf32, #tpu.memory_space<vmem>>, vector<16x16xf32>,
      %c20 = arith.constant 20 : index
      %517 = memref.load %arg2[%c20] : memref<98xf32, #tpu.memory_space<smem>>
      %c0_477 = arith.constant 0 : index
      %c0_478 = arith.constant 0 : index
      %518 = vector.load %arg9[%c0_477, %c0_478] : memref<16x16xf32, #tpu.memory_space<vmem>>, vector<16x16xf32>
      %c2_479 = arith.constant 2 : index
      %c0_480 = arith.constant 0 : index
      %519 = vector.load %arg8[%c2_479, %c0_480] : memref<22x16xf32, #tpu.memory_space<vmem>>, vector<16x16xf32>
      %520 = vector.broadcast %517 : f32 to vector<16x16xf32>
      %521 = arith.mulf %520, %519 : vector<16x16xf32>
      %522 = arith.addf %518, %521 : vector<16x16xf32>
      %c0_481 = arith.constant 0 : index
      %c0_482 = arith.constant 0 : index
      %523 = vector.load %arg9[%c0_481, %c0_482] : memref<16x16xf32, #tpu.memory_space<vmem>>, vector<16x16xf32>
      tpu.vector_store %arg9[%c0_481, %c0_482], %522 {strides = array<i32>} : memref<16x16xf32, #tpu.memory_space<vmem>>, vector<16x16xf32>,
      %c27 = arith.constant 27 : index
      %524 = memref.load %arg2[%c27] : memref<98xf32, #tpu.memory_space<smem>>
      %c0_483 = arith.constant 0 : index
      %c0_484 = arith.constant 0 : index
      %525 = vector.load %arg9[%c0_483, %c0_484] : memref<16x16xf32, #tpu.memory_space<vmem>>, vector<16x16xf32>
      %c3_485 = arith.constant 3 : index
      %c0_486 = arith.constant 0 : index
      %526 = vector.load %arg8[%c3_485, %c0_486] : memref<22x16xf32, #tpu.memory_space<vmem>>, vector<16x16xf32>
      %527 = vector.broadcast %524 : f32 to vector<16x16xf32>
      %528 = arith.mulf %527, %526 : vector<16x16xf32>
      %529 = arith.addf %525, %528 : vector<16x16xf32>
      %c0_487 = arith.constant 0 : index
      %c0_488 = arith.constant 0 : index
      %530 = vector.load %arg9[%c0_487, %c0_488] : memref<16x16xf32, #tpu.memory_space<vmem>>, vector<16x16xf32>
      tpu.vector_store %arg9[%c0_487, %c0_488], %529 {strides = array<i32>} : memref<16x16xf32, #tpu.memory_space<vmem>>, vector<16x16xf32>,
      %c34 = arith.constant 34 : index
      %531 = memref.load %arg2[%c34] : memref<98xf32, #tpu.memory_space<smem>>
      %c0_489 = arith.constant 0 : index
      %c0_490 = arith.constant 0 : index
      %532 = vector.load %arg9[%c0_489, %c0_490] : memref<16x16xf32, #tpu.memory_space<vmem>>, vector<16x16xf32>
      %c4_491 = arith.constant 4 : index
      %c0_492 = arith.constant 0 : index
      %533 = vector.load %arg8[%c4_491, %c0_492] : memref<22x16xf32, #tpu.memory_space<vmem>>, vector<16x16xf32>
      %534 = vector.broadcast %531 : f32 to vector<16x16xf32>
      %535 = arith.mulf %534, %533 : vector<16x16xf32>
      %536 = arith.addf %532, %535 : vector<16x16xf32>
      %c0_493 = arith.constant 0 : index
      %c0_494 = arith.constant 0 : index
      %537 = vector.load %arg9[%c0_493, %c0_494] : memref<16x16xf32, #tpu.memory_space<vmem>>, vector<16x16xf32>
      tpu.vector_store %arg9[%c0_493, %c0_494], %536 {strides = array<i32>} : memref<16x16xf32, #tpu.memory_space<vmem>>, vector<16x16xf32>,
      %c41 = arith.constant 41 : index
      %538 = memref.load %arg2[%c41] : memref<98xf32, #tpu.memory_space<smem>>
      %c0_495 = arith.constant 0 : index
      %c0_496 = arith.constant 0 : index
      %539 = vector.load %arg9[%c0_495, %c0_496] : memref<16x16xf32, #tpu.memory_space<vmem>>, vector<16x16xf32>
      %c5_497 = arith.constant 5 : index
      %c0_498 = arith.constant 0 : index
      %540 = vector.load %arg8[%c5_497, %c0_498] : memref<22x16xf32, #tpu.memory_space<vmem>>, vector<16x16xf32>
      %541 = vector.broadcast %538 : f32 to vector<16x16xf32>
      %542 = arith.mulf %541, %540 : vector<16x16xf32>
      %543 = arith.addf %539, %542 : vector<16x16xf32>
      %c0_499 = arith.constant 0 : index
      %c0_500 = arith.constant 0 : index
      %544 = vector.load %arg9[%c0_499, %c0_500] : memref<16x16xf32, #tpu.memory_space<vmem>>, vector<16x16xf32>
      tpu.vector_store %arg9[%c0_499, %c0_500], %543 {strides = array<i32>} : memref<16x16xf32, #tpu.memory_space<vmem>>, vector<16x16xf32>,
      %c48_501 = arith.constant 48 : index
      %545 = memref.load %arg2[%c48_501] : memref<98xf32, #tpu.memory_space<smem>>
      %c0_502 = arith.constant 0 : index
      %c0_503 = arith.constant 0 : index
      %546 = vector.load %arg9[%c0_502, %c0_503] : memref<16x16xf32, #tpu.memory_space<vmem>>, vector<16x16xf32>
      %c6_504 = arith.constant 6 : index
      %c0_505 = arith.constant 0 : index
      %547 = vector.load %arg8[%c6_504, %c0_505] : memref<22x16xf32, #tpu.memory_space<vmem>>, vector<16x16xf32>
      %548 = vector.broadcast %545 : f32 to vector<16x16xf32>
      %549 = arith.mulf %548, %547 : vector<16x16xf32>
      %550 = arith.addf %546, %549 : vector<16x16xf32>
      %c0_506 = arith.constant 0 : index
      %c0_507 = arith.constant 0 : index
      %551 = vector.load %arg9[%c0_506, %c0_507] : memref<16x16xf32, #tpu.memory_space<vmem>>, vector<16x16xf32>
      tpu.vector_store %arg9[%c0_506, %c0_507], %550 {strides = array<i32>} : memref<16x16xf32, #tpu.memory_space<vmem>>, vector<16x16xf32>,
      %c1_508 = arith.constant 1 : index
      %c0_509 = arith.constant 0 : index
      %c0_510 = arith.constant 0 : index
      %552 = vector.load %arg7[%c1_508, %c0_509, %c0_510] : memref<2x22x22xf32, #tpu.memory_space<vmem>>, vector<1x22x16xf32>
      %553 = vector.shape_cast %552 : vector<1x22x16xf32> to vector<22x16xf32>
      %c0_511 = arith.constant 0 : index
      %c0_512 = arith.constant 0 : index
      %554 = vector.load %arg8[%c0_511, %c0_512] : memref<22x16xf32, #tpu.memory_space<vmem>>, vector<22x16xf32>
      tpu.vector_store %arg8[%c0_511, %c0_512], %553 {strides = array<i32>} : memref<22x16xf32, #tpu.memory_space<vmem>>, vector<22x16xf32>,
      %c49 = arith.constant 49 : index
      %555 = memref.load %arg2[%c49] : memref<98xf32, #tpu.memory_space<smem>>
      %c0_513 = arith.constant 0 : index
      %c0_514 = arith.constant 0 : index
      %556 = vector.load %arg9[%c0_513, %c0_514] : memref<16x16xf32, #tpu.memory_space<vmem>>, vector<16x16xf32>
      %c0_515 = arith.constant 0 : index
      %c0_516 = arith.constant 0 : index
      %557 = vector.load %arg8[%c0_515, %c0_516] : memref<22x16xf32, #tpu.memory_space<vmem>>, vector<16x16xf32>
      %558 = vector.broadcast %555 : f32 to vector<16x16xf32>
      %559 = arith.mulf %558, %557 : vector<16x16xf32>
      %560 = arith.addf %556, %559 : vector<16x16xf32>
      %c0_517 = arith.constant 0 : index
      %c0_518 = arith.constant 0 : index
      %561 = vector.load %arg9[%c0_517, %c0_518] : memref<16x16xf32, #tpu.memory_space<vmem>>, vector<16x16xf32>
      tpu.vector_store %arg9[%c0_517, %c0_518], %560 {strides = array<i32>} : memref<16x16xf32, #tpu.memory_space<vmem>>, vector<16x16xf32>,
      %c56 = arith.constant 56 : index
      %562 = memref.load %arg2[%c56] : memref<98xf32, #tpu.memory_space<smem>>
      %c0_519 = arith.constant 0 : index
      %c0_520 = arith.constant 0 : index
      %563 = vector.load %arg9[%c0_519, %c0_520] : memref<16x16xf32, #tpu.memory_space<vmem>>, vector<16x16xf32>
      %c1_521 = arith.constant 1 : index
      %c0_522 = arith.constant 0 : index
      %564 = vector.load %arg8[%c1_521, %c0_522] : memref<22x16xf32, #tpu.memory_space<vmem>>, vector<16x16xf32>
      %565 = vector.broadcast %562 : f32 to vector<16x16xf32>
      %566 = arith.mulf %565, %564 : vector<16x16xf32>
      %567 = arith.addf %563, %566 : vector<16x16xf32>
      %c0_523 = arith.constant 0 : index
      %c0_524 = arith.constant 0 : index
      %568 = vector.load %arg9[%c0_523, %c0_524] : memref<16x16xf32, #tpu.memory_space<vmem>>, vector<16x16xf32>
      tpu.vector_store %arg9[%c0_523, %c0_524], %567 {strides = array<i32>} : memref<16x16xf32, #tpu.memory_space<vmem>>, vector<16x16xf32>,
      %c63 = arith.constant 63 : index
      %569 = memref.load %arg2[%c63] : memref<98xf32, #tpu.memory_space<smem>>
      %c0_525 = arith.constant 0 : index
      %c0_526 = arith.constant 0 : index
      %570 = vector.load %arg9[%c0_525, %c0_526] : memref<16x16xf32, #tpu.memory_space<vmem>>, vector<16x16xf32>
      %c2_527 = arith.constant 2 : index
      %c0_528 = arith.constant 0 : index
      %571 = vector.load %arg8[%c2_527, %c0_528] : memref<22x16xf32, #tpu.memory_space<vmem>>, vector<16x16xf32>
      %572 = vector.broadcast %569 : f32 to vector<16x16xf32>
      %573 = arith.mulf %572, %571 : vector<16x16xf32>
      %574 = arith.addf %570, %573 : vector<16x16xf32>
      %c0_529 = arith.constant 0 : index
      %c0_530 = arith.constant 0 : index
      %575 = vector.load %arg9[%c0_529, %c0_530] : memref<16x16xf32, #tpu.memory_space<vmem>>, vector<16x16xf32>
      tpu.vector_store %arg9[%c0_529, %c0_530], %574 {strides = array<i32>} : memref<16x16xf32, #tpu.memory_space<vmem>>, vector<16x16xf32>,
      %c70 = arith.constant 70 : index
      %576 = memref.load %arg2[%c70] : memref<98xf32, #tpu.memory_space<smem>>
      %c0_531 = arith.constant 0 : index
      %c0_532 = arith.constant 0 : index
      %577 = vector.load %arg9[%c0_531, %c0_532] : memref<16x16xf32, #tpu.memory_space<vmem>>, vector<16x16xf32>
      %c3_533 = arith.constant 3 : index
      %c0_534 = arith.constant 0 : index
      %578 = vector.load %arg8[%c3_533, %c0_534] : memref<22x16xf32, #tpu.memory_space<vmem>>, vector<16x16xf32>
      %579 = vector.broadcast %576 : f32 to vector<16x16xf32>
      %580 = arith.mulf %579, %578 : vector<16x16xf32>
      %581 = arith.addf %577, %580 : vector<16x16xf32>
      %c0_535 = arith.constant 0 : index
      %c0_536 = arith.constant 0 : index
      %582 = vector.load %arg9[%c0_535, %c0_536] : memref<16x16xf32, #tpu.memory_space<vmem>>, vector<16x16xf32>
      tpu.vector_store %arg9[%c0_535, %c0_536], %581 {strides = array<i32>} : memref<16x16xf32, #tpu.memory_space<vmem>>, vector<16x16xf32>,
      %c77 = arith.constant 77 : index
      %583 = memref.load %arg2[%c77] : memref<98xf32, #tpu.memory_space<smem>>
      %c0_537 = arith.constant 0 : index
      %c0_538 = arith.constant 0 : index
      %584 = vector.load %arg9[%c0_537, %c0_538] : memref<16x16xf32, #tpu.memory_space<vmem>>, vector<16x16xf32>
      %c4_539 = arith.constant 4 : index
      %c0_540 = arith.constant 0 : index
      %585 = vector.load %arg8[%c4_539, %c0_540] : memref<22x16xf32, #tpu.memory_space<vmem>>, vector<16x16xf32>
      %586 = vector.broadcast %583 : f32 to vector<16x16xf32>
      %587 = arith.mulf %586, %585 : vector<16x16xf32>
      %588 = arith.addf %584, %587 : vector<16x16xf32>
      %c0_541 = arith.constant 0 : index
      %c0_542 = arith.constant 0 : index
      %589 = vector.load %arg9[%c0_541, %c0_542] : memref<16x16xf32, #tpu.memory_space<vmem>>, vector<16x16xf32>
      tpu.vector_store %arg9[%c0_541, %c0_542], %588 {strides = array<i32>} : memref<16x16xf32, #tpu.memory_space<vmem>>, vector<16x16xf32>,
      %c84 = arith.constant 84 : index
      %590 = memref.load %arg2[%c84] : memref<98xf32, #tpu.memory_space<smem>>
      %c0_543 = arith.constant 0 : index
      %c0_544 = arith.constant 0 : index
      %591 = vector.load %arg9[%c0_543, %c0_544] : memref<16x16xf32, #tpu.memory_space<vmem>>, vector<16x16xf32>
      %c5_545 = arith.constant 5 : index
      %c0_546 = arith.constant 0 : index
      %592 = vector.load %arg8[%c5_545, %c0_546] : memref<22x16xf32, #tpu.memory_space<vmem>>, vector<16x16xf32>
      %593 = vector.broadcast %590 : f32 to vector<16x16xf32>
      %594 = arith.mulf %593, %592 : vector<16x16xf32>
      %595 = arith.addf %591, %594 : vector<16x16xf32>
      %c0_547 = arith.constant 0 : index
      %c0_548 = arith.constant 0 : index
      %596 = vector.load %arg9[%c0_547, %c0_548] : memref<16x16xf32, #tpu.memory_space<vmem>>, vector<16x16xf32>
      tpu.vector_store %arg9[%c0_547, %c0_548], %595 {strides = array<i32>} : memref<16x16xf32, #tpu.memory_space<vmem>>, vector<16x16xf32>,
      %c91 = arith.constant 91 : index
      %597 = memref.load %arg2[%c91] : memref<98xf32, #tpu.memory_space<smem>>
      %c0_549 = arith.constant 0 : index
      %c0_550 = arith.constant 0 : index
      %598 = vector.load %arg9[%c0_549, %c0_550] : memref<16x16xf32, #tpu.memory_space<vmem>>, vector<16x16xf32>
      %c6_551 = arith.constant 6 : index
      %c0_552 = arith.constant 0 : index
      %599 = vector.load %arg8[%c6_551, %c0_552] : memref<22x16xf32, #tpu.memory_space<vmem>>, vector<16x16xf32>
      %600 = vector.broadcast %597 : f32 to vector<16x16xf32>
      %601 = arith.mulf %600, %599 : vector<16x16xf32>
      %602 = arith.addf %598, %601 : vector<16x16xf32>
      %c0_553 = arith.constant 0 : index
      %c0_554 = arith.constant 0 : index
      %603 = vector.load %arg9[%c0_553, %c0_554] : memref<16x16xf32, #tpu.memory_space<vmem>>, vector<16x16xf32>
      tpu.vector_store %arg9[%c0_553, %c0_554], %602 {strides = array<i32>} : memref<16x16xf32, #tpu.memory_space<vmem>>, vector<16x16xf32>,
      %c1_555 = arith.constant 1 : index
      %c0_556 = arith.constant 0 : index
      %c1_557 = arith.constant 1 : index
      %604 = vector.load %arg7[%c1_555, %c0_556, %c1_557] : memref<2x22x22xf32, #tpu.memory_space<vmem>>, vector<1x22x16xf32>
      %605 = vector.shape_cast %604 : vector<1x22x16xf32> to vector<22x16xf32>
      %c0_558 = arith.constant 0 : index
      %c0_559 = arith.constant 0 : index
      %606 = vector.load %arg8[%c0_558, %c0_559] : memref<22x16xf32, #tpu.memory_space<vmem>>, vector<22x16xf32>
      tpu.vector_store %arg8[%c0_558, %c0_559], %605 {strides = array<i32>} : memref<22x16xf32, #tpu.memory_space<vmem>>, vector<22x16xf32>,
      %c50 = arith.constant 50 : index
      %607 = memref.load %arg2[%c50] : memref<98xf32, #tpu.memory_space<smem>>
      %c0_560 = arith.constant 0 : index
      %c0_561 = arith.constant 0 : index
      %608 = vector.load %arg9[%c0_560, %c0_561] : memref<16x16xf32, #tpu.memory_space<vmem>>, vector<16x16xf32>
      %c0_562 = arith.constant 0 : index
      %c0_563 = arith.constant 0 : index
      %609 = vector.load %arg8[%c0_562, %c0_563] : memref<22x16xf32, #tpu.memory_space<vmem>>, vector<16x16xf32>
      %610 = vector.broadcast %607 : f32 to vector<16x16xf32>
      %611 = arith.mulf %610, %609 : vector<16x16xf32>
      %612 = arith.addf %608, %611 : vector<16x16xf32>
      %c0_564 = arith.constant 0 : index
      %c0_565 = arith.constant 0 : index
      %613 = vector.load %arg9[%c0_564, %c0_565] : memref<16x16xf32, #tpu.memory_space<vmem>>, vector<16x16xf32>
      tpu.vector_store %arg9[%c0_564, %c0_565], %612 {strides = array<i32>} : memref<16x16xf32, #tpu.memory_space<vmem>>, vector<16x16xf32>,
      %c57 = arith.constant 57 : index
      %614 = memref.load %arg2[%c57] : memref<98xf32, #tpu.memory_space<smem>>
      %c0_566 = arith.constant 0 : index
      %c0_567 = arith.constant 0 : index
      %615 = vector.load %arg9[%c0_566, %c0_567] : memref<16x16xf32, #tpu.memory_space<vmem>>, vector<16x16xf32>
      %c1_568 = arith.constant 1 : index
      %c0_569 = arith.constant 0 : index
      %616 = vector.load %arg8[%c1_568, %c0_569] : memref<22x16xf32, #tpu.memory_space<vmem>>, vector<16x16xf32>
      %617 = vector.broadcast %614 : f32 to vector<16x16xf32>
      %618 = arith.mulf %617, %616 : vector<16x16xf32>
      %619 = arith.addf %615, %618 : vector<16x16xf32>
      %c0_570 = arith.constant 0 : index
      %c0_571 = arith.constant 0 : index
      %620 = vector.load %arg9[%c0_570, %c0_571] : memref<16x16xf32, #tpu.memory_space<vmem>>, vector<16x16xf32>
      tpu.vector_store %arg9[%c0_570, %c0_571], %619 {strides = array<i32>} : memref<16x16xf32, #tpu.memory_space<vmem>>, vector<16x16xf32>,
      %c64_572 = arith.constant 64 : index
      %621 = memref.load %arg2[%c64_572] : memref<98xf32, #tpu.memory_space<smem>>
      %c0_573 = arith.constant 0 : index
      %c0_574 = arith.constant 0 : index
      %622 = vector.load %arg9[%c0_573, %c0_574] : memref<16x16xf32, #tpu.memory_space<vmem>>, vector<16x16xf32>
      %c2_575 = arith.constant 2 : index
      %c0_576 = arith.constant 0 : index
      %623 = vector.load %arg8[%c2_575, %c0_576] : memref<22x16xf32, #tpu.memory_space<vmem>>, vector<16x16xf32>
      %624 = vector.broadcast %621 : f32 to vector<16x16xf32>
      %625 = arith.mulf %624, %623 : vector<16x16xf32>
      %626 = arith.addf %622, %625 : vector<16x16xf32>
      %c0_577 = arith.constant 0 : index
      %c0_578 = arith.constant 0 : index
      %627 = vector.load %arg9[%c0_577, %c0_578] : memref<16x16xf32, #tpu.memory_space<vmem>>, vector<16x16xf32>
      tpu.vector_store %arg9[%c0_577, %c0_578], %626 {strides = array<i32>} : memref<16x16xf32, #tpu.memory_space<vmem>>, vector<16x16xf32>,
      %c71 = arith.constant 71 : index
      %628 = memref.load %arg2[%c71] : memref<98xf32, #tpu.memory_space<smem>>
      %c0_579 = arith.constant 0 : index
      %c0_580 = arith.constant 0 : index
      %629 = vector.load %arg9[%c0_579, %c0_580] : memref<16x16xf32, #tpu.memory_space<vmem>>, vector<16x16xf32>
      %c3_581 = arith.constant 3 : index
      %c0_582 = arith.constant 0 : index
      %630 = vector.load %arg8[%c3_581, %c0_582] : memref<22x16xf32, #tpu.memory_space<vmem>>, vector<16x16xf32>
      %631 = vector.broadcast %628 : f32 to vector<16x16xf32>
      %632 = arith.mulf %631, %630 : vector<16x16xf32>
      %633 = arith.addf %629, %632 : vector<16x16xf32>
      %c0_583 = arith.constant 0 : index
      %c0_584 = arith.constant 0 : index
      %634 = vector.load %arg9[%c0_583, %c0_584] : memref<16x16xf32, #tpu.memory_space<vmem>>, vector<16x16xf32>
      tpu.vector_store %arg9[%c0_583, %c0_584], %633 {strides = array<i32>} : memref<16x16xf32, #tpu.memory_space<vmem>>, vector<16x16xf32>,
      %c78 = arith.constant 78 : index
      %635 = memref.load %arg2[%c78] : memref<98xf32, #tpu.memory_space<smem>>
      %c0_585 = arith.constant 0 : index
      %c0_586 = arith.constant 0 : index
      %636 = vector.load %arg9[%c0_585, %c0_586] : memref<16x16xf32, #tpu.memory_space<vmem>>, vector<16x16xf32>
      %c4_587 = arith.constant 4 : index
      %c0_588 = arith.constant 0 : index
      %637 = vector.load %arg8[%c4_587, %c0_588] : memref<22x16xf32, #tpu.memory_space<vmem>>, vector<16x16xf32>
      %638 = vector.broadcast %635 : f32 to vector<16x16xf32>
      %639 = arith.mulf %638, %637 : vector<16x16xf32>
      %640 = arith.addf %636, %639 : vector<16x16xf32>
      %c0_589 = arith.constant 0 : index
      %c0_590 = arith.constant 0 : index
      %641 = vector.load %arg9[%c0_589, %c0_590] : memref<16x16xf32, #tpu.memory_space<vmem>>, vector<16x16xf32>
      tpu.vector_store %arg9[%c0_589, %c0_590], %640 {strides = array<i32>} : memref<16x16xf32, #tpu.memory_space<vmem>>, vector<16x16xf32>,
      %c85 = arith.constant 85 : index
      %642 = memref.load %arg2[%c85] : memref<98xf32, #tpu.memory_space<smem>>
      %c0_591 = arith.constant 0 : index
      %c0_592 = arith.constant 0 : index
      %643 = vector.load %arg9[%c0_591, %c0_592] : memref<16x16xf32, #tpu.memory_space<vmem>>, vector<16x16xf32>
      %c5_593 = arith.constant 5 : index
      %c0_594 = arith.constant 0 : index
      %644 = vector.load %arg8[%c5_593, %c0_594] : memref<22x16xf32, #tpu.memory_space<vmem>>, vector<16x16xf32>
      %645 = vector.broadcast %642 : f32 to vector<16x16xf32>
      %646 = arith.mulf %645, %644 : vector<16x16xf32>
      %647 = arith.addf %643, %646 : vector<16x16xf32>
      %c0_595 = arith.constant 0 : index
      %c0_596 = arith.constant 0 : index
      %648 = vector.load %arg9[%c0_595, %c0_596] : memref<16x16xf32, #tpu.memory_space<vmem>>, vector<16x16xf32>
      tpu.vector_store %arg9[%c0_595, %c0_596], %647 {strides = array<i32>} : memref<16x16xf32, #tpu.memory_space<vmem>>, vector<16x16xf32>,
      %c92 = arith.constant 92 : index
      %649 = memref.load %arg2[%c92] : memref<98xf32, #tpu.memory_space<smem>>
      %c0_597 = arith.constant 0 : index
      %c0_598 = arith.constant 0 : index
      %650 = vector.load %arg9[%c0_597, %c0_598] : memref<16x16xf32, #tpu.memory_space<vmem>>, vector<16x16xf32>
      %c6_599 = arith.constant 6 : index
      %c0_600 = arith.constant 0 : index
      %651 = vector.load %arg8[%c6_599, %c0_600] : memref<22x16xf32, #tpu.memory_space<vmem>>, vector<16x16xf32>
      %652 = vector.broadcast %649 : f32 to vector<16x16xf32>
      %653 = arith.mulf %652, %651 : vector<16x16xf32>
      %654 = arith.addf %650, %653 : vector<16x16xf32>
      %c0_601 = arith.constant 0 : index
      %c0_602 = arith.constant 0 : index
      %655 = vector.load %arg9[%c0_601, %c0_602] : memref<16x16xf32, #tpu.memory_space<vmem>>, vector<16x16xf32>
      tpu.vector_store %arg9[%c0_601, %c0_602], %654 {strides = array<i32>} : memref<16x16xf32, #tpu.memory_space<vmem>>, vector<16x16xf32>,
      %c1_603 = arith.constant 1 : index
      %c0_604 = arith.constant 0 : index
      %c2_605 = arith.constant 2 : index
      %656 = vector.load %arg7[%c1_603, %c0_604, %c2_605] : memref<2x22x22xf32, #tpu.memory_space<vmem>>, vector<1x22x16xf32>
      %657 = vector.shape_cast %656 : vector<1x22x16xf32> to vector<22x16xf32>
      %c0_606 = arith.constant 0 : index
      %c0_607 = arith.constant 0 : index
      %658 = vector.load %arg8[%c0_606, %c0_607] : memref<22x16xf32, #tpu.memory_space<vmem>>, vector<22x16xf32>
      tpu.vector_store %arg8[%c0_606, %c0_607], %657 {strides = array<i32>} : memref<22x16xf32, #tpu.memory_space<vmem>>, vector<22x16xf32>,
      %c51 = arith.constant 51 : index
      %659 = memref.load %arg2[%c51] : memref<98xf32, #tpu.memory_space<smem>>
      %c0_608 = arith.constant 0 : index
      %c0_609 = arith.constant 0 : index
      %660 = vector.load %arg9[%c0_608, %c0_609] : memref<16x16xf32, #tpu.memory_space<vmem>>, vector<16x16xf32>
      %c0_610 = arith.constant 0 : index
      %c0_611 = arith.constant 0 : index
      %661 = vector.load %arg8[%c0_610, %c0_611] : memref<22x16xf32, #tpu.memory_space<vmem>>, vector<16x16xf32>
      %662 = vector.broadcast %659 : f32 to vector<16x16xf32>
      %663 = arith.mulf %662, %661 : vector<16x16xf32>
      %664 = arith.addf %660, %663 : vector<16x16xf32>
      %c0_612 = arith.constant 0 : index
      %c0_613 = arith.constant 0 : index
      %665 = vector.load %arg9[%c0_612, %c0_613] : memref<16x16xf32, #tpu.memory_space<vmem>>, vector<16x16xf32>
      tpu.vector_store %arg9[%c0_612, %c0_613], %664 {strides = array<i32>} : memref<16x16xf32, #tpu.memory_space<vmem>>, vector<16x16xf32>,
      %c58 = arith.constant 58 : index
      %666 = memref.load %arg2[%c58] : memref<98xf32, #tpu.memory_space<smem>>
      %c0_614 = arith.constant 0 : index
      %c0_615 = arith.constant 0 : index
      %667 = vector.load %arg9[%c0_614, %c0_615] : memref<16x16xf32, #tpu.memory_space<vmem>>, vector<16x16xf32>
      %c1_616 = arith.constant 1 : index
      %c0_617 = arith.constant 0 : index
      %668 = vector.load %arg8[%c1_616, %c0_617] : memref<22x16xf32, #tpu.memory_space<vmem>>, vector<16x16xf32>
      %669 = vector.broadcast %666 : f32 to vector<16x16xf32>
      %670 = arith.mulf %669, %668 : vector<16x16xf32>
      %671 = arith.addf %667, %670 : vector<16x16xf32>
      %c0_618 = arith.constant 0 : index
      %c0_619 = arith.constant 0 : index
      %672 = vector.load %arg9[%c0_618, %c0_619] : memref<16x16xf32, #tpu.memory_space<vmem>>, vector<16x16xf32>
      tpu.vector_store %arg9[%c0_618, %c0_619], %671 {strides = array<i32>} : memref<16x16xf32, #tpu.memory_space<vmem>>, vector<16x16xf32>,
      %c65 = arith.constant 65 : index
      %673 = memref.load %arg2[%c65] : memref<98xf32, #tpu.memory_space<smem>>
      %c0_620 = arith.constant 0 : index
      %c0_621 = arith.constant 0 : index
      %674 = vector.load %arg9[%c0_620, %c0_621] : memref<16x16xf32, #tpu.memory_space<vmem>>, vector<16x16xf32>
      %c2_622 = arith.constant 2 : index
      %c0_623 = arith.constant 0 : index
      %675 = vector.load %arg8[%c2_622, %c0_623] : memref<22x16xf32, #tpu.memory_space<vmem>>, vector<16x16xf32>
      %676 = vector.broadcast %673 : f32 to vector<16x16xf32>
      %677 = arith.mulf %676, %675 : vector<16x16xf32>
      %678 = arith.addf %674, %677 : vector<16x16xf32>
      %c0_624 = arith.constant 0 : index
      %c0_625 = arith.constant 0 : index
      %679 = vector.load %arg9[%c0_624, %c0_625] : memref<16x16xf32, #tpu.memory_space<vmem>>, vector<16x16xf32>
      tpu.vector_store %arg9[%c0_624, %c0_625], %678 {strides = array<i32>} : memref<16x16xf32, #tpu.memory_space<vmem>>, vector<16x16xf32>,
      %c72 = arith.constant 72 : index
      %680 = memref.load %arg2[%c72] : memref<98xf32, #tpu.memory_space<smem>>
      %c0_626 = arith.constant 0 : index
      %c0_627 = arith.constant 0 : index
      %681 = vector.load %arg9[%c0_626, %c0_627] : memref<16x16xf32, #tpu.memory_space<vmem>>, vector<16x16xf32>
      %c3_628 = arith.constant 3 : index
      %c0_629 = arith.constant 0 : index
      %682 = vector.load %arg8[%c3_628, %c0_629] : memref<22x16xf32, #tpu.memory_space<vmem>>, vector<16x16xf32>
      %683 = vector.broadcast %680 : f32 to vector<16x16xf32>
      %684 = arith.mulf %683, %682 : vector<16x16xf32>
      %685 = arith.addf %681, %684 : vector<16x16xf32>
      %c0_630 = arith.constant 0 : index
      %c0_631 = arith.constant 0 : index
      %686 = vector.load %arg9[%c0_630, %c0_631] : memref<16x16xf32, #tpu.memory_space<vmem>>, vector<16x16xf32>
      tpu.vector_store %arg9[%c0_630, %c0_631], %685 {strides = array<i32>} : memref<16x16xf32, #tpu.memory_space<vmem>>, vector<16x16xf32>,
      %c79 = arith.constant 79 : index
      %687 = memref.load %arg2[%c79] : memref<98xf32, #tpu.memory_space<smem>>
      %c0_632 = arith.constant 0 : index
      %c0_633 = arith.constant 0 : index
      %688 = vector.load %arg9[%c0_632, %c0_633] : memref<16x16xf32, #tpu.memory_space<vmem>>, vector<16x16xf32>
      %c4_634 = arith.constant 4 : index
      %c0_635 = arith.constant 0 : index
      %689 = vector.load %arg8[%c4_634, %c0_635] : memref<22x16xf32, #tpu.memory_space<vmem>>, vector<16x16xf32>
      %690 = vector.broadcast %687 : f32 to vector<16x16xf32>
      %691 = arith.mulf %690, %689 : vector<16x16xf32>
      %692 = arith.addf %688, %691 : vector<16x16xf32>
      %c0_636 = arith.constant 0 : index
      %c0_637 = arith.constant 0 : index
      %693 = vector.load %arg9[%c0_636, %c0_637] : memref<16x16xf32, #tpu.memory_space<vmem>>, vector<16x16xf32>
      tpu.vector_store %arg9[%c0_636, %c0_637], %692 {strides = array<i32>} : memref<16x16xf32, #tpu.memory_space<vmem>>, vector<16x16xf32>,
      %c86 = arith.constant 86 : index
      %694 = memref.load %arg2[%c86] : memref<98xf32, #tpu.memory_space<smem>>
      %c0_638 = arith.constant 0 : index
      %c0_639 = arith.constant 0 : index
      %695 = vector.load %arg9[%c0_638, %c0_639] : memref<16x16xf32, #tpu.memory_space<vmem>>, vector<16x16xf32>
      %c5_640 = arith.constant 5 : index
      %c0_641 = arith.constant 0 : index
      %696 = vector.load %arg8[%c5_640, %c0_641] : memref<22x16xf32, #tpu.memory_space<vmem>>, vector<16x16xf32>
      %697 = vector.broadcast %694 : f32 to vector<16x16xf32>
      %698 = arith.mulf %697, %696 : vector<16x16xf32>
      %699 = arith.addf %695, %698 : vector<16x16xf32>
      %c0_642 = arith.constant 0 : index
      %c0_643 = arith.constant 0 : index
      %700 = vector.load %arg9[%c0_642, %c0_643] : memref<16x16xf32, #tpu.memory_space<vmem>>, vector<16x16xf32>
      tpu.vector_store %arg9[%c0_642, %c0_643], %699 {strides = array<i32>} : memref<16x16xf32, #tpu.memory_space<vmem>>, vector<16x16xf32>,
      %c93 = arith.constant 93 : index
      %701 = memref.load %arg2[%c93] : memref<98xf32, #tpu.memory_space<smem>>
      %c0_644 = arith.constant 0 : index
      %c0_645 = arith.constant 0 : index
      %702 = vector.load %arg9[%c0_644, %c0_645] : memref<16x16xf32, #tpu.memory_space<vmem>>, vector<16x16xf32>
      %c6_646 = arith.constant 6 : index
      %c0_647 = arith.constant 0 : index
      %703 = vector.load %arg8[%c6_646, %c0_647] : memref<22x16xf32, #tpu.memory_space<vmem>>, vector<16x16xf32>
      %704 = vector.broadcast %701 : f32 to vector<16x16xf32>
      %705 = arith.mulf %704, %703 : vector<16x16xf32>
      %706 = arith.addf %702, %705 : vector<16x16xf32>
      %c0_648 = arith.constant 0 : index
      %c0_649 = arith.constant 0 : index
      %707 = vector.load %arg9[%c0_648, %c0_649] : memref<16x16xf32, #tpu.memory_space<vmem>>, vector<16x16xf32>
      tpu.vector_store %arg9[%c0_648, %c0_649], %706 {strides = array<i32>} : memref<16x16xf32, #tpu.memory_space<vmem>>, vector<16x16xf32>,
      %c1_650 = arith.constant 1 : index
      %c0_651 = arith.constant 0 : index
      %c3_652 = arith.constant 3 : index
      %708 = vector.load %arg7[%c1_650, %c0_651, %c3_652] : memref<2x22x22xf32, #tpu.memory_space<vmem>>, vector<1x22x16xf32>
      %709 = vector.shape_cast %708 : vector<1x22x16xf32> to vector<22x16xf32>
      %c0_653 = arith.constant 0 : index
      %c0_654 = arith.constant 0 : index
      %710 = vector.load %arg8[%c0_653, %c0_654] : memref<22x16xf32, #tpu.memory_space<vmem>>, vector<22x16xf32>
      tpu.vector_store %arg8[%c0_653, %c0_654], %709 {strides = array<i32>} : memref<22x16xf32, #tpu.memory_space<vmem>>, vector<22x16xf32>,
      %c52 = arith.constant 52 : index
      %711 = memref.load %arg2[%c52] : memref<98xf32, #tpu.memory_space<smem>>
      %c0_655 = arith.constant 0 : index
      %c0_656 = arith.constant 0 : index
      %712 = vector.load %arg9[%c0_655, %c0_656] : memref<16x16xf32, #tpu.memory_space<vmem>>, vector<16x16xf32>
      %c0_657 = arith.constant 0 : index
      %c0_658 = arith.constant 0 : index
      %713 = vector.load %arg8[%c0_657, %c0_658] : memref<22x16xf32, #tpu.memory_space<vmem>>, vector<16x16xf32>
      %714 = vector.broadcast %711 : f32 to vector<16x16xf32>
      %715 = arith.mulf %714, %713 : vector<16x16xf32>
      %716 = arith.addf %712, %715 : vector<16x16xf32>
      %c0_659 = arith.constant 0 : index
      %c0_660 = arith.constant 0 : index
      %717 = vector.load %arg9[%c0_659, %c0_660] : memref<16x16xf32, #tpu.memory_space<vmem>>, vector<16x16xf32>
      tpu.vector_store %arg9[%c0_659, %c0_660], %716 {strides = array<i32>} : memref<16x16xf32, #tpu.memory_space<vmem>>, vector<16x16xf32>,
      %c59 = arith.constant 59 : index
      %718 = memref.load %arg2[%c59] : memref<98xf32, #tpu.memory_space<smem>>
      %c0_661 = arith.constant 0 : index
      %c0_662 = arith.constant 0 : index
      %719 = vector.load %arg9[%c0_661, %c0_662] : memref<16x16xf32, #tpu.memory_space<vmem>>, vector<16x16xf32>
      %c1_663 = arith.constant 1 : index
      %c0_664 = arith.constant 0 : index
      %720 = vector.load %arg8[%c1_663, %c0_664] : memref<22x16xf32, #tpu.memory_space<vmem>>, vector<16x16xf32>
      %721 = vector.broadcast %718 : f32 to vector<16x16xf32>
      %722 = arith.mulf %721, %720 : vector<16x16xf32>
      %723 = arith.addf %719, %722 : vector<16x16xf32>
      %c0_665 = arith.constant 0 : index
      %c0_666 = arith.constant 0 : index
      %724 = vector.load %arg9[%c0_665, %c0_666] : memref<16x16xf32, #tpu.memory_space<vmem>>, vector<16x16xf32>
      tpu.vector_store %arg9[%c0_665, %c0_666], %723 {strides = array<i32>} : memref<16x16xf32, #tpu.memory_space<vmem>>, vector<16x16xf32>,
      %c66 = arith.constant 66 : index
      %725 = memref.load %arg2[%c66] : memref<98xf32, #tpu.memory_space<smem>>
      %c0_667 = arith.constant 0 : index
      %c0_668 = arith.constant 0 : index
      %726 = vector.load %arg9[%c0_667, %c0_668] : memref<16x16xf32, #tpu.memory_space<vmem>>, vector<16x16xf32>
      %c2_669 = arith.constant 2 : index
      %c0_670 = arith.constant 0 : index
      %727 = vector.load %arg8[%c2_669, %c0_670] : memref<22x16xf32, #tpu.memory_space<vmem>>, vector<16x16xf32>
      %728 = vector.broadcast %725 : f32 to vector<16x16xf32>
      %729 = arith.mulf %728, %727 : vector<16x16xf32>
      %730 = arith.addf %726, %729 : vector<16x16xf32>
      %c0_671 = arith.constant 0 : index
      %c0_672 = arith.constant 0 : index
      %731 = vector.load %arg9[%c0_671, %c0_672] : memref<16x16xf32, #tpu.memory_space<vmem>>, vector<16x16xf32>
      tpu.vector_store %arg9[%c0_671, %c0_672], %730 {strides = array<i32>} : memref<16x16xf32, #tpu.memory_space<vmem>>, vector<16x16xf32>,
      %c73 = arith.constant 73 : index
      %732 = memref.load %arg2[%c73] : memref<98xf32, #tpu.memory_space<smem>>
      %c0_673 = arith.constant 0 : index
      %c0_674 = arith.constant 0 : index
      %733 = vector.load %arg9[%c0_673, %c0_674] : memref<16x16xf32, #tpu.memory_space<vmem>>, vector<16x16xf32>
      %c3_675 = arith.constant 3 : index
      %c0_676 = arith.constant 0 : index
      %734 = vector.load %arg8[%c3_675, %c0_676] : memref<22x16xf32, #tpu.memory_space<vmem>>, vector<16x16xf32>
      %735 = vector.broadcast %732 : f32 to vector<16x16xf32>
      %736 = arith.mulf %735, %734 : vector<16x16xf32>
      %737 = arith.addf %733, %736 : vector<16x16xf32>
      %c0_677 = arith.constant 0 : index
      %c0_678 = arith.constant 0 : index
      %738 = vector.load %arg9[%c0_677, %c0_678] : memref<16x16xf32, #tpu.memory_space<vmem>>, vector<16x16xf32>
      tpu.vector_store %arg9[%c0_677, %c0_678], %737 {strides = array<i32>} : memref<16x16xf32, #tpu.memory_space<vmem>>, vector<16x16xf32>,
      %c80_679 = arith.constant 80 : index
      %739 = memref.load %arg2[%c80_679] : memref<98xf32, #tpu.memory_space<smem>>
      %c0_680 = arith.constant 0 : index
      %c0_681 = arith.constant 0 : index
      %740 = vector.load %arg9[%c0_680, %c0_681] : memref<16x16xf32, #tpu.memory_space<vmem>>, vector<16x16xf32>
      %c4_682 = arith.constant 4 : index
      %c0_683 = arith.constant 0 : index
      %741 = vector.load %arg8[%c4_682, %c0_683] : memref<22x16xf32, #tpu.memory_space<vmem>>, vector<16x16xf32>
      %742 = vector.broadcast %739 : f32 to vector<16x16xf32>
      %743 = arith.mulf %742, %741 : vector<16x16xf32>
      %744 = arith.addf %740, %743 : vector<16x16xf32>
      %c0_684 = arith.constant 0 : index
      %c0_685 = arith.constant 0 : index
      %745 = vector.load %arg9[%c0_684, %c0_685] : memref<16x16xf32, #tpu.memory_space<vmem>>, vector<16x16xf32>
      tpu.vector_store %arg9[%c0_684, %c0_685], %744 {strides = array<i32>} : memref<16x16xf32, #tpu.memory_space<vmem>>, vector<16x16xf32>,
      %c87 = arith.constant 87 : index
      %746 = memref.load %arg2[%c87] : memref<98xf32, #tpu.memory_space<smem>>
      %c0_686 = arith.constant 0 : index
      %c0_687 = arith.constant 0 : index
      %747 = vector.load %arg9[%c0_686, %c0_687] : memref<16x16xf32, #tpu.memory_space<vmem>>, vector<16x16xf32>
      %c5_688 = arith.constant 5 : index
      %c0_689 = arith.constant 0 : index
      %748 = vector.load %arg8[%c5_688, %c0_689] : memref<22x16xf32, #tpu.memory_space<vmem>>, vector<16x16xf32>
      %749 = vector.broadcast %746 : f32 to vector<16x16xf32>
      %750 = arith.mulf %749, %748 : vector<16x16xf32>
      %751 = arith.addf %747, %750 : vector<16x16xf32>
      %c0_690 = arith.constant 0 : index
      %c0_691 = arith.constant 0 : index
      %752 = vector.load %arg9[%c0_690, %c0_691] : memref<16x16xf32, #tpu.memory_space<vmem>>, vector<16x16xf32>
      tpu.vector_store %arg9[%c0_690, %c0_691], %751 {strides = array<i32>} : memref<16x16xf32, #tpu.memory_space<vmem>>, vector<16x16xf32>,
      %c94 = arith.constant 94 : index
      %753 = memref.load %arg2[%c94] : memref<98xf32, #tpu.memory_space<smem>>
      %c0_692 = arith.constant 0 : index
      %c0_693 = arith.constant 0 : index
      %754 = vector.load %arg9[%c0_692, %c0_693] : memref<16x16xf32, #tpu.memory_space<vmem>>, vector<16x16xf32>
      %c6_694 = arith.constant 6 : index
      %c0_695 = arith.constant 0 : index
      %755 = vector.load %arg8[%c6_694, %c0_695] : memref<22x16xf32, #tpu.memory_space<vmem>>, vector<16x16xf32>
      %756 = vector.broadcast %753 : f32 to vector<16x16xf32>
      %757 = arith.mulf %756, %755 : vector<16x16xf32>
      %758 = arith.addf %754, %757 : vector<16x16xf32>
      %c0_696 = arith.constant 0 : index
      %c0_697 = arith.constant 0 : index
      %759 = vector.load %arg9[%c0_696, %c0_697] : memref<16x16xf32, #tpu.memory_space<vmem>>, vector<16x16xf32>
      tpu.vector_store %arg9[%c0_696, %c0_697], %758 {strides = array<i32>} : memref<16x16xf32, #tpu.memory_space<vmem>>, vector<16x16xf32>,
      %c1_698 = arith.constant 1 : index
      %c0_699 = arith.constant 0 : index
      %c4_700 = arith.constant 4 : index
      %760 = vector.load %arg7[%c1_698, %c0_699, %c4_700] : memref<2x22x22xf32, #tpu.memory_space<vmem>>, vector<1x22x16xf32>
      %761 = vector.shape_cast %760 : vector<1x22x16xf32> to vector<22x16xf32>
      %c0_701 = arith.constant 0 : index
      %c0_702 = arith.constant 0 : index
      %762 = vector.load %arg8[%c0_701, %c0_702] : memref<22x16xf32, #tpu.memory_space<vmem>>, vector<22x16xf32>
      tpu.vector_store %arg8[%c0_701, %c0_702], %761 {strides = array<i32>} : memref<22x16xf32, #tpu.memory_space<vmem>>, vector<22x16xf32>,
      %c53 = arith.constant 53 : index
      %763 = memref.load %arg2[%c53] : memref<98xf32, #tpu.memory_space<smem>>
      %c0_703 = arith.constant 0 : index
      %c0_704 = arith.constant 0 : index
      %764 = vector.load %arg9[%c0_703, %c0_704] : memref<16x16xf32, #tpu.memory_space<vmem>>, vector<16x16xf32>
      %c0_705 = arith.constant 0 : index
      %c0_706 = arith.constant 0 : index
      %765 = vector.load %arg8[%c0_705, %c0_706] : memref<22x16xf32, #tpu.memory_space<vmem>>, vector<16x16xf32>
      %766 = vector.broadcast %763 : f32 to vector<16x16xf32>
      %767 = arith.mulf %766, %765 : vector<16x16xf32>
      %768 = arith.addf %764, %767 : vector<16x16xf32>
      %c0_707 = arith.constant 0 : index
      %c0_708 = arith.constant 0 : index
      %769 = vector.load %arg9[%c0_707, %c0_708] : memref<16x16xf32, #tpu.memory_space<vmem>>, vector<16x16xf32>
      tpu.vector_store %arg9[%c0_707, %c0_708], %768 {strides = array<i32>} : memref<16x16xf32, #tpu.memory_space<vmem>>, vector<16x16xf32>,
      %c60 = arith.constant 60 : index
      %770 = memref.load %arg2[%c60] : memref<98xf32, #tpu.memory_space<smem>>
      %c0_709 = arith.constant 0 : index
      %c0_710 = arith.constant 0 : index
      %771 = vector.load %arg9[%c0_709, %c0_710] : memref<16x16xf32, #tpu.memory_space<vmem>>, vector<16x16xf32>
      %c1_711 = arith.constant 1 : index
      %c0_712 = arith.constant 0 : index
      %772 = vector.load %arg8[%c1_711, %c0_712] : memref<22x16xf32, #tpu.memory_space<vmem>>, vector<16x16xf32>
      %773 = vector.broadcast %770 : f32 to vector<16x16xf32>
      %774 = arith.mulf %773, %772 : vector<16x16xf32>
      %775 = arith.addf %771, %774 : vector<16x16xf32>
      %c0_713 = arith.constant 0 : index
      %c0_714 = arith.constant 0 : index
      %776 = vector.load %arg9[%c0_713, %c0_714] : memref<16x16xf32, #tpu.memory_space<vmem>>, vector<16x16xf32>
      tpu.vector_store %arg9[%c0_713, %c0_714], %775 {strides = array<i32>} : memref<16x16xf32, #tpu.memory_space<vmem>>, vector<16x16xf32>,
      %c67 = arith.constant 67 : index
      %777 = memref.load %arg2[%c67] : memref<98xf32, #tpu.memory_space<smem>>
      %c0_715 = arith.constant 0 : index
      %c0_716 = arith.constant 0 : index
      %778 = vector.load %arg9[%c0_715, %c0_716] : memref<16x16xf32, #tpu.memory_space<vmem>>, vector<16x16xf32>
      %c2_717 = arith.constant 2 : index
      %c0_718 = arith.constant 0 : index
      %779 = vector.load %arg8[%c2_717, %c0_718] : memref<22x16xf32, #tpu.memory_space<vmem>>, vector<16x16xf32>
      %780 = vector.broadcast %777 : f32 to vector<16x16xf32>
      %781 = arith.mulf %780, %779 : vector<16x16xf32>
      %782 = arith.addf %778, %781 : vector<16x16xf32>
      %c0_719 = arith.constant 0 : index
      %c0_720 = arith.constant 0 : index
      %783 = vector.load %arg9[%c0_719, %c0_720] : memref<16x16xf32, #tpu.memory_space<vmem>>, vector<16x16xf32>
      tpu.vector_store %arg9[%c0_719, %c0_720], %782 {strides = array<i32>} : memref<16x16xf32, #tpu.memory_space<vmem>>, vector<16x16xf32>,
      %c74 = arith.constant 74 : index
      %784 = memref.load %arg2[%c74] : memref<98xf32, #tpu.memory_space<smem>>
      %c0_721 = arith.constant 0 : index
      %c0_722 = arith.constant 0 : index
      %785 = vector.load %arg9[%c0_721, %c0_722] : memref<16x16xf32, #tpu.memory_space<vmem>>, vector<16x16xf32>
      %c3_723 = arith.constant 3 : index
      %c0_724 = arith.constant 0 : index
      %786 = vector.load %arg8[%c3_723, %c0_724] : memref<22x16xf32, #tpu.memory_space<vmem>>, vector<16x16xf32>
      %787 = vector.broadcast %784 : f32 to vector<16x16xf32>
      %788 = arith.mulf %787, %786 : vector<16x16xf32>
      %789 = arith.addf %785, %788 : vector<16x16xf32>
      %c0_725 = arith.constant 0 : index
      %c0_726 = arith.constant 0 : index
      %790 = vector.load %arg9[%c0_725, %c0_726] : memref<16x16xf32, #tpu.memory_space<vmem>>, vector<16x16xf32>
      tpu.vector_store %arg9[%c0_725, %c0_726], %789 {strides = array<i32>} : memref<16x16xf32, #tpu.memory_space<vmem>>, vector<16x16xf32>,
      %c81 = arith.constant 81 : index
      %791 = memref.load %arg2[%c81] : memref<98xf32, #tpu.memory_space<smem>>
      %c0_727 = arith.constant 0 : index
      %c0_728 = arith.constant 0 : index
      %792 = vector.load %arg9[%c0_727, %c0_728] : memref<16x16xf32, #tpu.memory_space<vmem>>, vector<16x16xf32>
      %c4_729 = arith.constant 4 : index
      %c0_730 = arith.constant 0 : index
      %793 = vector.load %arg8[%c4_729, %c0_730] : memref<22x16xf32, #tpu.memory_space<vmem>>, vector<16x16xf32>
      %794 = vector.broadcast %791 : f32 to vector<16x16xf32>
      %795 = arith.mulf %794, %793 : vector<16x16xf32>
      %796 = arith.addf %792, %795 : vector<16x16xf32>
      %c0_731 = arith.constant 0 : index
      %c0_732 = arith.constant 0 : index
      %797 = vector.load %arg9[%c0_731, %c0_732] : memref<16x16xf32, #tpu.memory_space<vmem>>, vector<16x16xf32>
      tpu.vector_store %arg9[%c0_731, %c0_732], %796 {strides = array<i32>} : memref<16x16xf32, #tpu.memory_space<vmem>>, vector<16x16xf32>,
      %c88 = arith.constant 88 : index
      %798 = memref.load %arg2[%c88] : memref<98xf32, #tpu.memory_space<smem>>
      %c0_733 = arith.constant 0 : index
      %c0_734 = arith.constant 0 : index
      %799 = vector.load %arg9[%c0_733, %c0_734] : memref<16x16xf32, #tpu.memory_space<vmem>>, vector<16x16xf32>
      %c5_735 = arith.constant 5 : index
      %c0_736 = arith.constant 0 : index
      %800 = vector.load %arg8[%c5_735, %c0_736] : memref<22x16xf32, #tpu.memory_space<vmem>>, vector<16x16xf32>
      %801 = vector.broadcast %798 : f32 to vector<16x16xf32>
      %802 = arith.mulf %801, %800 : vector<16x16xf32>
      %803 = arith.addf %799, %802 : vector<16x16xf32>
      %c0_737 = arith.constant 0 : index
      %c0_738 = arith.constant 0 : index
      %804 = vector.load %arg9[%c0_737, %c0_738] : memref<16x16xf32, #tpu.memory_space<vmem>>, vector<16x16xf32>
      tpu.vector_store %arg9[%c0_737, %c0_738], %803 {strides = array<i32>} : memref<16x16xf32, #tpu.memory_space<vmem>>, vector<16x16xf32>,
      %c95 = arith.constant 95 : index
      %805 = memref.load %arg2[%c95] : memref<98xf32, #tpu.memory_space<smem>>
      %c0_739 = arith.constant 0 : index
      %c0_740 = arith.constant 0 : index
      %806 = vector.load %arg9[%c0_739, %c0_740] : memref<16x16xf32, #tpu.memory_space<vmem>>, vector<16x16xf32>
      %c6_741 = arith.constant 6 : index
      %c0_742 = arith.constant 0 : index
      %807 = vector.load %arg8[%c6_741, %c0_742] : memref<22x16xf32, #tpu.memory_space<vmem>>, vector<16x16xf32>
      %808 = vector.broadcast %805 : f32 to vector<16x16xf32>
      %809 = arith.mulf %808, %807 : vector<16x16xf32>
      %810 = arith.addf %806, %809 : vector<16x16xf32>
      %c0_743 = arith.constant 0 : index
      %c0_744 = arith.constant 0 : index
      %811 = vector.load %arg9[%c0_743, %c0_744] : memref<16x16xf32, #tpu.memory_space<vmem>>, vector<16x16xf32>
      tpu.vector_store %arg9[%c0_743, %c0_744], %810 {strides = array<i32>} : memref<16x16xf32, #tpu.memory_space<vmem>>, vector<16x16xf32>,
      %c1_745 = arith.constant 1 : index
      %c0_746 = arith.constant 0 : index
      %c5_747 = arith.constant 5 : index
      %812 = vector.load %arg7[%c1_745, %c0_746, %c5_747] : memref<2x22x22xf32, #tpu.memory_space<vmem>>, vector<1x22x16xf32>
      %813 = vector.shape_cast %812 : vector<1x22x16xf32> to vector<22x16xf32>
      %c0_748 = arith.constant 0 : index
      %c0_749 = arith.constant 0 : index
      %814 = vector.load %arg8[%c0_748, %c0_749] : memref<22x16xf32, #tpu.memory_space<vmem>>, vector<22x16xf32>
      tpu.vector_store %arg8[%c0_748, %c0_749], %813 {strides = array<i32>} : memref<22x16xf32, #tpu.memory_space<vmem>>, vector<22x16xf32>,
      %c54 = arith.constant 54 : index
      %815 = memref.load %arg2[%c54] : memref<98xf32, #tpu.memory_space<smem>>
      %c0_750 = arith.constant 0 : index
      %c0_751 = arith.constant 0 : index
      %816 = vector.load %arg9[%c0_750, %c0_751] : memref<16x16xf32, #tpu.memory_space<vmem>>, vector<16x16xf32>
      %c0_752 = arith.constant 0 : index
      %c0_753 = arith.constant 0 : index
      %817 = vector.load %arg8[%c0_752, %c0_753] : memref<22x16xf32, #tpu.memory_space<vmem>>, vector<16x16xf32>
      %818 = vector.broadcast %815 : f32 to vector<16x16xf32>
      %819 = arith.mulf %818, %817 : vector<16x16xf32>
      %820 = arith.addf %816, %819 : vector<16x16xf32>
      %c0_754 = arith.constant 0 : index
      %c0_755 = arith.constant 0 : index
      %821 = vector.load %arg9[%c0_754, %c0_755] : memref<16x16xf32, #tpu.memory_space<vmem>>, vector<16x16xf32>
      tpu.vector_store %arg9[%c0_754, %c0_755], %820 {strides = array<i32>} : memref<16x16xf32, #tpu.memory_space<vmem>>, vector<16x16xf32>,
      %c61 = arith.constant 61 : index
      %822 = memref.load %arg2[%c61] : memref<98xf32, #tpu.memory_space<smem>>
      %c0_756 = arith.constant 0 : index
      %c0_757 = arith.constant 0 : index
      %823 = vector.load %arg9[%c0_756, %c0_757] : memref<16x16xf32, #tpu.memory_space<vmem>>, vector<16x16xf32>
      %c1_758 = arith.constant 1 : index
      %c0_759 = arith.constant 0 : index
      %824 = vector.load %arg8[%c1_758, %c0_759] : memref<22x16xf32, #tpu.memory_space<vmem>>, vector<16x16xf32>
      %825 = vector.broadcast %822 : f32 to vector<16x16xf32>
      %826 = arith.mulf %825, %824 : vector<16x16xf32>
      %827 = arith.addf %823, %826 : vector<16x16xf32>
      %c0_760 = arith.constant 0 : index
      %c0_761 = arith.constant 0 : index
      %828 = vector.load %arg9[%c0_760, %c0_761] : memref<16x16xf32, #tpu.memory_space<vmem>>, vector<16x16xf32>
      tpu.vector_store %arg9[%c0_760, %c0_761], %827 {strides = array<i32>} : memref<16x16xf32, #tpu.memory_space<vmem>>, vector<16x16xf32>,
      %c68 = arith.constant 68 : index
      %829 = memref.load %arg2[%c68] : memref<98xf32, #tpu.memory_space<smem>>
      %c0_762 = arith.constant 0 : index
      %c0_763 = arith.constant 0 : index
      %830 = vector.load %arg9[%c0_762, %c0_763] : memref<16x16xf32, #tpu.memory_space<vmem>>, vector<16x16xf32>
      %c2_764 = arith.constant 2 : index
      %c0_765 = arith.constant 0 : index
      %831 = vector.load %arg8[%c2_764, %c0_765] : memref<22x16xf32, #tpu.memory_space<vmem>>, vector<16x16xf32>
      %832 = vector.broadcast %829 : f32 to vector<16x16xf32>
      %833 = arith.mulf %832, %831 : vector<16x16xf32>
      %834 = arith.addf %830, %833 : vector<16x16xf32>
      %c0_766 = arith.constant 0 : index
      %c0_767 = arith.constant 0 : index
      %835 = vector.load %arg9[%c0_766, %c0_767] : memref<16x16xf32, #tpu.memory_space<vmem>>, vector<16x16xf32>
      tpu.vector_store %arg9[%c0_766, %c0_767], %834 {strides = array<i32>} : memref<16x16xf32, #tpu.memory_space<vmem>>, vector<16x16xf32>,
      %c75 = arith.constant 75 : index
      %836 = memref.load %arg2[%c75] : memref<98xf32, #tpu.memory_space<smem>>
      %c0_768 = arith.constant 0 : index
      %c0_769 = arith.constant 0 : index
      %837 = vector.load %arg9[%c0_768, %c0_769] : memref<16x16xf32, #tpu.memory_space<vmem>>, vector<16x16xf32>
      %c3_770 = arith.constant 3 : index
      %c0_771 = arith.constant 0 : index
      %838 = vector.load %arg8[%c3_770, %c0_771] : memref<22x16xf32, #tpu.memory_space<vmem>>, vector<16x16xf32>
      %839 = vector.broadcast %836 : f32 to vector<16x16xf32>
      %840 = arith.mulf %839, %838 : vector<16x16xf32>
      %841 = arith.addf %837, %840 : vector<16x16xf32>
      %c0_772 = arith.constant 0 : index
      %c0_773 = arith.constant 0 : index
      %842 = vector.load %arg9[%c0_772, %c0_773] : memref<16x16xf32, #tpu.memory_space<vmem>>, vector<16x16xf32>
      tpu.vector_store %arg9[%c0_772, %c0_773], %841 {strides = array<i32>} : memref<16x16xf32, #tpu.memory_space<vmem>>, vector<16x16xf32>,
      %c82 = arith.constant 82 : index
      %843 = memref.load %arg2[%c82] : memref<98xf32, #tpu.memory_space<smem>>
      %c0_774 = arith.constant 0 : index
      %c0_775 = arith.constant 0 : index
      %844 = vector.load %arg9[%c0_774, %c0_775] : memref<16x16xf32, #tpu.memory_space<vmem>>, vector<16x16xf32>
      %c4_776 = arith.constant 4 : index
      %c0_777 = arith.constant 0 : index
      %845 = vector.load %arg8[%c4_776, %c0_777] : memref<22x16xf32, #tpu.memory_space<vmem>>, vector<16x16xf32>
      %846 = vector.broadcast %843 : f32 to vector<16x16xf32>
      %847 = arith.mulf %846, %845 : vector<16x16xf32>
      %848 = arith.addf %844, %847 : vector<16x16xf32>
      %c0_778 = arith.constant 0 : index
      %c0_779 = arith.constant 0 : index
      %849 = vector.load %arg9[%c0_778, %c0_779] : memref<16x16xf32, #tpu.memory_space<vmem>>, vector<16x16xf32>
      tpu.vector_store %arg9[%c0_778, %c0_779], %848 {strides = array<i32>} : memref<16x16xf32, #tpu.memory_space<vmem>>, vector<16x16xf32>,
      %c89 = arith.constant 89 : index
      %850 = memref.load %arg2[%c89] : memref<98xf32, #tpu.memory_space<smem>>
      %c0_780 = arith.constant 0 : index
      %c0_781 = arith.constant 0 : index
      %851 = vector.load %arg9[%c0_780, %c0_781] : memref<16x16xf32, #tpu.memory_space<vmem>>, vector<16x16xf32>
      %c5_782 = arith.constant 5 : index
      %c0_783 = arith.constant 0 : index
      %852 = vector.load %arg8[%c5_782, %c0_783] : memref<22x16xf32, #tpu.memory_space<vmem>>, vector<16x16xf32>
      %853 = vector.broadcast %850 : f32 to vector<16x16xf32>
      %854 = arith.mulf %853, %852 : vector<16x16xf32>
      %855 = arith.addf %851, %854 : vector<16x16xf32>
      %c0_784 = arith.constant 0 : index
      %c0_785 = arith.constant 0 : index
      %856 = vector.load %arg9[%c0_784, %c0_785] : memref<16x16xf32, #tpu.memory_space<vmem>>, vector<16x16xf32>
      tpu.vector_store %arg9[%c0_784, %c0_785], %855 {strides = array<i32>} : memref<16x16xf32, #tpu.memory_space<vmem>>, vector<16x16xf32>,
      %c96_786 = arith.constant 96 : index
      %857 = memref.load %arg2[%c96_786] : memref<98xf32, #tpu.memory_space<smem>>
      %c0_787 = arith.constant 0 : index
      %c0_788 = arith.constant 0 : index
      %858 = vector.load %arg9[%c0_787, %c0_788] : memref<16x16xf32, #tpu.memory_space<vmem>>, vector<16x16xf32>
      %c6_789 = arith.constant 6 : index
      %c0_790 = arith.constant 0 : index
      %859 = vector.load %arg8[%c6_789, %c0_790] : memref<22x16xf32, #tpu.memory_space<vmem>>, vector<16x16xf32>
      %860 = vector.broadcast %857 : f32 to vector<16x16xf32>
      %861 = arith.mulf %860, %859 : vector<16x16xf32>
      %862 = arith.addf %858, %861 : vector<16x16xf32>
      %c0_791 = arith.constant 0 : index
      %c0_792 = arith.constant 0 : index
      %863 = vector.load %arg9[%c0_791, %c0_792] : memref<16x16xf32, #tpu.memory_space<vmem>>, vector<16x16xf32>
      tpu.vector_store %arg9[%c0_791, %c0_792], %862 {strides = array<i32>} : memref<16x16xf32, #tpu.memory_space<vmem>>, vector<16x16xf32>,
      %c1_793 = arith.constant 1 : index
      %c0_794 = arith.constant 0 : index
      %c6_795 = arith.constant 6 : index
      %864 = vector.load %arg7[%c1_793, %c0_794, %c6_795] : memref<2x22x22xf32, #tpu.memory_space<vmem>>, vector<1x22x16xf32>
      %865 = vector.shape_cast %864 : vector<1x22x16xf32> to vector<22x16xf32>
      %c0_796 = arith.constant 0 : index
      %c0_797 = arith.constant 0 : index
      %866 = vector.load %arg8[%c0_796, %c0_797] : memref<22x16xf32, #tpu.memory_space<vmem>>, vector<22x16xf32>
      tpu.vector_store %arg8[%c0_796, %c0_797], %865 {strides = array<i32>} : memref<22x16xf32, #tpu.memory_space<vmem>>, vector<22x16xf32>,
      %c55 = arith.constant 55 : index
      %867 = memref.load %arg2[%c55] : memref<98xf32, #tpu.memory_space<smem>>
      %c0_798 = arith.constant 0 : index
      %c0_799 = arith.constant 0 : index
      %868 = vector.load %arg9[%c0_798, %c0_799] : memref<16x16xf32, #tpu.memory_space<vmem>>, vector<16x16xf32>
      %c0_800 = arith.constant 0 : index
      %c0_801 = arith.constant 0 : index
      %869 = vector.load %arg8[%c0_800, %c0_801] : memref<22x16xf32, #tpu.memory_space<vmem>>, vector<16x16xf32>
      %870 = vector.broadcast %867 : f32 to vector<16x16xf32>
      %871 = arith.mulf %870, %869 : vector<16x16xf32>
      %872 = arith.addf %868, %871 : vector<16x16xf32>
      %c0_802 = arith.constant 0 : index
      %c0_803 = arith.constant 0 : index
      %873 = vector.load %arg9[%c0_802, %c0_803] : memref<16x16xf32, #tpu.memory_space<vmem>>, vector<16x16xf32>
      tpu.vector_store %arg9[%c0_802, %c0_803], %872 {strides = array<i32>} : memref<16x16xf32, #tpu.memory_space<vmem>>, vector<16x16xf32>,
      %c62 = arith.constant 62 : index
      %874 = memref.load %arg2[%c62] : memref<98xf32, #tpu.memory_space<smem>>
      %c0_804 = arith.constant 0 : index
      %c0_805 = arith.constant 0 : index
      %875 = vector.load %arg9[%c0_804, %c0_805] : memref<16x16xf32, #tpu.memory_space<vmem>>, vector<16x16xf32>
      %c1_806 = arith.constant 1 : index
      %c0_807 = arith.constant 0 : index
      %876 = vector.load %arg8[%c1_806, %c0_807] : memref<22x16xf32, #tpu.memory_space<vmem>>, vector<16x16xf32>
      %877 = vector.broadcast %874 : f32 to vector<16x16xf32>
      %878 = arith.mulf %877, %876 : vector<16x16xf32>
      %879 = arith.addf %875, %878 : vector<16x16xf32>
      %c0_808 = arith.constant 0 : index
      %c0_809 = arith.constant 0 : index
      %880 = vector.load %arg9[%c0_808, %c0_809] : memref<16x16xf32, #tpu.memory_space<vmem>>, vector<16x16xf32>
      tpu.vector_store %arg9[%c0_808, %c0_809], %879 {strides = array<i32>} : memref<16x16xf32, #tpu.memory_space<vmem>>, vector<16x16xf32>,
      %c69 = arith.constant 69 : index
      %881 = memref.load %arg2[%c69] : memref<98xf32, #tpu.memory_space<smem>>
      %c0_810 = arith.constant 0 : index
      %c0_811 = arith.constant 0 : index
      %882 = vector.load %arg9[%c0_810, %c0_811] : memref<16x16xf32, #tpu.memory_space<vmem>>, vector<16x16xf32>
      %c2_812 = arith.constant 2 : index
      %c0_813 = arith.constant 0 : index
      %883 = vector.load %arg8[%c2_812, %c0_813] : memref<22x16xf32, #tpu.memory_space<vmem>>, vector<16x16xf32>
      %884 = vector.broadcast %881 : f32 to vector<16x16xf32>
      %885 = arith.mulf %884, %883 : vector<16x16xf32>
      %886 = arith.addf %882, %885 : vector<16x16xf32>
      %c0_814 = arith.constant 0 : index
      %c0_815 = arith.constant 0 : index
      %887 = vector.load %arg9[%c0_814, %c0_815] : memref<16x16xf32, #tpu.memory_space<vmem>>, vector<16x16xf32>
      tpu.vector_store %arg9[%c0_814, %c0_815], %886 {strides = array<i32>} : memref<16x16xf32, #tpu.memory_space<vmem>>, vector<16x16xf32>,
      %c76 = arith.constant 76 : index
      %888 = memref.load %arg2[%c76] : memref<98xf32, #tpu.memory_space<smem>>
      %c0_816 = arith.constant 0 : index
      %c0_817 = arith.constant 0 : index
      %889 = vector.load %arg9[%c0_816, %c0_817] : memref<16x16xf32, #tpu.memory_space<vmem>>, vector<16x16xf32>
      %c3_818 = arith.constant 3 : index
      %c0_819 = arith.constant 0 : index
      %890 = vector.load %arg8[%c3_818, %c0_819] : memref<22x16xf32, #tpu.memory_space<vmem>>, vector<16x16xf32>
      %891 = vector.broadcast %888 : f32 to vector<16x16xf32>
      %892 = arith.mulf %891, %890 : vector<16x16xf32>
      %893 = arith.addf %889, %892 : vector<16x16xf32>
      %c0_820 = arith.constant 0 : index
      %c0_821 = arith.constant 0 : index
      %894 = vector.load %arg9[%c0_820, %c0_821] : memref<16x16xf32, #tpu.memory_space<vmem>>, vector<16x16xf32>
      tpu.vector_store %arg9[%c0_820, %c0_821], %893 {strides = array<i32>} : memref<16x16xf32, #tpu.memory_space<vmem>>, vector<16x16xf32>,
      %c83 = arith.constant 83 : index
      %895 = memref.load %arg2[%c83] : memref<98xf32, #tpu.memory_space<smem>>
      %c0_822 = arith.constant 0 : index
      %c0_823 = arith.constant 0 : index
      %896 = vector.load %arg9[%c0_822, %c0_823] : memref<16x16xf32, #tpu.memory_space<vmem>>, vector<16x16xf32>
      %c4_824 = arith.constant 4 : index
      %c0_825 = arith.constant 0 : index
      %897 = vector.load %arg8[%c4_824, %c0_825] : memref<22x16xf32, #tpu.memory_space<vmem>>, vector<16x16xf32>
      %898 = vector.broadcast %895 : f32 to vector<16x16xf32>
      %899 = arith.mulf %898, %897 : vector<16x16xf32>
      %900 = arith.addf %896, %899 : vector<16x16xf32>
      %c0_826 = arith.constant 0 : index
      %c0_827 = arith.constant 0 : index
      %901 = vector.load %arg9[%c0_826, %c0_827] : memref<16x16xf32, #tpu.memory_space<vmem>>, vector<16x16xf32>
      tpu.vector_store %arg9[%c0_826, %c0_827], %900 {strides = array<i32>} : memref<16x16xf32, #tpu.memory_space<vmem>>, vector<16x16xf32>,
      %c90 = arith.constant 90 : index
      %902 = memref.load %arg2[%c90] : memref<98xf32, #tpu.memory_space<smem>>
      %c0_828 = arith.constant 0 : index
      %c0_829 = arith.constant 0 : index
      %903 = vector.load %arg9[%c0_828, %c0_829] : memref<16x16xf32, #tpu.memory_space<vmem>>, vector<16x16xf32>
      %c5_830 = arith.constant 5 : index
      %c0_831 = arith.constant 0 : index
      %904 = vector.load %arg8[%c5_830, %c0_831] : memref<22x16xf32, #tpu.memory_space<vmem>>, vector<16x16xf32>
      %905 = vector.broadcast %902 : f32 to vector<16x16xf32>
      %906 = arith.mulf %905, %904 : vector<16x16xf32>
      %907 = arith.addf %903, %906 : vector<16x16xf32>
      %c0_832 = arith.constant 0 : index
      %c0_833 = arith.constant 0 : index
      %908 = vector.load %arg9[%c0_832, %c0_833] : memref<16x16xf32, #tpu.memory_space<vmem>>, vector<16x16xf32>
      tpu.vector_store %arg9[%c0_832, %c0_833], %907 {strides = array<i32>} : memref<16x16xf32, #tpu.memory_space<vmem>>, vector<16x16xf32>,
      %c97 = arith.constant 97 : index
      %909 = memref.load %arg2[%c97] : memref<98xf32, #tpu.memory_space<smem>>
      %c0_834 = arith.constant 0 : index
      %c0_835 = arith.constant 0 : index
      %910 = vector.load %arg9[%c0_834, %c0_835] : memref<16x16xf32, #tpu.memory_space<vmem>>, vector<16x16xf32>
      %c6_836 = arith.constant 6 : index
      %c0_837 = arith.constant 0 : index
      %911 = vector.load %arg8[%c6_836, %c0_837] : memref<22x16xf32, #tpu.memory_space<vmem>>, vector<16x16xf32>
      %912 = vector.broadcast %909 : f32 to vector<16x16xf32>
      %913 = arith.mulf %912, %911 : vector<16x16xf32>
      %914 = arith.addf %910, %913 : vector<16x16xf32>
      %c0_838 = arith.constant 0 : index
      %c0_839 = arith.constant 0 : index
      %915 = vector.load %arg9[%c0_838, %c0_839] : memref<16x16xf32, #tpu.memory_space<vmem>>, vector<16x16xf32>
      tpu.vector_store %arg9[%c0_838, %c0_839], %914 {strides = array<i32>} : memref<16x16xf32, #tpu.memory_space<vmem>>, vector<16x16xf32>,
      %c0_840 = arith.constant 0 : index
      %c0_841 = arith.constant 0 : index
      %916 = vector.load %arg9[%c0_840, %c0_841] : memref<16x16xf32, #tpu.memory_space<vmem>>, vector<16x16xf32>
      %917 = arith.negf %916 : vector<16x16xf32>
      %918 = math.exp %917 : vector<16x16xf32>
      %cst_842 = arith.constant 1.000000e+00 : f32
      %919 = vector.broadcast %cst_842 : f32 to vector<16x16xf32>
      %920 = arith.addf %919, %918 : vector<16x16xf32>
      %921 = arith.divf %919, %920 : vector<16x16xf32>
      %c0_843 = arith.constant 0 : index
      %c0_844 = arith.constant 0 : index
      %c0_845 = arith.constant 0 : index
      %c0_846 = arith.constant 0 : index
      %922 = vector.load %arg4[%c0_843, %c0_844, %c0_845, %c0_846] : memref<1x1x16x16xf32, #tpu.memory_space<vmem>>, vector<1x1x16x16xf32>
      %923 = vector.shape_cast %922 : vector<1x1x16x16xf32> to vector<16x16xf32>
      %924 = vector.shape_cast %921 : vector<16x16xf32> to vector<1x1x16x16xf32>
      tpu.vector_store %arg4[%c0_843, %c0_844, %c0_845, %c0_846], %924 {strides = array<i32>} : memref<1x1x16x16xf32, #tpu.memory_space<vmem>>, vector<1x1x16x16xf32>,
    } else {
    }
    return
  }
  func.func @transform_0(%arg0: i32, %arg1: i32) -> i32 {
    %c0_i32 = arith.constant 0 : i32
    %c0_i32_0 = arith.constant 0 : i32
    return %c0_i32 : i32
  }
  func.func @transform_1(%arg0: i32, %arg1: i32) -> (i32, i32, i32) {
    %c0_i32 = arith.constant 0 : i32
    %c0_i32_0 = arith.constant 0 : i32
    return %arg0, %arg1, %c0_i32 : i32, i32, i32
  }
  func.func @transform_2(%arg0: i32, %arg1: i32) -> (i32, i32, i32, i32) {
    %c0_i32 = arith.constant 0 : i32
    %c0_i32_0 = arith.constant 0 : i32
    %c0_i32_1 = arith.constant 0 : i32
    %c0_i32_2 = arith.constant 0 : i32
    return %arg0, %c0_i32, %c0_i32_0, %c0_i32_1 : i32, i32, i32, i32
  }
}

</mosaic_0001>

<llo_original>
// kernel: tpu_custom_call.1
$region0: #{tpu_custom_call.1}
  #allocation0 [shape = 'u32[]', space=smem, size = 0x4, offset = 0x4, fixed_abs, tag = 'smem constant byte address 0x4 - core index']
  #allocation1 [shape = 'u32[144,128]{1,0:T(1,128)}', space=vmem, size = 0x12000, scoped, tag = 'internal scratch']
  #allocation2 [shape = 'f32[8,256]{1,0:T(8,128)}', space=vmem, size = 0x2000, scoped, tag = 'scratch operand']
  #allocation3 [shape = 'f32[8,256]{1,0:T(8,128)}', space=vmem, size = 0x2000, scoped, tag = 'scratch operand']
  #allocation4 [shape = 'f32[2,22,22]{2,1,0:T(8,128)}', space=vmem, size = 0x6000, scoped, tag = 'scratch operand']
  #allocation5 [shape = 'f32[22,16]{1,0:T(8,128)}', space=vmem, size = 0x3000, scoped, tag = 'scratch operand']
  #allocation6 [shape = 'f32[16,16]{1,0:T(8,128)}', space=vmem, size = 0x2000, scoped, tag = 'scratch operand']
  %s0 = inlined_call_operand.hbm [shape: f32[98], index: 0, kind: input, shape index: {}]
  %s1 = inlined_call_operand.hbm [shape: f32[2,4,256], index: 1, kind: input, shape index: {}]
  %s2 = inlined_call_operand.hbm [shape: f32[2,1,16,16], index: 2, kind: output, shape index: {}]
  %s3 = sld [smem:[#allocation0]]
  $region57: #{tpu_custom_call.1} parent=0
    _
  %s5 = ssub.s32 1, %s3
  %s6 = scalar_select 0, %s5, %s3
  $region1: #{tpu_custom_call.1} parent=0
    #allocation7 [shape = 'u8[512]{0}', space=smem, size = 0x200, scoped, tag = 'input window, operand 0, single buffered']
    #allocation8 [shape = 's32[2]{0}', space=sflag, size = 0x8, scoped, tag = 'scoped memory for tpu_custom_call.1']
    #allocation9 [shape = 's32[2]{0}', space=sflag, size = 0x8, scoped, tag = 'scoped memory for tpu_custom_call.1']
    #allocation10 [shape = 's32[2]{0}', space=sflag, size = 0x8, scoped, tag = 'scoped memory for tpu_custom_call.1']
    #allocation11 [shape = 'u8[8192]{0}', space=vmem, size = 0x2000, scoped, tag = 'input window, operand 1']
    #allocation12 [shape = 'u8[16384]{0}', space=vmem, size = 0x4000, scoped, tag = 'output window, operand 0']
    %7 = vsyncpa [#allocation10], 0
    %8 = vsyncpa [#allocation8], 0
    %s9 = scalar_lea.sflag [#allocation8], 1
    %10 = vsyncpa %s9, 0
    %11 = vsyncpa [#allocation9], 0
    %s12 = scalar_lea.sflag [#allocation9], 1
    %13 = vsyncpa %s12, 0
    loop: start=0, step=1, limit=4
    $region2: #{tpu_custom_call.1} parent=1 // loop_pre_header
      _
    $region3: #{tpu_custom_call.1} parent=1 // loop_header
      %s15 = sphi 0, %s19
      %p16 = scmp.ge.s32.totalorder %s15, 4
      %s22 = sphi 0, %s34
      %s23 = sphi 0, %s30
      %s24 = sphi 0, %s22
      %s25 = sphi 0, %s23
      %s26 = sphi 0, %s24
      %s27 = sphi 0, %s25
      %s35 = sphi 0, %s35
      %s37 = sphi 0, %s35
      %s38 = sphi 0, %s37
      %s52 = sphi 0, %s38
      %s60 = sphi 0, %s62
      %s63 = sphi 0, %s60
      %s64 = sphi 0, %s63
      %s80 = sphi 0, %s64
      %s86 = sphi 0, %s88
      %s89 = sphi 0, %s86
      %s90 = sphi 0, %s89
      %s106 = sphi 0, %s90
    $region4: #{tpu_custom_call.1} parent=1 // loop_header_branch
      %18 = sbr.rel (%p16) target = $region8
    $region5: #{tpu_custom_call.1} parent=1 // loop_body
      %s20 = ssub.s32 %s15, 1
      %s21 = ssub.s32 %s15, 2
      %s28 = sadd.s32 1, %s23
      %p29 = scmp.ge.s32.totalorder %s28, 1
      %s30 = scalar_select %p29, 0, %s28
      %s31 = sadd.s32 1, %s22
      %s32 = scalar_select %p29, %s31, %s22
      %p33 = scmp.ge.s32.totalorder %s32, 2
      %s34 = scalar_select %p33, 0, %s32
      %s36 = sadd.s32 %s35, 1
      %p39 = scmp.eq.s32.totalorder %s15, 1
      %p40 = scmp.ne.s32.totalorder %s35, %s37
      %p41 = scmp.eq.s32.totalorder %s15, 0
      %p42 = por %p40, %p41
      %p43 = scmp.ne.s32.totalorder %s35, %s37
      %p44 = scmp.eq.s32.totalorder %s20, 1
      %p45 = por %p43, %p44
      %p46 = scmp.ne.s32.totalorder %s37, %s38
      %p47 = scmp.eq.s32.totalorder %s20, 0
      %p48 = por %p46, %p47
      %p49 = scmp.ne.s32.totalorder %s37, %s38
      %p50 = scmp.eq.s32.totalorder %s21, 1
      %p51 = por %p49, %p50
      %p53 = scmp.ne.s32.totalorder %s38, %s52
      %p54 = scmp.eq.s32.totalorder %s21, 0
      %p55 = por %p53, %p54
      %s56 = ssub.s32 %s22, %s34
      %s57 = ssub.s32 %s23, %s30
      %s58 = sor.u32 %s56, %s57
      %p59 = scmp.eq.s32.totalorder %s58, 0
      %s61 = sadd.s32 %s60, 1
      %s62 = scalar_select %p59, %s60, %s61
      %p65 = pneg %p59
      %p66 = scmp.eq.s32.totalorder %s15, 1
      %p67 = por %p65, %p66
      %p68 = scmp.ne.s32.totalorder %s60, %s63
      %p69 = scmp.eq.s32.totalorder %s15, 0
      %p70 = por %p68, %p69
      %p71 = scmp.ne.s32.totalorder %s60, %s63
      %p72 = scmp.eq.s32.totalorder %s20, 1
      %p73 = por %p71, %p72
      %p74 = scmp.ne.s32.totalorder %s63, %s64
      %p75 = scmp.eq.s32.totalorder %s20, 0
      %p76 = por %p74, %p75
      %p77 = scmp.ne.s32.totalorder %s63, %s64
      %p78 = scmp.eq.s32.totalorder %s21, 1
      %p79 = por %p77, %p78
      %p81 = scmp.ne.s32.totalorder %s64, %s80
      %p82 = scmp.eq.s32.totalorder %s21, 0
      %p83 = por %p81, %p82
      %s84 = ssub.s32 %s22, %s34
      %p85 = scmp.eq.s32.totalorder %s84, 0
      %s87 = sadd.s32 %s86, 1
      %s88 = scalar_select %p85, %s86, %s87
      %p91 = pneg %p85
      %p92 = scmp.eq.s32.totalorder %s15, 1
      %p93 = por %p91, %p92
      %p94 = scmp.ne.s32.totalorder %s86, %s89
      %p95 = scmp.eq.s32.totalorder %s15, 0
      %p96 = por %p94, %p95
      %p97 = scmp.ne.s32.totalorder %s86, %s89
      %p98 = scmp.eq.s32.totalorder %s20, 1
      %p99 = por %p97, %p98
      %p100 = scmp.ne.s32.totalorder %s89, %s90
      %p101 = scmp.eq.s32.totalorder %s20, 0
      %p102 = por %p100, %p101
      %p103 = scmp.ne.s32.totalorder %s89, %s90
      %p104 = scmp.eq.s32.totalorder %s21, 1
      %p105 = por %p103, %p104
      %p107 = scmp.ne.s32.totalorder %s90, %s106
      %p108 = scmp.eq.s32.totalorder %s21, 0
      %p109 = por %p107, %p108
      %p110 = scmp.le.s32.totalorder 1, %s15
      %p111 = scmp.lt.s32.totalorder %s15, 3
      %p112 = pnand %p110, %p111
      %p113 = pneg %p112
      // Predicated region
      $region9: #{tpu_custom_call.1} parent=5 // pred_check
        _
      $region10: #{tpu_custom_call.1} parent=5 // pred_check_branch
        %115 = sbr.rel (%p112) target = $region12
      $region11: #{tpu_custom_call.1} parent=5 // pred_region
        %s116 = ssub.s32 %s15, 1
        // Predicated region
        $region13: #{tpu_custom_call.1} parent=11 // pred_check
          %p117 = pneg %p48
        $region14: #{tpu_custom_call.1} parent=11 // pred_check_branch
          %119 = sbr.rel (%p117) target = $region16
        $region15: #{tpu_custom_call.1} parent=11 // pred_region
          %s121 = ssub.s32 16, 16
          %122 = vsyncadd [#allocation10], %s121
          %125 = dma.hbm_to_smem %s0, 16, [#allocation7], [#allocation10]
        $region16: #{tpu_custom_call.1} parent=11 // pred_fallthru
          _
      $region12: #{tpu_custom_call.1} parent=5 // pred_fallthru
        _
      %p126 = scmp.lt.s32.totalorder %s15, 2
      // Predicated region
      $region17: #{tpu_custom_call.1} parent=5 // pred_check
        %p127 = pneg %p126
      $region18: #{tpu_custom_call.1} parent=5 // pred_check_branch
        %129 = sbr.rel (%p127) target = $region20
      $region19: #{tpu_custom_call.1} parent=5 // pred_region
        // Predicated region
        $region21: #{tpu_custom_call.1} parent=19 // pred_check
          %p130 = pneg %p70
        $region22: #{tpu_custom_call.1} parent=19 // pred_check_branch
          %132 = sbr.rel (%p130) target = $region24
        $region23: #{tpu_custom_call.1} parent=19 // pred_region
          %s133 = sand.u32 %s60, 1
          %s134 = scalar_lea.sflag [#allocation8], %s133
          %s135 = sand.u32 %s60, 1
          %s136 = smul.addr %s135, 8
          %s137 = scalar_lea.vmem [#allocation11], %s136
          %s139 = ssub.s32 128, 128
          %140 = vsyncadd %s134, %s139
          %s141 = smul.addr %s23, 2
          %s142 = smul.addr %s22, 2
          %s143 = sadd.s32 %s141, %s142
          %s144 = smul.addr %s143, 64
          %s145 = scalar_lea.hbm %s1, %s144
          %s147 = sshll.u32 %s137, 4
          %s148 = int_to_ptr.vmem [resolvable:$true] %s147
          %150 = dma.hbm_to_vmem [thread:$0]  %s145, 128, %s148, %s134
        $region24: #{tpu_custom_call.1} parent=19 // pred_fallthru
          _
      $region20: #{tpu_custom_call.1} parent=5 // pred_fallthru
        _
      %p151 = scmp.le.s32.totalorder 1, %s15
      %p152 = scmp.lt.s32.totalorder %s15, 3
      %p153 = pnand %p151, %p152
      %p154 = pneg %p153
      // Predicated region
      $region25: #{tpu_custom_call.1} parent=5 // pred_check
        _
      $region26: #{tpu_custom_call.1} parent=5 // pred_check_branch
        %156 = sbr.rel (%p153) target = $region28
      $region27: #{tpu_custom_call.1} parent=5 // pred_region
        %s157 = ssub.s32 %s15, 1
        // Predicated region
        $region29: #{tpu_custom_call.1} parent=27 // pred_check
          %p158 = pneg %p48
        $region30: #{tpu_custom_call.1} parent=27 // pred_check_branch
          %160 = sbr.rel (%p158) target = $region32
        $region31: #{tpu_custom_call.1} parent=27 // pred_region
          %161 = dma.done [#allocation10], 16
        $region32: #{tpu_custom_call.1} parent=27 // pred_fallthru
          _
        %s162 = sand.u32 %s63, 1
        %s163 = scalar_lea.sflag [#allocation8], %s162
        %s164 = sand.u32 %s63, 1
        %s165 = smul.addr %s164, 8
        %s166 = scalar_lea.vmem [#allocation11], %s165
        // Predicated region
        $region33: #{tpu_custom_call.1} parent=27 // pred_check
          %p167 = pneg %p76
        $region34: #{tpu_custom_call.1} parent=27 // pred_check_branch
          %169 = sbr.rel (%p167) target = $region36
        $region35: #{tpu_custom_call.1} parent=27 // pred_region
          %170 = dma.done %s163, 128
        $region36: #{tpu_custom_call.1} parent=27 // pred_fallthru
          _
        %171 = sfence
        %p172 = pneg %p48
        %p173 = pneg %p45
        %s174 = sand.u32 %s63, 1
        %s175 = scalar_lea.sflag [#allocation8], %s174
        %s176 = sand.u32 %s63, 1
        %s177 = smul.addr %s176, 8
        %s178 = scalar_lea.vmem [#allocation11], %s177
        %p179 = pneg %p76
        %p180 = pneg %p73
        %p181 = pneg %p102
        %p182 = pneg %p99
        %s183 = sand.u32 %s89, 1
        %s184 = scalar_lea.sflag [#allocation9], %s183
        %s185 = sand.u32 %s89, 1
        %s186 = smul.addr %s185, 16
        %s187 = scalar_lea.vmem [#allocation12], %s186
        %p188 = scmp.eq.s32.totalorder %s25, 0
        // Predicated region
        $region37: #{tpu_custom_call.1} parent=27 // pred_check
          %p189 = pneg %p188
        $region38: #{tpu_custom_call.1} parent=27 // pred_check_branch
          %191 = sbr.rel (%p189) target = $region40
        $region39: #{tpu_custom_call.1} parent=27 // pred_region
          %192 = vst [vmem:[#allocation2] sm:$0xff] 0.0
          %193 = vst [vmem:[#allocation2 + $0x8] sm:$0xff] 0.0
          %194 = vst [vmem:[#allocation3] sm:$0xff] -inf
          %195 = vst [vmem:[#allocation3 + $0x8] sm:$0xff] -inf
        $region40: #{tpu_custom_call.1} parent=27 // pred_fallthru
          _
        %v196 = vld [vmem:[%s166] sm:$0xff]
        %v197 = vld [vmem:[#allocation2] sm:$0xf]
        %v198 = vld [vmem:[#allocation2 + $0x8] sm:$0xf]
        %v200 = vcombine.high %v196, %v196
        %v202 = vadd.f32 %v197, %v196
        %v203 = vadd.f32 %v198, %v200
        %204 = vst [vmem:[#allocation2] sm:$0xf] %v202
        %205 = vst [vmem:[#allocation2 + $0x8] sm:$0xf] %v203
        %v206 = vld [vmem:[#allocation3] sm:$0xf]
        %v207 = vld [vmem:[#allocation3 + $0x8] sm:$0xf]
        %v208 = vmax.f32 %v206, %v196
        %v209 = vmax.f32 %v207, %v200
        %210 = vst [vmem:[#allocation3] sm:$0xf] %v208
        %211 = vst [vmem:[#allocation3 + $0x8] sm:$0xf] %v209
        // Predicated region
        $region41: #{tpu_custom_call.1} parent=27 // pred_check
          %p212 = pneg %p188
        $region42: #{tpu_custom_call.1} parent=27 // pred_check_branch
          %214 = sbr.rel (%p212) target = $region44
        $region43: #{tpu_custom_call.1} parent=27 // pred_region
          %v215 = vld [vmem:[#allocation2] sm:$0xff]
          %v216 = vld [vmem:[#allocation2 + $0x8] sm:$0xff]
          %v217 = vrot.slane %v215, 4
          %v218 = vadd.f32 %v215, %v217
          %v219 = vrot.slane %v218, 2
          %v220 = vadd.f32 %v218, %v219
          %v221 = vrot.slane %v220, 1
          %v222 = vadd.f32 %v220, %v221
          %v223 = vrot.slane %v216, 4
          %v224 = vadd.f32 %v216, %v223
          %v225 = vrot.slane %v224, 2
          %v226 = vadd.f32 %v224, %v225
          %v227 = vrot.slane %v226, 1
          %v228 = vadd.f32 %v226, %v227
          %v229 = vmul.f32 %v222, 0.25
          %v230 = vmul.f32 %v228, 0.25
          %v233 = vcombine.low %v229, %v230
          %v235 = vunpack.c.l.s4 1966171168
          %v236 = vunpack.c.0.s8 %v235
          %v237 = vlaneseq
          %v238 = vshrl.u32 %v237, 7
          %v239 = vsub.s32 %v236, %v238
          %v240 = vrot.slane %v233, %v239
          %v242 = vunpack.c.l.s4 1966171168
          %v243 = vunpack.c.0.s8 %v242
          %v244 = vlaneseq
          %v245 = vshrl.u32 %v244, 7
          %v246 = vsub.s32 %v243, %v245
          %v247 = vrot.slane %v240, %v246
          %v249 = vlaneseq
          %vm250 = vcmp.ge.s32.totalorder %v249, 0
          %vm251 = vcmp.lt.s32.totalorder %v249, 256
          %vm252 = vmand %vm250, %vm251
          %253 = vst.msk [vmem:[#allocation2] ss:$8 sm:$0x3] %vm252, %v247
          %254 = vst.msk [vmem:[#allocation2] ss:$8 sm:$0x0] %vm252, %v247
          %v255 = vld [vmem:[#allocation3] sm:$0xff]
          %v256 = vld [vmem:[#allocation3 + $0x8] sm:$0xff]
          %v257 = vrot.slane %v255, 4
          %v258 = vmax.f32 %v255, %v257
          %v259 = vrot.slane %v258, 2
          %v260 = vmax.f32 %v258, %v259
          %v261 = vrot.slane %v260, 1
          %v262 = vmax.f32 %v260, %v261
          %v263 = vrot.slane %v256, 4
          %v264 = vmax.f32 %v256, %v263
          %v265 = vrot.slane %v264, 2
          %v266 = vmax.f32 %v264, %v265
          %v267 = vrot.slane %v266, 1
          %v268 = vmax.f32 %v266, %v267
          %v271 = vcombine.low %v262, %v268
          %v273 = vunpack.c.l.s4 1966171168
          %v274 = vunpack.c.0.s8 %v273
          %v275 = vlaneseq
          %v276 = vshrl.u32 %v275, 7
          %v277 = vsub.s32 %v274, %v276
          %v278 = vrot.slane %v271, %v277
          %v280 = vunpack.c.l.s4 1966171168
          %v281 = vunpack.c.0.s8 %v280
          %v282 = vlaneseq
          %v283 = vshrl.u32 %v282, 7
          %v284 = vsub.s32 %v281, %v283
          %v285 = vrot.slane %v278, %v284
          %287 = vst.msk [vmem:[#allocation3] ss:$8 sm:$0x3] %vm252, %v285
          %288 = vst.msk [vmem:[#allocation3] ss:$8 sm:$0x0] %vm252, %v285
          %vm289 = vcmask 179200
          %290 = vst.msk [vmem:[#allocation4] sm:$0xff] %vm289, 0.0
          %291 = vst.msk [vmem:[#allocation4 + $0x8] sm:$0xff] %vm289, 0.0
          %vm292 = vcmask 177152
          %293 = vst.msk [vmem:[#allocation4 + $0x10] sm:$0x3f] %vm292, 0.0
          %294 = vst.msk [vmem:[#allocation4 + $0x18] sm:$0xff] %vm289, 0.0
          %295 = vst.msk [vmem:[#allocation4 + $0x20] sm:$0xff] %vm289, 0.0
          %296 = vst.msk [vmem:[#allocation4 + $0x28] sm:$0x3f] %vm292, 0.0
          %v297 = vld [vmem:[#allocation2] ss:$0 sm:$0xff]
          %299 = vrot.lane.b32.xlu0 %v297, 3
          %v300 = vpop.permute.xlu0 %299
          %vm302 = vcmask 147480
          %303 = vst.msk [vmem:[#allocation4 + $0x3] sm:$0x1] %vm302, %v300
          %v304 = vld [vmem:[#allocation3] ss:$0 sm:$0xff]
          %306 = vrot.lane.b32.xlu0 %v304, 3
          %v307 = vpop.permute.xlu0 %306
          %s309 = scalar_lea.vmem [#allocation4], 24
          %310 = vst.msk [vmem:[%s309 + $0x3] sm:$0x1] %vm302, %v307
          %v311 = vld [vmem:[#allocation2] ss:$0 sm:$0xff]
          %313 = vrot.lane.b32.xlu0 %v311, 115
          %v314 = vpop.permute.xlu0 %313
          %316 = vst.msk [vmem:[#allocation4 + $0x4] sm:$0x1] %vm302, %v314
          %v317 = vld [vmem:[#allocation3] ss:$0 sm:$0xff]
          %319 = vrot.lane.b32.xlu0 %v317, 115
          %v320 = vpop.permute.xlu0 %319
          %322 = vst.msk [vmem:[%s309 + $0x4] sm:$0x1] %vm302, %v320
          %v323 = vld [vmem:[#allocation2] ss:$0 sm:$0xff]
          %325 = vrot.lane.b32.xlu0 %v323, 99
          %v326 = vpop.permute.xlu0 %325
          %328 = vst.msk [vmem:[#allocation4 + $0x5] sm:$0x1] %vm302, %v326
          %v329 = vld [vmem:[#allocation3] ss:$0 sm:$0xff]
          %331 = vrot.lane.b32.xlu0 %v329, 99
          %v332 = vpop.permute.xlu0 %331
          %334 = vst.msk [vmem:[%s309 + $0x5] sm:$0x1] %vm302, %v332
          %v335 = vld [vmem:[#allocation2] ss:$0 sm:$0xff]
          %337 = vrot.lane.b32.xlu0 %v335, 83
          %v338 = vpop.permute.xlu0 %337
          %340 = vst.msk [vmem:[#allocation4 + $0x6] sm:$0x1] %vm302, %v338
          %v341 = vld [vmem:[#allocation3] ss:$0 sm:$0xff]
          %343 = vrot.lane.b32.xlu0 %v341, 83
          %v344 = vpop.permute.xlu0 %343
          %346 = vst.msk [vmem:[%s309 + $0x6] sm:$0x1] %vm302, %v344
          %v347 = vld [vmem:[#allocation2] ss:$0 sm:$0xff]
          %349 = vrot.lane.b32.xlu0 %v347, 67
          %v350 = vpop.permute.xlu0 %349
          %352 = vst.msk [vmem:[#allocation4 + $0x7] sm:$0x1] %vm302, %v350
          %v353 = vld [vmem:[#allocation3] ss:$0 sm:$0xff]
          %355 = vrot.lane.b32.xlu0 %v353, 67
          %v356 = vpop.permute.xlu0 %355
          %358 = vst.msk [vmem:[%s309 + $0x7] sm:$0x1] %vm302, %v356
          %v359 = vld [vmem:[#allocation2] ss:$0 sm:$0xff]
          %361 = vrot.lane.b32.xlu0 %v359, 51
          %v362 = vpop.permute.xlu0 %361
          %364 = vst.msk [vmem:[#allocation4 + $0x8] sm:$0x1] %vm302, %v362
          %v365 = vld [vmem:[#allocation3] ss:$0 sm:$0xff]
          %367 = vrot.lane.b32.xlu0 %v365, 51
          %v368 = vpop.permute.xlu0 %367
          %370 = vst.msk [vmem:[%s309 + $0x8] sm:$0x1] %vm302, %v368
          %v371 = vld [vmem:[#allocation2] ss:$0 sm:$0xff]
          %373 = vrot.lane.b32.xlu0 %v371, 35
          %v374 = vpop.permute.xlu0 %373
          %376 = vst.msk [vmem:[#allocation4 + $0x9] sm:$0x1] %vm302, %v374
          %v377 = vld [vmem:[#allocation3] ss:$0 sm:$0xff]
          %379 = vrot.lane.b32.xlu0 %v377, 35
          %v380 = vpop.permute.xlu0 %379
          %382 = vst.msk [vmem:[%s309 + $0x9] sm:$0x1] %vm302, %v380
          %v383 = vld [vmem:[#allocation2] ss:$0 sm:$0xff]
          %385 = vrot.lane.b32.xlu0 %v383, 19
          %v386 = vpop.permute.xlu0 %385
          %388 = vst.msk [vmem:[#allocation4 + $0xa] sm:$0x1] %vm302, %v386
          %v389 = vld [vmem:[#allocation3] ss:$0 sm:$0xff]
          %391 = vrot.lane.b32.xlu0 %v389, 19
          %v392 = vpop.permute.xlu0 %391
          %394 = vst.msk [vmem:[%s309 + $0xa] sm:$0x1] %vm302, %v392
          %v395 = vld [vmem:[#allocation2 + $0x8] ss:$0 sm:$0xff]
          %397 = vrot.lane.b32.xlu0 %v395, 3
          %v398 = vpop.permute.xlu0 %397
          %400 = vst.msk [vmem:[#allocation4 + $0xb] sm:$0x1] %vm302, %v398
          %v401 = vld [vmem:[#allocation3 + $0x8] ss:$0 sm:$0xff]
          %403 = vrot.lane.b32.xlu0 %v401, 3
          %v404 = vpop.permute.xlu0 %403
          %406 = vst.msk [vmem:[%s309 + $0xb] sm:$0x1] %vm302, %v404
          %v407 = vld [vmem:[#allocation2 + $0x8] ss:$0 sm:$0xff]
          %409 = vrot.lane.b32.xlu0 %v407, 115
          %v410 = vpop.permute.xlu0 %409
          %412 = vst.msk [vmem:[#allocation4 + $0xc] sm:$0x1] %vm302, %v410
          %v413 = vld [vmem:[#allocation3 + $0x8] ss:$0 sm:$0xff]
          %415 = vrot.lane.b32.xlu0 %v413, 115
          %v416 = vpop.permute.xlu0 %415
          %418 = vst.msk [vmem:[%s309 + $0xc] sm:$0x1] %vm302, %v416
          %v419 = vld [vmem:[#allocation2 + $0x8] ss:$0 sm:$0xff]
          %421 = vrot.lane.b32.xlu0 %v419, 99
          %v422 = vpop.permute.xlu0 %421
          %424 = vst.msk [vmem:[#allocation4 + $0xd] sm:$0x1] %vm302, %v422
          %v425 = vld [vmem:[#allocation3 + $0x8] ss:$0 sm:$0xff]
          %427 = vrot.lane.b32.xlu0 %v425, 99
          %v428 = vpop.permute.xlu0 %427
          %430 = vst.msk [vmem:[%s309 + $0xd] sm:$0x1] %vm302, %v428
          %v431 = vld [vmem:[#allocation2 + $0x8] ss:$0 sm:$0xff]
          %433 = vrot.lane.b32.xlu0 %v431, 83
          %v434 = vpop.permute.xlu0 %433
          %436 = vst.msk [vmem:[#allocation4 + $0xe] sm:$0x1] %vm302, %v434
          %v437 = vld [vmem:[#allocation3 + $0x8] ss:$0 sm:$0xff]
          %439 = vrot.lane.b32.xlu0 %v437, 83
          %v440 = vpop.permute.xlu0 %439
          %442 = vst.msk [vmem:[%s309 + $0xe] sm:$0x1] %vm302, %v440
          %v443 = vld [vmem:[#allocation2 + $0x8] ss:$0 sm:$0xff]
          %445 = vrot.lane.b32.xlu0 %v443, 67
          %v446 = vpop.permute.xlu0 %445
          %448 = vst.msk [vmem:[#allocation4 + $0xf] sm:$0x1] %vm302, %v446
          %v449 = vld [vmem:[#allocation3 + $0x8] ss:$0 sm:$0xff]
          %451 = vrot.lane.b32.xlu0 %v449, 67
          %v452 = vpop.permute.xlu0 %451
          %454 = vst.msk [vmem:[%s309 + $0xf] sm:$0x1] %vm302, %v452
          %v455 = vld [vmem:[#allocation2 + $0x8] ss:$0 sm:$0xff]
          %457 = vrot.lane.b32.xlu0 %v455, 51
          %v458 = vpop.permute.xlu0 %457
          %460 = vst.msk [vmem:[#allocation4 + $0x10] sm:$0x1] %vm302, %v458
          %v461 = vld [vmem:[#allocation3 + $0x8] ss:$0 sm:$0xff]
          %463 = vrot.lane.b32.xlu0 %v461, 51
          %v464 = vpop.permute.xlu0 %463
          %466 = vst.msk [vmem:[%s309 + $0x10] sm:$0x1] %vm302, %v464
          %v467 = vld [vmem:[#allocation2 + $0x8] ss:$0 sm:$0xff]
          %469 = vrot.lane.b32.xlu0 %v467, 35
          %v470 = vpop.permute.xlu0 %469
          %472 = vst.msk [vmem:[#allocation4 + $0x11] sm:$0x1] %vm302, %v470
          %v473 = vld [vmem:[#allocation3 + $0x8] ss:$0 sm:$0xff]
          %475 = vrot.lane.b32.xlu0 %v473, 35
          %v476 = vpop.permute.xlu0 %475
          %478 = vst.msk [vmem:[%s309 + $0x11] sm:$0x1] %vm302, %v476
          %v479 = vld [vmem:[#allocation2 + $0x8] ss:$0 sm:$0xff]
          %481 = vrot.lane.b32.xlu0 %v479, 19
          %v482 = vpop.permute.xlu0 %481
          %484 = vst.msk [vmem:[#allocation4 + $0x12] sm:$0x1] %vm302, %v482
          %v485 = vld [vmem:[#allocation3 + $0x8] ss:$0 sm:$0xff]
          %487 = vrot.lane.b32.xlu0 %v485, 19
          %v488 = vpop.permute.xlu0 %487
          %490 = vst.msk [vmem:[%s309 + $0x12] sm:$0x1] %vm302, %v488
          %vm491 = vcmask 130048
          %492 = vst.msk [vmem:[#allocation6] sm:$0xff] %vm491, 0.0
          %493 = vst.msk [vmem:[#allocation6 + $0x8] sm:$0xff] %vm491, 0.0
          %v494 = vld [vmem:[#allocation4] sm:$0xff]
          %v495 = vld [vmem:[#allocation4 + $0x8] sm:$0xff]
          %v496 = vld [vmem:[#allocation4 + $0x10] sm:$0x3f]
          %497 = vst.msk [vmem:[#allocation5] sm:$0xff] %vm491, %v494
          %498 = vst.msk [vmem:[#allocation5 + $0x8] sm:$0xff] %vm491, %v495
          %vm499 = vcmask 128000
          %500 = vst.msk [vmem:[#allocation5 + $0x10] sm:$0x3f] %vm499, %v496
          %s501 = sld [smem:[#allocation7]]
          %v502 = vld [vmem:[#allocation6] sm:$0xff]
          %v503 = vld [vmem:[#allocation6 + $0x8] sm:$0xff]
          %v504 = vld [vmem:[#allocation5] sm:$0xff]
          %v505 = vld [vmem:[#allocation5 + $0x8] sm:$0xff]
          %v506 = vstv %s501
          %v507 = vmul.f32 %v506, %v504
          %v508 = vmul.f32 %v506, %v505
          %v509 = vadd.f32 %v502, %v507
          %v510 = vadd.f32 %v503, %v508
          %511 = vst.msk [vmem:[#allocation6] sm:$0xff] %vm491, %v509
          %512 = vst.msk [vmem:[#allocation6 + $0x8] sm:$0xff] %vm491, %v510
          %s513 = sld [smem:[#allocation7 + $0x7]]
          %v514 = vld [vmem:[#allocation6] sm:$0xff]
          %v515 = vld [vmem:[#allocation6 + $0x8] sm:$0xff]
          %v516 = vld [vmem:[#allocation5 + $0x1] sm:$0xff]
          %v517 = vld [vmem:[#allocation5 + $0x9] sm:$0xff]
          %v518 = vstv %s513
          %v519 = vmul.f32 %v518, %v516
          %v520 = vmul.f32 %v518, %v517
          %v521 = vadd.f32 %v514, %v519
          %v522 = vadd.f32 %v515, %v520
          %523 = vst.msk [vmem:[#allocation6] sm:$0xff] %vm491, %v521
          %524 = vst.msk [vmem:[#allocation6 + $0x8] sm:$0xff] %vm491, %v522
          %s525 = sld [smem:[#allocation7 + $0xe]]
          %v526 = vld [vmem:[#allocation6] sm:$0xff]
          %v527 = vld [vmem:[#allocation6 + $0x8] sm:$0xff]
          %v528 = vld [vmem:[#allocation5 + $0x2] sm:$0xff]
          %v529 = vld [vmem:[#allocation5 + $0xa] sm:$0xff]
          %v530 = vstv %s525
          %v531 = vmul.f32 %v530, %v528
          %v532 = vmul.f32 %v530, %v529
          %v533 = vadd.f32 %v526, %v531
          %v534 = vadd.f32 %v527, %v532
          %535 = vst.msk [vmem:[#allocation6] sm:$0xff] %vm491, %v533
          %536 = vst.msk [vmem:[#allocation6 + $0x8] sm:$0xff] %vm491, %v534
          %s537 = sld [smem:[#allocation7 + $0x15]]
          %v538 = vld [vmem:[#allocation6] sm:$0xff]
          %v539 = vld [vmem:[#allocation6 + $0x8] sm:$0xff]
          %v540 = vld [vmem:[#allocation5 + $0x3] sm:$0xff]
          %v541 = vld [vmem:[#allocation5 + $0xb] sm:$0xff]
          %v542 = vstv %s537
          %v543 = vmul.f32 %v542, %v540
          %v544 = vmul.f32 %v542, %v541
          %v545 = vadd.f32 %v538, %v543
          %v546 = vadd.f32 %v539, %v544
          %547 = vst.msk [vmem:[#allocation6] sm:$0xff] %vm491, %v545
          %548 = vst.msk [vmem:[#allocation6 + $0x8] sm:$0xff] %vm491, %v546
          %s549 = sld [smem:[#allocation7 + $0x1c]]
          %v550 = vld [vmem:[#allocation6] sm:$0xff]
          %v551 = vld [vmem:[#allocation6 + $0x8] sm:$0xff]
          %v552 = vld [vmem:[#allocation5 + $0x4] sm:$0xff]
          %v553 = vld [vmem:[#allocation5 + $0xc] sm:$0xff]
          %v554 = vstv %s549
          %v555 = vmul.f32 %v554, %v552
          %v556 = vmul.f32 %v554, %v553
          %v557 = vadd.f32 %v550, %v555
          %v558 = vadd.f32 %v551, %v556
          %559 = vst.msk [vmem:[#allocation6] sm:$0xff] %vm491, %v557
          %560 = vst.msk [vmem:[#allocation6 + $0x8] sm:$0xff] %vm491, %v558
          %s561 = sld [smem:[#allocation7 + $0x23]]
          %v562 = vld [vmem:[#allocation6] sm:$0xff]
          %v563 = vld [vmem:[#allocation6 + $0x8] sm:$0xff]
          %v564 = vld [vmem:[#allocation5 + $0x5] sm:$0xff]
          %v565 = vld [vmem:[#allocation5 + $0xd] sm:$0xff]
          %v566 = vstv %s561
          %v567 = vmul.f32 %v566, %v564
          %v568 = vmul.f32 %v566, %v565
          %v569 = vadd.f32 %v562, %v567
          %v570 = vadd.f32 %v563, %v568
          %571 = vst.msk [vmem:[#allocation6] sm:$0xff] %vm491, %v569
          %572 = vst.msk [vmem:[#allocation6 + $0x8] sm:$0xff] %vm491, %v570
          %s573 = sld [smem:[#allocation7 + $0x2a]]
          %v574 = vld [vmem:[#allocation6] sm:$0xff]
          %v575 = vld [vmem:[#allocation6 + $0x8] sm:$0xff]
          %v576 = vld [vmem:[#allocation5 + $0x6] sm:$0xff]
          %v577 = vld [vmem:[#allocation5 + $0xe] sm:$0xff]
          %v578 = vstv %s573
          %v579 = vmul.f32 %v578, %v576
          %v580 = vmul.f32 %v578, %v577
          %v581 = vadd.f32 %v574, %v579
          %v582 = vadd.f32 %v575, %v580
          %583 = vst.msk [vmem:[#allocation6] sm:$0xff] %vm491, %v581
          %584 = vst.msk [vmem:[#allocation6 + $0x8] sm:$0xff] %vm491, %v582
          %v585 = vld [vmem:[#allocation4] sm:$0xff]
          %v586 = vld [vmem:[#allocation4 + $0x8] sm:$0xff]
          %v587 = vld [vmem:[#allocation4 + $0x10] sm:$0x3f]
          %591 = vrot.lane.b32.xlu0 %v585, 127
          %v592 = vpop.permute.xlu0 %591
          %593 = vrot.lane.b32.xlu0 %v586, 127
          %v594 = vpop.permute.xlu0 %593
          %595 = vrot.lane.b32.xlu0 %v587, 127
          %v596 = vpop.permute.xlu0 %595
          %600 = vst.msk [vmem:[#allocation5] sm:$0xff] %vm491, %v592
          %601 = vst.msk [vmem:[#allocation5 + $0x8] sm:$0xff] %vm491, %v594
          %602 = vst.msk [vmem:[#allocation5 + $0x10] sm:$0x3f] %vm499, %v596
          %s603 = sld [smem:[#allocation7 + $0x1]]
          %v604 = vld [vmem:[#allocation6] sm:$0xff]
          %v605 = vld [vmem:[#allocation6 + $0x8] sm:$0xff]
          %v606 = vld [vmem:[#allocation5] sm:$0xff]
          %v607 = vld [vmem:[#allocation5 + $0x8] sm:$0xff]
          %v608 = vstv %s603
          %v609 = vmul.f32 %v608, %v606
          %v610 = vmul.f32 %v608, %v607
          %v611 = vadd.f32 %v604, %v609
          %v612 = vadd.f32 %v605, %v610
          %613 = vst.msk [vmem:[#allocation6] sm:$0xff] %vm491, %v611
          %614 = vst.msk [vmem:[#allocation6 + $0x8] sm:$0xff] %vm491, %v612
          %s615 = sld [smem:[#allocation7 + $0x8]]
          %v616 = vld [vmem:[#allocation6] sm:$0xff]
          %v617 = vld [vmem:[#allocation6 + $0x8] sm:$0xff]
          %v618 = vld [vmem:[#allocation5 + $0x1] sm:$0xff]
          %v619 = vld [vmem:[#allocation5 + $0x9] sm:$0xff]
          %v620 = vstv %s615
          %v621 = vmul.f32 %v620, %v618
          %v622 = vmul.f32 %v620, %v619
          %v623 = vadd.f32 %v616, %v621
          %v624 = vadd.f32 %v617, %v622
          %625 = vst.msk [vmem:[#allocation6] sm:$0xff] %vm491, %v623
          %626 = vst.msk [vmem:[#allocation6 + $0x8] sm:$0xff] %vm491, %v624
          %s627 = sld [smem:[#allocation7 + $0xf]]
          %v628 = vld [vmem:[#allocation6] sm:$0xff]
          %v629 = vld [vmem:[#allocation6 + $0x8] sm:$0xff]
          %v630 = vld [vmem:[#allocation5 + $0x2] sm:$0xff]
          %v631 = vld [vmem:[#allocation5 + $0xa] sm:$0xff]
          %v632 = vstv %s627
          %v633 = vmul.f32 %v632, %v630
          %v634 = vmul.f32 %v632, %v631
          %v635 = vadd.f32 %v628, %v633
          %v636 = vadd.f32 %v629, %v634
          %637 = vst.msk [vmem:[#allocation6] sm:$0xff] %vm491, %v635
          %638 = vst.msk [vmem:[#allocation6 + $0x8] sm:$0xff] %vm491, %v636
          %s639 = sld [smem:[#allocation7 + $0x16]]
          %v640 = vld [vmem:[#allocation6] sm:$0xff]
          %v641 = vld [vmem:[#allocation6 + $0x8] sm:$0xff]
          %v642 = vld [vmem:[#allocation5 + $0x3] sm:$0xff]
          %v643 = vld [vmem:[#allocation5 + $0xb] sm:$0xff]
          %v644 = vstv %s639
          %v645 = vmul.f32 %v644, %v642
          %v646 = vmul.f32 %v644, %v643
          %v647 = vadd.f32 %v640, %v645
          %v648 = vadd.f32 %v641, %v646
          %649 = vst.msk [vmem:[#allocation6] sm:$0xff] %vm491, %v647
          %650 = vst.msk [vmem:[#allocation6 + $0x8] sm:$0xff] %vm491, %v648
          %s651 = sld [smem:[#allocation7 + $0x1d]]
          %v652 = vld [vmem:[#allocation6] sm:$0xff]
          %v653 = vld [vmem:[#allocation6 + $0x8] sm:$0xff]
          %v654 = vld [vmem:[#allocation5 + $0x4] sm:$0xff]
          %v655 = vld [vmem:[#allocation5 + $0xc] sm:$0xff]
          %v656 = vstv %s651
          %v657 = vmul.f32 %v656, %v654
          %v658 = vmul.f32 %v656, %v655
          %v659 = vadd.f32 %v652, %v657
          %v660 = vadd.f32 %v653, %v658
          %661 = vst.msk [vmem:[#allocation6] sm:$0xff] %vm491, %v659
          %662 = vst.msk [vmem:[#allocation6 + $0x8] sm:$0xff] %vm491, %v660
          %s663 = sld [smem:[#allocation7 + $0x24]]
          %v664 = vld [vmem:[#allocation6] sm:$0xff]
          %v665 = vld [vmem:[#allocation6 + $0x8] sm:$0xff]
          %v666 = vld [vmem:[#allocation5 + $0x5] sm:$0xff]
          %v667 = vld [vmem:[#allocation5 + $0xd] sm:$0xff]
          %v668 = vstv %s663
          %v669 = vmul.f32 %v668, %v666
          %v670 = vmul.f32 %v668, %v667
          %v671 = vadd.f32 %v664, %v669
          %v672 = vadd.f32 %v665, %v670
          %673 = vst.msk [vmem:[#allocation6] sm:$0xff] %vm491, %v671
          %674 = vst.msk [vmem:[#allocation6 + $0x8] sm:$0xff] %vm491, %v672
          %s675 = sld [smem:[#allocation7 + $0x2b]]
          %v676 = vld [vmem:[#allocation6] sm:$0xff]
          %v677 = vld [vmem:[#allocation6 + $0x8] sm:$0xff]
          %v678 = vld [vmem:[#allocation5 + $0x6] sm:$0xff]
          %v679 = vld [vmem:[#allocation5 + $0xe] sm:$0xff]
          %v680 = vstv %s675
          %v681 = vmul.f32 %v680, %v678
          %v682 = vmul.f32 %v680, %v679
          %v683 = vadd.f32 %v676, %v681
          %v684 = vadd.f32 %v677, %v682
          %685 = vst.msk [vmem:[#allocation6] sm:$0xff] %vm491, %v683
          %686 = vst.msk [vmem:[#allocation6 + $0x8] sm:$0xff] %vm491, %v684
          %v687 = vld [vmem:[#allocation4] sm:$0xff]
          %v688 = vld [vmem:[#allocation4 + $0x8] sm:$0xff]
          %v689 = vld [vmem:[#allocation4 + $0x10] sm:$0x3f]
          %693 = vrot.lane.b32.xlu0 %v687, 126
          %v694 = vpop.permute.xlu0 %693
          %695 = vrot.lane.b32.xlu0 %v688, 126
          %v696 = vpop.permute.xlu0 %695
          %697 = vrot.lane.b32.xlu0 %v689, 126
          %v698 = vpop.permute.xlu0 %697
          %702 = vst.msk [vmem:[#allocation5] sm:$0xff] %vm491, %v694
          %703 = vst.msk [vmem:[#allocation5 + $0x8] sm:$0xff] %vm491, %v696
          %704 = vst.msk [vmem:[#allocation5 + $0x10] sm:$0x3f] %vm499, %v698
          %s705 = sld [smem:[#allocation7 + $0x2]]
          %v706 = vld [vmem:[#allocation6] sm:$0xff]
          %v707 = vld [vmem:[#allocation6 + $0x8] sm:$0xff]
          %v708 = vld [vmem:[#allocation5] sm:$0xff]
          %v709 = vld [vmem:[#allocation5 + $0x8] sm:$0xff]
          %v710 = vstv %s705
          %v711 = vmul.f32 %v710, %v708
          %v712 = vmul.f32 %v710, %v709
          %v713 = vadd.f32 %v706, %v711
          %v714 = vadd.f32 %v707, %v712
          %715 = vst.msk [vmem:[#allocation6] sm:$0xff] %vm491, %v713
          %716 = vst.msk [vmem:[#allocation6 + $0x8] sm:$0xff] %vm491, %v714
          %s717 = sld [smem:[#allocation7 + $0x9]]
          %v718 = vld [vmem:[#allocation6] sm:$0xff]
          %v719 = vld [vmem:[#allocation6 + $0x8] sm:$0xff]
          %v720 = vld [vmem:[#allocation5 + $0x1] sm:$0xff]
          %v721 = vld [vmem:[#allocation5 + $0x9] sm:$0xff]
          %v722 = vstv %s717
          %v723 = vmul.f32 %v722, %v720
          %v724 = vmul.f32 %v722, %v721
          %v725 = vadd.f32 %v718, %v723
          %v726 = vadd.f32 %v719, %v724
          %727 = vst.msk [vmem:[#allocation6] sm:$0xff] %vm491, %v725
          %728 = vst.msk [vmem:[#allocation6 + $0x8] sm:$0xff] %vm491, %v726
          %s729 = sld [smem:[#allocation7 + $0x10]]
          %v730 = vld [vmem:[#allocation6] sm:$0xff]
          %v731 = vld [vmem:[#allocation6 + $0x8] sm:$0xff]
          %v732 = vld [vmem:[#allocation5 + $0x2] sm:$0xff]
          %v733 = vld [vmem:[#allocation5 + $0xa] sm:$0xff]
          %v734 = vstv %s729
          %v735 = vmul.f32 %v734, %v732
          %v736 = vmul.f32 %v734, %v733
          %v737 = vadd.f32 %v730, %v735
          %v738 = vadd.f32 %v731, %v736
          %739 = vst.msk [vmem:[#allocation6] sm:$0xff] %vm491, %v737
          %740 = vst.msk [vmem:[#allocation6 + $0x8] sm:$0xff] %vm491, %v738
          %s741 = sld [smem:[#allocation7 + $0x17]]
          %v742 = vld [vmem:[#allocation6] sm:$0xff]
          %v743 = vld [vmem:[#allocation6 + $0x8] sm:$0xff]
          %v744 = vld [vmem:[#allocation5 + $0x3] sm:$0xff]
          %v745 = vld [vmem:[#allocation5 + $0xb] sm:$0xff]
          %v746 = vstv %s741
          %v747 = vmul.f32 %v746, %v744
          %v748 = vmul.f32 %v746, %v745
          %v749 = vadd.f32 %v742, %v747
          %v750 = vadd.f32 %v743, %v748
          %751 = vst.msk [vmem:[#allocation6] sm:$0xff] %vm491, %v749
          %752 = vst.msk [vmem:[#allocation6 + $0x8] sm:$0xff] %vm491, %v750
          %s753 = sld [smem:[#allocation7 + $0x1e]]
          %v754 = vld [vmem:[#allocation6] sm:$0xff]
          %v755 = vld [vmem:[#allocation6 + $0x8] sm:$0xff]
          %v756 = vld [vmem:[#allocation5 + $0x4] sm:$0xff]
          %v757 = vld [vmem:[#allocation5 + $0xc] sm:$0xff]
          %v758 = vstv %s753
          %v759 = vmul.f32 %v758, %v756
          %v760 = vmul.f32 %v758, %v757
          %v761 = vadd.f32 %v754, %v759
          %v762 = vadd.f32 %v755, %v760
          %763 = vst.msk [vmem:[#allocation6] sm:$0xff] %vm491, %v761
          %764 = vst.msk [vmem:[#allocation6 + $0x8] sm:$0xff] %vm491, %v762
          %s765 = sld [smem:[#allocation7 + $0x25]]
          %v766 = vld [vmem:[#allocation6] sm:$0xff]
          %v767 = vld [vmem:[#allocation6 + $0x8] sm:$0xff]
          %v768 = vld [vmem:[#allocation5 + $0x5] sm:$0xff]
          %v769 = vld [vmem:[#allocation5 + $0xd] sm:$0xff]
          %v770 = vstv %s765
          %v771 = vmul.f32 %v770, %v768
          %v772 = vmul.f32 %v770, %v769
          %v773 = vadd.f32 %v766, %v771
          %v774 = vadd.f32 %v767, %v772
          %775 = vst.msk [vmem:[#allocation6] sm:$0xff] %vm491, %v773
          %776 = vst.msk [vmem:[#allocation6 + $0x8] sm:$0xff] %vm491, %v774
          %s777 = sld [smem:[#allocation7 + $0x2c]]
          %v778 = vld [vmem:[#allocation6] sm:$0xff]
          %v779 = vld [vmem:[#allocation6 + $0x8] sm:$0xff]
          %v780 = vld [vmem:[#allocation5 + $0x6] sm:$0xff]
          %v781 = vld [vmem:[#allocation5 + $0xe] sm:$0xff]
          %v782 = vstv %s777
          %v783 = vmul.f32 %v782, %v780
          %v784 = vmul.f32 %v782, %v781
          %v785 = vadd.f32 %v778, %v783
          %v786 = vadd.f32 %v779, %v784
          %787 = vst.msk [vmem:[#allocation6] sm:$0xff] %vm491, %v785
          %788 = vst.msk [vmem:[#allocation6 + $0x8] sm:$0xff] %vm491, %v786
          %v789 = vld [vmem:[#allocation4] sm:$0xff]
          %v790 = vld [vmem:[#allocation4 + $0x8] sm:$0xff]
          %v791 = vld [vmem:[#allocation4 + $0x10] sm:$0x3f]
          %795 = vrot.lane.b32.xlu0 %v789, 125
          %v796 = vpop.permute.xlu0 %795
          %797 = vrot.lane.b32.xlu0 %v790, 125
          %v798 = vpop.permute.xlu0 %797
          %799 = vrot.lane.b32.xlu0 %v791, 125
          %v800 = vpop.permute.xlu0 %799
          %804 = vst.msk [vmem:[#allocation5] sm:$0xff] %vm491, %v796
          %805 = vst.msk [vmem:[#allocation5 + $0x8] sm:$0xff] %vm491, %v798
          %806 = vst.msk [vmem:[#allocation5 + $0x10] sm:$0x3f] %vm499, %v800
          %s807 = sld [smem:[#allocation7 + $0x3]]
          %v808 = vld [vmem:[#allocation6] sm:$0xff]
          %v809 = vld [vmem:[#allocation6 + $0x8] sm:$0xff]
          %v810 = vld [vmem:[#allocation5] sm:$0xff]
          %v811 = vld [vmem:[#allocation5 + $0x8] sm:$0xff]
          %v812 = vstv %s807
          %v813 = vmul.f32 %v812, %v810
          %v814 = vmul.f32 %v812, %v811
          %v815 = vadd.f32 %v808, %v813
          %v816 = vadd.f32 %v809, %v814
          %817 = vst.msk [vmem:[#allocation6] sm:$0xff] %vm491, %v815
          %818 = vst.msk [vmem:[#allocation6 + $0x8] sm:$0xff] %vm491, %v816
          %s819 = sld [smem:[#allocation7 + $0xa]]
          %v820 = vld [vmem:[#allocation6] sm:$0xff]
          %v821 = vld [vmem:[#allocation6 + $0x8] sm:$0xff]
          %v822 = vld [vmem:[#allocation5 + $0x1] sm:$0xff]
          %v823 = vld [vmem:[#allocation5 + $0x9] sm:$0xff]
          %v824 = vstv %s819
          %v825 = vmul.f32 %v824, %v822
          %v826 = vmul.f32 %v824, %v823
          %v827 = vadd.f32 %v820, %v825
          %v828 = vadd.f32 %v821, %v826
          %829 = vst.msk [vmem:[#allocation6] sm:$0xff] %vm491, %v827
          %830 = vst.msk [vmem:[#allocation6 + $0x8] sm:$0xff] %vm491, %v828
          %s831 = sld [smem:[#allocation7 + $0x11]]
          %v832 = vld [vmem:[#allocation6] sm:$0xff]
          %v833 = vld [vmem:[#allocation6 + $0x8] sm:$0xff]
          %v834 = vld [vmem:[#allocation5 + $0x2] sm:$0xff]
          %v835 = vld [vmem:[#allocation5 + $0xa] sm:$0xff]
          %v836 = vstv %s831
          %v837 = vmul.f32 %v836, %v834
          %v838 = vmul.f32 %v836, %v835
          %v839 = vadd.f32 %v832, %v837
          %v840 = vadd.f32 %v833, %v838
          %841 = vst.msk [vmem:[#allocation6] sm:$0xff] %vm491, %v839
          %842 = vst.msk [vmem:[#allocation6 + $0x8] sm:$0xff] %vm491, %v840
          %s843 = sld [smem:[#allocation7 + $0x18]]
          %v844 = vld [vmem:[#allocation6] sm:$0xff]
          %v845 = vld [vmem:[#allocation6 + $0x8] sm:$0xff]
          %v846 = vld [vmem:[#allocation5 + $0x3] sm:$0xff]
          %v847 = vld [vmem:[#allocation5 + $0xb] sm:$0xff]
          %v848 = vstv %s843
          %v849 = vmul.f32 %v848, %v846
          %v850 = vmul.f32 %v848, %v847
          %v851 = vadd.f32 %v844, %v849
          %v852 = vadd.f32 %v845, %v850
          %853 = vst.msk [vmem:[#allocation6] sm:$0xff] %vm491, %v851
          %854 = vst.msk [vmem:[#allocation6 + $0x8] sm:$0xff] %vm491, %v852
          %s855 = sld [smem:[#allocation7 + $0x1f]]
          %v856 = vld [vmem:[#allocation6] sm:$0xff]
          %v857 = vld [vmem:[#allocation6 + $0x8] sm:$0xff]
          %v858 = vld [vmem:[#allocation5 + $0x4] sm:$0xff]
          %v859 = vld [vmem:[#allocation5 + $0xc] sm:$0xff]
          %v860 = vstv %s855
          %v861 = vmul.f32 %v860, %v858
          %v862 = vmul.f32 %v860, %v859
          %v863 = vadd.f32 %v856, %v861
          %v864 = vadd.f32 %v857, %v862
          %865 = vst.msk [vmem:[#allocation6] sm:$0xff] %vm491, %v863
          %866 = vst.msk [vmem:[#allocation6 + $0x8] sm:$0xff] %vm491, %v864
          %s867 = sld [smem:[#allocation7 + $0x26]]
          %v868 = vld [vmem:[#allocation6] sm:$0xff]
          %v869 = vld [vmem:[#allocation6 + $0x8] sm:$0xff]
          %v870 = vld [vmem:[#allocation5 + $0x5] sm:$0xff]
          %v871 = vld [vmem:[#allocation5 + $0xd] sm:$0xff]
          %v872 = vstv %s867
          %v873 = vmul.f32 %v872, %v870
          %v874 = vmul.f32 %v872, %v871
          %v875 = vadd.f32 %v868, %v873
          %v876 = vadd.f32 %v869, %v874
          %877 = vst.msk [vmem:[#allocation6] sm:$0xff] %vm491, %v875
          %878 = vst.msk [vmem:[#allocation6 + $0x8] sm:$0xff] %vm491, %v876
          %s879 = sld [smem:[#allocation7 + $0x2d]]
          %v880 = vld [vmem:[#allocation6] sm:$0xff]
          %v881 = vld [vmem:[#allocation6 + $0x8] sm:$0xff]
          %v882 = vld [vmem:[#allocation5 + $0x6] sm:$0xff]
          %v883 = vld [vmem:[#allocation5 + $0xe] sm:$0xff]
          %v884 = vstv %s879
          %v885 = vmul.f32 %v884, %v882
          %v886 = vmul.f32 %v884, %v883
          %v887 = vadd.f32 %v880, %v885
          %v888 = vadd.f32 %v881, %v886
          %889 = vst.msk [vmem:[#allocation6] sm:$0xff] %vm491, %v887
          %890 = vst.msk [vmem:[#allocation6 + $0x8] sm:$0xff] %vm491, %v888
          %v891 = vld [vmem:[#allocation4] sm:$0xff]
          %v892 = vld [vmem:[#allocation4 + $0x8] sm:$0xff]
          %v893 = vld [vmem:[#allocation4 + $0x10] sm:$0x3f]
          %897 = vrot.lane.b32.xlu0 %v891, 124
          %v898 = vpop.permute.xlu0 %897
          %899 = vrot.lane.b32.xlu0 %v892, 124
          %v900 = vpop.permute.xlu0 %899
          %901 = vrot.lane.b32.xlu0 %v893, 124
          %v902 = vpop.permute.xlu0 %901
          %906 = vst.msk [vmem:[#allocation5] sm:$0xff] %vm491, %v898
          %907 = vst.msk [vmem:[#allocation5 + $0x8] sm:$0xff] %vm491, %v900
          %908 = vst.msk [vmem:[#allocation5 + $0x10] sm:$0x3f] %vm499, %v902
          %s909 = sld [smem:[#allocation7 + $0x4]]
          %v910 = vld [vmem:[#allocation6] sm:$0xff]
          %v911 = vld [vmem:[#allocation6 + $0x8] sm:$0xff]
          %v912 = vld [vmem:[#allocation5] sm:$0xff]
          %v913 = vld [vmem:[#allocation5 + $0x8] sm:$0xff]
          %v914 = vstv %s909
          %v915 = vmul.f32 %v914, %v912
          %v916 = vmul.f32 %v914, %v913
          %v917 = vadd.f32 %v910, %v915
          %v918 = vadd.f32 %v911, %v916
          %919 = vst.msk [vmem:[#allocation6] sm:$0xff] %vm491, %v917
          %920 = vst.msk [vmem:[#allocation6 + $0x8] sm:$0xff] %vm491, %v918
          %s921 = sld [smem:[#allocation7 + $0xb]]
          %v922 = vld [vmem:[#allocation6] sm:$0xff]
          %v923 = vld [vmem:[#allocation6 + $0x8] sm:$0xff]
          %v924 = vld [vmem:[#allocation5 + $0x1] sm:$0xff]
          %v925 = vld [vmem:[#allocation5 + $0x9] sm:$0xff]
          %v926 = vstv %s921
          %v927 = vmul.f32 %v926, %v924
          %v928 = vmul.f32 %v926, %v925
          %v929 = vadd.f32 %v922, %v927
          %v930 = vadd.f32 %v923, %v928
          %931 = vst.msk [vmem:[#allocation6] sm:$0xff] %vm491, %v929
          %932 = vst.msk [vmem:[#allocation6 + $0x8] sm:$0xff] %vm491, %v930
          %s933 = sld [smem:[#allocation7 + $0x12]]
          %v934 = vld [vmem:[#allocation6] sm:$0xff]
          %v935 = vld [vmem:[#allocation6 + $0x8] sm:$0xff]
          %v936 = vld [vmem:[#allocation5 + $0x2] sm:$0xff]
          %v937 = vld [vmem:[#allocation5 + $0xa] sm:$0xff]
          %v938 = vstv %s933
          %v939 = vmul.f32 %v938, %v936
          %v940 = vmul.f32 %v938, %v937
          %v941 = vadd.f32 %v934, %v939
          %v942 = vadd.f32 %v935, %v940
          %943 = vst.msk [vmem:[#allocation6] sm:$0xff] %vm491, %v941
          %944 = vst.msk [vmem:[#allocation6 + $0x8] sm:$0xff] %vm491, %v942
          %s945 = sld [smem:[#allocation7 + $0x19]]
          %v946 = vld [vmem:[#allocation6] sm:$0xff]
          %v947 = vld [vmem:[#allocation6 + $0x8] sm:$0xff]
          %v948 = vld [vmem:[#allocation5 + $0x3] sm:$0xff]
          %v949 = vld [vmem:[#allocation5 + $0xb] sm:$0xff]
          %v950 = vstv %s945
          %v951 = vmul.f32 %v950, %v948
          %v952 = vmul.f32 %v950, %v949
          %v953 = vadd.f32 %v946, %v951
          %v954 = vadd.f32 %v947, %v952
          %955 = vst.msk [vmem:[#allocation6] sm:$0xff] %vm491, %v953
          %956 = vst.msk [vmem:[#allocation6 + $0x8] sm:$0xff] %vm491, %v954
          %s957 = sld [smem:[#allocation7 + $0x20]]
          %v958 = vld [vmem:[#allocation6] sm:$0xff]
          %v959 = vld [vmem:[#allocation6 + $0x8] sm:$0xff]
          %v960 = vld [vmem:[#allocation5 + $0x4] sm:$0xff]
          %v961 = vld [vmem:[#allocation5 + $0xc] sm:$0xff]
          %v962 = vstv %s957
          %v963 = vmul.f32 %v962, %v960
          %v964 = vmul.f32 %v962, %v961
          %v965 = vadd.f32 %v958, %v963
          %v966 = vadd.f32 %v959, %v964
          %967 = vst.msk [vmem:[#allocation6] sm:$0xff] %vm491, %v965
          %968 = vst.msk [vmem:[#allocation6 + $0x8] sm:$0xff] %vm491, %v966
          %s969 = sld [smem:[#allocation7 + $0x27]]
          %v970 = vld [vmem:[#allocation6] sm:$0xff]
          %v971 = vld [vmem:[#allocation6 + $0x8] sm:$0xff]
          %v972 = vld [vmem:[#allocation5 + $0x5] sm:$0xff]
          %v973 = vld [vmem:[#allocation5 + $0xd] sm:$0xff]
          %v974 = vstv %s969
          %v975 = vmul.f32 %v974, %v972
          %v976 = vmul.f32 %v974, %v973
          %v977 = vadd.f32 %v970, %v975
          %v978 = vadd.f32 %v971, %v976
          %979 = vst.msk [vmem:[#allocation6] sm:$0xff] %vm491, %v977
          %980 = vst.msk [vmem:[#allocation6 + $0x8] sm:$0xff] %vm491, %v978
          %s981 = sld [smem:[#allocation7 + $0x2e]]
          %v982 = vld [vmem:[#allocation6] sm:$0xff]
          %v983 = vld [vmem:[#allocation6 + $0x8] sm:$0xff]
          %v984 = vld [vmem:[#allocation5 + $0x6] sm:$0xff]
          %v985 = vld [vmem:[#allocation5 + $0xe] sm:$0xff]
          %v986 = vstv %s981
          %v987 = vmul.f32 %v986, %v984
          %v988 = vmul.f32 %v986, %v985
          %v989 = vadd.f32 %v982, %v987
          %v990 = vadd.f32 %v983, %v988
          %991 = vst.msk [vmem:[#allocation6] sm:$0xff] %vm491, %v989
          %992 = vst.msk [vmem:[#allocation6 + $0x8] sm:$0xff] %vm491, %v990
          %v993 = vld [vmem:[#allocation4] sm:$0xff]
          %v994 = vld [vmem:[#allocation4 + $0x8] sm:$0xff]
          %v995 = vld [vmem:[#allocation4 + $0x10] sm:$0x3f]
          %999 = vrot.lane.b32.xlu0 %v993, 123
          %v1000 = vpop.permute.xlu0 %999
          %1001 = vrot.lane.b32.xlu0 %v994, 123
          %v1002 = vpop.permute.xlu0 %1001
          %1003 = vrot.lane.b32.xlu0 %v995, 123
          %v1004 = vpop.permute.xlu0 %1003
          %1008 = vst.msk [vmem:[#allocation5] sm:$0xff] %vm491, %v1000
          %1009 = vst.msk [vmem:[#allocation5 + $0x8] sm:$0xff] %vm491, %v1002
          %1010 = vst.msk [vmem:[#allocation5 + $0x10] sm:$0x3f] %vm499, %v1004
          %s1011 = sld [smem:[#allocation7 + $0x5]]
          %v1012 = vld [vmem:[#allocation6] sm:$0xff]
          %v1013 = vld [vmem:[#allocation6 + $0x8] sm:$0xff]
          %v1014 = vld [vmem:[#allocation5] sm:$0xff]
          %v1015 = vld [vmem:[#allocation5 + $0x8] sm:$0xff]
          %v1016 = vstv %s1011
          %v1017 = vmul.f32 %v1016, %v1014
          %v1018 = vmul.f32 %v1016, %v1015
          %v1019 = vadd.f32 %v1012, %v1017
          %v1020 = vadd.f32 %v1013, %v1018
          %1021 = vst.msk [vmem:[#allocation6] sm:$0xff] %vm491, %v1019
          %1022 = vst.msk [vmem:[#allocation6 + $0x8] sm:$0xff] %vm491, %v1020
          %s1023 = sld [smem:[#allocation7 + $0xc]]
          %v1024 = vld [vmem:[#allocation6] sm:$0xff]
          %v1025 = vld [vmem:[#allocation6 + $0x8] sm:$0xff]
          %v1026 = vld [vmem:[#allocation5 + $0x1] sm:$0xff]
          %v1027 = vld [vmem:[#allocation5 + $0x9] sm:$0xff]
          %v1028 = vstv %s1023
          %v1029 = vmul.f32 %v1028, %v1026
          %v1030 = vmul.f32 %v1028, %v1027
          %v1031 = vadd.f32 %v1024, %v1029
          %v1032 = vadd.f32 %v1025, %v1030
          %1033 = vst.msk [vmem:[#allocation6] sm:$0xff] %vm491, %v1031
          %1034 = vst.msk [vmem:[#allocation6 + $0x8] sm:$0xff] %vm491, %v1032
          %s1035 = sld [smem:[#allocation7 + $0x13]]
          %v1036 = vld [vmem:[#allocation6] sm:$0xff]
          %v1037 = vld [vmem:[#allocation6 + $0x8] sm:$0xff]
          %v1038 = vld [vmem:[#allocation5 + $0x2] sm:$0xff]
          %v1039 = vld [vmem:[#allocation5 + $0xa] sm:$0xff]
          %v1040 = vstv %s1035
          %v1041 = vmul.f32 %v1040, %v1038
          %v1042 = vmul.f32 %v1040, %v1039
          %v1043 = vadd.f32 %v1036, %v1041
          %v1044 = vadd.f32 %v1037, %v1042
          %1045 = vst.msk [vmem:[#allocation6] sm:$0xff] %vm491, %v1043
          %1046 = vst.msk [vmem:[#allocation6 + $0x8] sm:$0xff] %vm491, %v1044
          %s1047 = sld [smem:[#allocation7 + $0x1a]]
          %v1048 = vld [vmem:[#allocation6] sm:$0xff]
          %v1049 = vld [vmem:[#allocation6 + $0x8] sm:$0xff]
          %v1050 = vld [vmem:[#allocation5 + $0x3] sm:$0xff]
          %v1051 = vld [vmem:[#allocation5 + $0xb] sm:$0xff]
          %v1052 = vstv %s1047
          %v1053 = vmul.f32 %v1052, %v1050
          %v1054 = vmul.f32 %v1052, %v1051
          %v1055 = vadd.f32 %v1048, %v1053
          %v1056 = vadd.f32 %v1049, %v1054
          %1057 = vst.msk [vmem:[#allocation6] sm:$0xff] %vm491, %v1055
          %1058 = vst.msk [vmem:[#allocation6 + $0x8] sm:$0xff] %vm491, %v1056
          %s1059 = sld [smem:[#allocation7 + $0x21]]
          %v1060 = vld [vmem:[#allocation6] sm:$0xff]
          %v1061 = vld [vmem:[#allocation6 + $0x8] sm:$0xff]
          %v1062 = vld [vmem:[#allocation5 + $0x4] sm:$0xff]
          %v1063 = vld [vmem:[#allocation5 + $0xc] sm:$0xff]
          %v1064 = vstv %s1059
          %v1065 = vmul.f32 %v1064, %v1062
          %v1066 = vmul.f32 %v1064, %v1063
          %v1067 = vadd.f32 %v1060, %v1065
          %v1068 = vadd.f32 %v1061, %v1066
          %1069 = vst.msk [vmem:[#allocation6] sm:$0xff] %vm491, %v1067
          %1070 = vst.msk [vmem:[#allocation6 + $0x8] sm:$0xff] %vm491, %v1068
          %s1071 = sld [smem:[#allocation7 + $0x28]]
          %v1072 = vld [vmem:[#allocation6] sm:$0xff]
          %v1073 = vld [vmem:[#allocation6 + $0x8] sm:$0xff]
          %v1074 = vld [vmem:[#allocation5 + $0x5] sm:$0xff]
          %v1075 = vld [vmem:[#allocation5 + $0xd] sm:$0xff]
          %v1076 = vstv %s1071
          %v1077 = vmul.f32 %v1076, %v1074
          %v1078 = vmul.f32 %v1076, %v1075
          %v1079 = vadd.f32 %v1072, %v1077
          %v1080 = vadd.f32 %v1073, %v1078
          %1081 = vst.msk [vmem:[#allocation6] sm:$0xff] %vm491, %v1079
          %1082 = vst.msk [vmem:[#allocation6 + $0x8] sm:$0xff] %vm491, %v1080
          %s1083 = sld [smem:[#allocation7 + $0x2f]]
          %v1084 = vld [vmem:[#allocation6] sm:$0xff]
          %v1085 = vld [vmem:[#allocation6 + $0x8] sm:$0xff]
          %v1086 = vld [vmem:[#allocation5 + $0x6] sm:$0xff]
          %v1087 = vld [vmem:[#allocation5 + $0xe] sm:$0xff]
          %v1088 = vstv %s1083
          %v1089 = vmul.f32 %v1088, %v1086
          %v1090 = vmul.f32 %v1088, %v1087
          %v1091 = vadd.f32 %v1084, %v1089
          %v1092 = vadd.f32 %v1085, %v1090
          %1093 = vst.msk [vmem:[#allocation6] sm:$0xff] %vm491, %v1091
          %1094 = vst.msk [vmem:[#allocation6 + $0x8] sm:$0xff] %vm491, %v1092
          %v1095 = vld [vmem:[#allocation4] sm:$0xff]
          %v1096 = vld [vmem:[#allocation4 + $0x8] sm:$0xff]
          %v1097 = vld [vmem:[#allocation4 + $0x10] sm:$0x3f]
          %1101 = vrot.lane.b32.xlu0 %v1095, 122
          %v1102 = vpop.permute.xlu0 %1101
          %1103 = vrot.lane.b32.xlu0 %v1096, 122
          %v1104 = vpop.permute.xlu0 %1103
          %1105 = vrot.lane.b32.xlu0 %v1097, 122
          %v1106 = vpop.permute.xlu0 %1105
          %1110 = vst.msk [vmem:[#allocation5] sm:$0xff] %vm491, %v1102
          %1111 = vst.msk [vmem:[#allocation5 + $0x8] sm:$0xff] %vm491, %v1104
          %1112 = vst.msk [vmem:[#allocation5 + $0x10] sm:$0x3f] %vm499, %v1106
          %s1113 = sld [smem:[#allocation7 + $0x6]]
          %v1114 = vld [vmem:[#allocation6] sm:$0xff]
          %v1115 = vld [vmem:[#allocation6 + $0x8] sm:$0xff]
          %v1116 = vld [vmem:[#allocation5] sm:$0xff]
          %v1117 = vld [vmem:[#allocation5 + $0x8] sm:$0xff]
          %v1118 = vstv %s1113
          %v1119 = vmul.f32 %v1118, %v1116
          %v1120 = vmul.f32 %v1118, %v1117
          %v1121 = vadd.f32 %v1114, %v1119
          %v1122 = vadd.f32 %v1115, %v1120
          %1123 = vst.msk [vmem:[#allocation6] sm:$0xff] %vm491, %v1121
          %1124 = vst.msk [vmem:[#allocation6 + $0x8] sm:$0xff] %vm491, %v1122
          %s1125 = sld [smem:[#allocation7 + $0xd]]
          %v1126 = vld [vmem:[#allocation6] sm:$0xff]
          %v1127 = vld [vmem:[#allocation6 + $0x8] sm:$0xff]
          %v1128 = vld [vmem:[#allocation5 + $0x1] sm:$0xff]
          %v1129 = vld [vmem:[#allocation5 + $0x9] sm:$0xff]
          %v1130 = vstv %s1125
          %v1131 = vmul.f32 %v1130, %v1128
          %v1132 = vmul.f32 %v1130, %v1129
          %v1133 = vadd.f32 %v1126, %v1131
          %v1134 = vadd.f32 %v1127, %v1132
          %1135 = vst.msk [vmem:[#allocation6] sm:$0xff] %vm491, %v1133
          %1136 = vst.msk [vmem:[#allocation6 + $0x8] sm:$0xff] %vm491, %v1134
          %s1137 = sld [smem:[#allocation7 + $0x14]]
          %v1138 = vld [vmem:[#allocation6] sm:$0xff]
          %v1139 = vld [vmem:[#allocation6 + $0x8] sm:$0xff]
          %v1140 = vld [vmem:[#allocation5 + $0x2] sm:$0xff]
          %v1141 = vld [vmem:[#allocation5 + $0xa] sm:$0xff]
          %v1142 = vstv %s1137
          %v1143 = vmul.f32 %v1142, %v1140
          %v1144 = vmul.f32 %v1142, %v1141
          %v1145 = vadd.f32 %v1138, %v1143
          %v1146 = vadd.f32 %v1139, %v1144
          %1147 = vst.msk [vmem:[#allocation6] sm:$0xff] %vm491, %v1145
          %1148 = vst.msk [vmem:[#allocation6 + $0x8] sm:$0xff] %vm491, %v1146
          %s1149 = sld [smem:[#allocation7 + $0x1b]]
          %v1150 = vld [vmem:[#allocation6] sm:$0xff]
          %v1151 = vld [vmem:[#allocation6 + $0x8] sm:$0xff]
          %v1152 = vld [vmem:[#allocation5 + $0x3] sm:$0xff]
          %v1153 = vld [vmem:[#allocation5 + $0xb] sm:$0xff]
          %v1154 = vstv %s1149
          %v1155 = vmul.f32 %v1154, %v1152
          %v1156 = vmul.f32 %v1154, %v1153
          %v1157 = vadd.f32 %v1150, %v1155
          %v1158 = vadd.f32 %v1151, %v1156
          %1159 = vst.msk [vmem:[#allocation6] sm:$0xff] %vm491, %v1157
          %1160 = vst.msk [vmem:[#allocation6 + $0x8] sm:$0xff] %vm491, %v1158
          %s1161 = sld [smem:[#allocation7 + $0x22]]
          %v1162 = vld [vmem:[#allocation6] sm:$0xff]
          %v1163 = vld [vmem:[#allocation6 + $0x8] sm:$0xff]
          %v1164 = vld [vmem:[#allocation5 + $0x4] sm:$0xff]
          %v1165 = vld [vmem:[#allocation5 + $0xc] sm:$0xff]
          %v1166 = vstv %s1161
          %v1167 = vmul.f32 %v1166, %v1164
          %v1168 = vmul.f32 %v1166, %v1165
          %v1169 = vadd.f32 %v1162, %v1167
          %v1170 = vadd.f32 %v1163, %v1168
          %1171 = vst.msk [vmem:[#allocation6] sm:$0xff] %vm491, %v1169
          %1172 = vst.msk [vmem:[#allocation6 + $0x8] sm:$0xff] %vm491, %v1170
          %s1173 = sld [smem:[#allocation7 + $0x29]]
          %v1174 = vld [vmem:[#allocation6] sm:$0xff]
          %v1175 = vld [vmem:[#allocation6 + $0x8] sm:$0xff]
          %v1176 = vld [vmem:[#allocation5 + $0x5] sm:$0xff]
          %v1177 = vld [vmem:[#allocation5 + $0xd] sm:$0xff]
          %v1178 = vstv %s1173
          %v1179 = vmul.f32 %v1178, %v1176
          %v1180 = vmul.f32 %v1178, %v1177
          %v1181 = vadd.f32 %v1174, %v1179
          %v1182 = vadd.f32 %v1175, %v1180
          %1183 = vst.msk [vmem:[#allocation6] sm:$0xff] %vm491, %v1181
          %1184 = vst.msk [vmem:[#allocation6 + $0x8] sm:$0xff] %vm491, %v1182
          %s1185 = sld [smem:[#allocation7 + $0x30]]
          %v1186 = vld [vmem:[#allocation6] sm:$0xff]
          %v1187 = vld [vmem:[#allocation6 + $0x8] sm:$0xff]
          %v1188 = vld [vmem:[#allocation5 + $0x6] sm:$0xff]
          %v1189 = vld [vmem:[#allocation5 + $0xe] sm:$0xff]
          %v1190 = vstv %s1185
          %v1191 = vmul.f32 %v1190, %v1188
          %v1192 = vmul.f32 %v1190, %v1189
          %v1193 = vadd.f32 %v1186, %v1191
          %v1194 = vadd.f32 %v1187, %v1192
          %1195 = vst.msk [vmem:[#allocation6] sm:$0xff] %vm491, %v1193
          %1196 = vst.msk [vmem:[#allocation6 + $0x8] sm:$0xff] %vm491, %v1194
          %v1197 = vld [vmem:[%s309] sm:$0xff]
          %v1198 = vld [vmem:[%s309 + $0x8] sm:$0xff]
          %v1199 = vld [vmem:[%s309 + $0x10] sm:$0x3f]
          %1200 = vst.msk [vmem:[#allocation5] sm:$0xff] %vm491, %v1197
          %1201 = vst.msk [vmem:[#allocation5 + $0x8] sm:$0xff] %vm491, %v1198
          %1202 = vst.msk [vmem:[#allocation5 + $0x10] sm:$0x3f] %vm499, %v1199
          %s1203 = sld [smem:[#allocation7 + $0x31]]
          %v1204 = vld [vmem:[#allocation6] sm:$0xff]
          %v1205 = vld [vmem:[#allocation6 + $0x8] sm:$0xff]
          %v1206 = vld [vmem:[#allocation5] sm:$0xff]
          %v1207 = vld [vmem:[#allocation5 + $0x8] sm:$0xff]
          %v1208 = vstv %s1203
          %v1209 = vmul.f32 %v1208, %v1206
          %v1210 = vmul.f32 %v1208, %v1207
          %v1211 = vadd.f32 %v1204, %v1209
          %v1212 = vadd.f32 %v1205, %v1210
          %1213 = vst.msk [vmem:[#allocation6] sm:$0xff] %vm491, %v1211
          %1214 = vst.msk [vmem:[#allocation6 + $0x8] sm:$0xff] %vm491, %v1212
          %s1215 = sld [smem:[#allocation7 + $0x38]]
          %v1216 = vld [vmem:[#allocation6] sm:$0xff]
          %v1217 = vld [vmem:[#allocation6 + $0x8] sm:$0xff]
          %v1218 = vld [vmem:[#allocation5 + $0x1] sm:$0xff]
          %v1219 = vld [vmem:[#allocation5 + $0x9] sm:$0xff]
          %v1220 = vstv %s1215
          %v1221 = vmul.f32 %v1220, %v1218
          %v1222 = vmul.f32 %v1220, %v1219
          %v1223 = vadd.f32 %v1216, %v1221
          %v1224 = vadd.f32 %v1217, %v1222
          %1225 = vst.msk [vmem:[#allocation6] sm:$0xff] %vm491, %v1223
          %1226 = vst.msk [vmem:[#allocation6 + $0x8] sm:$0xff] %vm491, %v1224
          %s1227 = sld [smem:[#allocation7 + $0x3f]]
          %v1228 = vld [vmem:[#allocation6] sm:$0xff]
          %v1229 = vld [vmem:[#allocation6 + $0x8] sm:$0xff]
          %v1230 = vld [vmem:[#allocation5 + $0x2] sm:$0xff]
          %v1231 = vld [vmem:[#allocation5 + $0xa] sm:$0xff]
          %v1232 = vstv %s1227
          %v1233 = vmul.f32 %v1232, %v1230
          %v1234 = vmul.f32 %v1232, %v1231
          %v1235 = vadd.f32 %v1228, %v1233
          %v1236 = vadd.f32 %v1229, %v1234
          %1237 = vst.msk [vmem:[#allocation6] sm:$0xff] %vm491, %v1235
          %1238 = vst.msk [vmem:[#allocation6 + $0x8] sm:$0xff] %vm491, %v1236
          %s1239 = sld [smem:[#allocation7 + $0x46]]
          %v1240 = vld [vmem:[#allocation6] sm:$0xff]
          %v1241 = vld [vmem:[#allocation6 + $0x8] sm:$0xff]
          %v1242 = vld [vmem:[#allocation5 + $0x3] sm:$0xff]
          %v1243 = vld [vmem:[#allocation5 + $0xb] sm:$0xff]
          %v1244 = vstv %s1239
          %v1245 = vmul.f32 %v1244, %v1242
          %v1246 = vmul.f32 %v1244, %v1243
          %v1247 = vadd.f32 %v1240, %v1245
          %v1248 = vadd.f32 %v1241, %v1246
          %1249 = vst.msk [vmem:[#allocation6] sm:$0xff] %vm491, %v1247
          %1250 = vst.msk [vmem:[#allocation6 + $0x8] sm:$0xff] %vm491, %v1248
          %s1251 = sld [smem:[#allocation7 + $0x4d]]
          %v1252 = vld [vmem:[#allocation6] sm:$0xff]
          %v1253 = vld [vmem:[#allocation6 + $0x8] sm:$0xff]
          %v1254 = vld [vmem:[#allocation5 + $0x4] sm:$0xff]
          %v1255 = vld [vmem:[#allocation5 + $0xc] sm:$0xff]
          %v1256 = vstv %s1251
          %v1257 = vmul.f32 %v1256, %v1254
          %v1258 = vmul.f32 %v1256, %v1255
          %v1259 = vadd.f32 %v1252, %v1257
          %v1260 = vadd.f32 %v1253, %v1258
          %1261 = vst.msk [vmem:[#allocation6] sm:$0xff] %vm491, %v1259
          %1262 = vst.msk [vmem:[#allocation6 + $0x8] sm:$0xff] %vm491, %v1260
          %s1263 = sld [smem:[#allocation7 + $0x54]]
          %v1264 = vld [vmem:[#allocation6] sm:$0xff]
          %v1265 = vld [vmem:[#allocation6 + $0x8] sm:$0xff]
          %v1266 = vld [vmem:[#allocation5 + $0x5] sm:$0xff]
          %v1267 = vld [vmem:[#allocation5 + $0xd] sm:$0xff]
          %v1268 = vstv %s1263
          %v1269 = vmul.f32 %v1268, %v1266
          %v1270 = vmul.f32 %v1268, %v1267
          %v1271 = vadd.f32 %v1264, %v1269
          %v1272 = vadd.f32 %v1265, %v1270
          %1273 = vst.msk [vmem:[#allocation6] sm:$0xff] %vm491, %v1271
          %1274 = vst.msk [vmem:[#allocation6 + $0x8] sm:$0xff] %vm491, %v1272
          %s1275 = sld [smem:[#allocation7 + $0x5b]]
          %v1276 = vld [vmem:[#allocation6] sm:$0xff]
          %v1277 = vld [vmem:[#allocation6 + $0x8] sm:$0xff]
          %v1278 = vld [vmem:[#allocation5 + $0x6] sm:$0xff]
          %v1279 = vld [vmem:[#allocation5 + $0xe] sm:$0xff]
          %v1280 = vstv %s1275
          %v1281 = vmul.f32 %v1280, %v1278
          %v1282 = vmul.f32 %v1280, %v1279
          %v1283 = vadd.f32 %v1276, %v1281
          %v1284 = vadd.f32 %v1277, %v1282
          %1285 = vst.msk [vmem:[#allocation6] sm:$0xff] %vm491, %v1283
          %1286 = vst.msk [vmem:[#allocation6 + $0x8] sm:$0xff] %vm491, %v1284
          %v1287 = vld [vmem:[%s309] sm:$0xff]
          %v1288 = vld [vmem:[%s309 + $0x8] sm:$0xff]
          %v1289 = vld [vmem:[%s309 + $0x10] sm:$0x3f]
          %1293 = vrot.lane.b32.xlu0 %v1287, 127
          %v1294 = vpop.permute.xlu0 %1293
          %1295 = vrot.lane.b32.xlu0 %v1288, 127
          %v1296 = vpop.permute.xlu0 %1295
          %1297 = vrot.lane.b32.xlu0 %v1289, 127
          %v1298 = vpop.permute.xlu0 %1297
          %1302 = vst.msk [vmem:[#allocation5] sm:$0xff] %vm491, %v1294
          %1303 = vst.msk [vmem:[#allocation5 + $0x8] sm:$0xff] %vm491, %v1296
          %1304 = vst.msk [vmem:[#allocation5 + $0x10] sm:$0x3f] %vm499, %v1298
          %s1305 = sld [smem:[#allocation7 + $0x32]]
          %v1306 = vld [vmem:[#allocation6] sm:$0xff]
          %v1307 = vld [vmem:[#allocation6 + $0x8] sm:$0xff]
          %v1308 = vld [vmem:[#allocation5] sm:$0xff]
          %v1309 = vld [vmem:[#allocation5 + $0x8] sm:$0xff]
          %v1310 = vstv %s1305
          %v1311 = vmul.f32 %v1310, %v1308
          %v1312 = vmul.f32 %v1310, %v1309
          %v1313 = vadd.f32 %v1306, %v1311
          %v1314 = vadd.f32 %v1307, %v1312
          %1315 = vst.msk [vmem:[#allocation6] sm:$0xff] %vm491, %v1313
          %1316 = vst.msk [vmem:[#allocation6 + $0x8] sm:$0xff] %vm491, %v1314
          %s1317 = sld [smem:[#allocation7 + $0x39]]
          %v1318 = vld [vmem:[#allocation6] sm:$0xff]
          %v1319 = vld [vmem:[#allocation6 + $0x8] sm:$0xff]
          %v1320 = vld [vmem:[#allocation5 + $0x1] sm:$0xff]
          %v1321 = vld [vmem:[#allocation5 + $0x9] sm:$0xff]
          %v1322 = vstv %s1317
          %v1323 = vmul.f32 %v1322, %v1320
          %v1324 = vmul.f32 %v1322, %v1321
          %v1325 = vadd.f32 %v1318, %v1323
          %v1326 = vadd.f32 %v1319, %v1324
          %1327 = vst.msk [vmem:[#allocation6] sm:$0xff] %vm491, %v1325
          %1328 = vst.msk [vmem:[#allocation6 + $0x8] sm:$0xff] %vm491, %v1326
          %s1329 = sld [smem:[#allocation7 + $0x40]]
          %v1330 = vld [vmem:[#allocation6] sm:$0xff]
          %v1331 = vld [vmem:[#allocation6 + $0x8] sm:$0xff]
          %v1332 = vld [vmem:[#allocation5 + $0x2] sm:$0xff]
          %v1333 = vld [vmem:[#allocation5 + $0xa] sm:$0xff]
          %v1334 = vstv %s1329
          %v1335 = vmul.f32 %v1334, %v1332
          %v1336 = vmul.f32 %v1334, %v1333
          %v1337 = vadd.f32 %v1330, %v1335
          %v1338 = vadd.f32 %v1331, %v1336
          %1339 = vst.msk [vmem:[#allocation6] sm:$0xff] %vm491, %v1337
          %1340 = vst.msk [vmem:[#allocation6 + $0x8] sm:$0xff] %vm491, %v1338
          %s1341 = sld [smem:[#allocation7 + $0x47]]
          %v1342 = vld [vmem:[#allocation6] sm:$0xff]
          %v1343 = vld [vmem:[#allocation6 + $0x8] sm:$0xff]
          %v1344 = vld [vmem:[#allocation5 + $0x3] sm:$0xff]
          %v1345 = vld [vmem:[#allocation5 + $0xb] sm:$0xff]
          %v1346 = vstv %s1341
          %v1347 = vmul.f32 %v1346, %v1344
          %v1348 = vmul.f32 %v1346, %v1345
          %v1349 = vadd.f32 %v1342, %v1347
          %v1350 = vadd.f32 %v1343, %v1348
          %1351 = vst.msk [vmem:[#allocation6] sm:$0xff] %vm491, %v1349
          %1352 = vst.msk [vmem:[#allocation6 + $0x8] sm:$0xff] %vm491, %v1350
          %s1353 = sld [smem:[#allocation7 + $0x4e]]
          %v1354 = vld [vmem:[#allocation6] sm:$0xff]
          %v1355 = vld [vmem:[#allocation6 + $0x8] sm:$0xff]
          %v1356 = vld [vmem:[#allocation5 + $0x4] sm:$0xff]
          %v1357 = vld [vmem:[#allocation5 + $0xc] sm:$0xff]
          %v1358 = vstv %s1353
          %v1359 = vmul.f32 %v1358, %v1356
          %v1360 = vmul.f32 %v1358, %v1357
          %v1361 = vadd.f32 %v1354, %v1359
          %v1362 = vadd.f32 %v1355, %v1360
          %1363 = vst.msk [vmem:[#allocation6] sm:$0xff] %vm491, %v1361
          %1364 = vst.msk [vmem:[#allocation6 + $0x8] sm:$0xff] %vm491, %v1362
          %s1365 = sld [smem:[#allocation7 + $0x55]]
          %v1366 = vld [vmem:[#allocation6] sm:$0xff]
          %v1367 = vld [vmem:[#allocation6 + $0x8] sm:$0xff]
          %v1368 = vld [vmem:[#allocation5 + $0x5] sm:$0xff]
          %v1369 = vld [vmem:[#allocation5 + $0xd] sm:$0xff]
          %v1370 = vstv %s1365
          %v1371 = vmul.f32 %v1370, %v1368
          %v1372 = vmul.f32 %v1370, %v1369
          %v1373 = vadd.f32 %v1366, %v1371
          %v1374 = vadd.f32 %v1367, %v1372
          %1375 = vst.msk [vmem:[#allocation6] sm:$0xff] %vm491, %v1373
          %1376 = vst.msk [vmem:[#allocation6 + $0x8] sm:$0xff] %vm491, %v1374
          %s1377 = sld [smem:[#allocation7 + $0x5c]]
          %v1378 = vld [vmem:[#allocation6] sm:$0xff]
          %v1379 = vld [vmem:[#allocation6 + $0x8] sm:$0xff]
          %v1380 = vld [vmem:[#allocation5 + $0x6] sm:$0xff]
          %v1381 = vld [vmem:[#allocation5 + $0xe] sm:$0xff]
          %v1382 = vstv %s1377
          %v1383 = vmul.f32 %v1382, %v1380
          %v1384 = vmul.f32 %v1382, %v1381
          %v1385 = vadd.f32 %v1378, %v1383
          %v1386 = vadd.f32 %v1379, %v1384
          %1387 = vst.msk [vmem:[#allocation6] sm:$0xff] %vm491, %v1385
          %1388 = vst.msk [vmem:[#allocation6 + $0x8] sm:$0xff] %vm491, %v1386
          %v1389 = vld [vmem:[%s309] sm:$0xff]
          %v1390 = vld [vmem:[%s309 + $0x8] sm:$0xff]
          %v1391 = vld [vmem:[%s309 + $0x10] sm:$0x3f]
          %1395 = vrot.lane.b32.xlu0 %v1389, 126
          %v1396 = vpop.permute.xlu0 %1395
          %1397 = vrot.lane.b32.xlu0 %v1390, 126
          %v1398 = vpop.permute.xlu0 %1397
          %1399 = vrot.lane.b32.xlu0 %v1391, 126
          %v1400 = vpop.permute.xlu0 %1399
          %1404 = vst.msk [vmem:[#allocation5] sm:$0xff] %vm491, %v1396
          %1405 = vst.msk [vmem:[#allocation5 + $0x8] sm:$0xff] %vm491, %v1398
          %1406 = vst.msk [vmem:[#allocation5 + $0x10] sm:$0x3f] %vm499, %v1400
          %s1407 = sld [smem:[#allocation7 + $0x33]]
          %v1408 = vld [vmem:[#allocation6] sm:$0xff]
          %v1409 = vld [vmem:[#allocation6 + $0x8] sm:$0xff]
          %v1410 = vld [vmem:[#allocation5] sm:$0xff]
          %v1411 = vld [vmem:[#allocation5 + $0x8] sm:$0xff]
          %v1412 = vstv %s1407
          %v1413 = vmul.f32 %v1412, %v1410
          %v1414 = vmul.f32 %v1412, %v1411
          %v1415 = vadd.f32 %v1408, %v1413
          %v1416 = vadd.f32 %v1409, %v1414
          %1417 = vst.msk [vmem:[#allocation6] sm:$0xff] %vm491, %v1415
          %1418 = vst.msk [vmem:[#allocation6 + $0x8] sm:$0xff] %vm491, %v1416
          %s1419 = sld [smem:[#allocation7 + $0x3a]]
          %v1420 = vld [vmem:[#allocation6] sm:$0xff]
          %v1421 = vld [vmem:[#allocation6 + $0x8] sm:$0xff]
          %v1422 = vld [vmem:[#allocation5 + $0x1] sm:$0xff]
          %v1423 = vld [vmem:[#allocation5 + $0x9] sm:$0xff]
          %v1424 = vstv %s1419
          %v1425 = vmul.f32 %v1424, %v1422
          %v1426 = vmul.f32 %v1424, %v1423
          %v1427 = vadd.f32 %v1420, %v1425
          %v1428 = vadd.f32 %v1421, %v1426
          %1429 = vst.msk [vmem:[#allocation6] sm:$0xff] %vm491, %v1427
          %1430 = vst.msk [vmem:[#allocation6 + $0x8] sm:$0xff] %vm491, %v1428
          %s1431 = sld [smem:[#allocation7 + $0x41]]
          %v1432 = vld [vmem:[#allocation6] sm:$0xff]
          %v1433 = vld [vmem:[#allocation6 + $0x8] sm:$0xff]
          %v1434 = vld [vmem:[#allocation5 + $0x2] sm:$0xff]
          %v1435 = vld [vmem:[#allocation5 + $0xa] sm:$0xff]
          %v1436 = vstv %s1431
          %v1437 = vmul.f32 %v1436, %v1434
          %v1438 = vmul.f32 %v1436, %v1435
          %v1439 = vadd.f32 %v1432, %v1437
          %v1440 = vadd.f32 %v1433, %v1438
          %1441 = vst.msk [vmem:[#allocation6] sm:$0xff] %vm491, %v1439
          %1442 = vst.msk [vmem:[#allocation6 + $0x8] sm:$0xff] %vm491, %v1440
          %s1443 = sld [smem:[#allocation7 + $0x48]]
          %v1444 = vld [vmem:[#allocation6] sm:$0xff]
          %v1445 = vld [vmem:[#allocation6 + $0x8] sm:$0xff]
          %v1446 = vld [vmem:[#allocation5 + $0x3] sm:$0xff]
          %v1447 = vld [vmem:[#allocation5 + $0xb] sm:$0xff]
          %v1448 = vstv %s1443
          %v1449 = vmul.f32 %v1448, %v1446
          %v1450 = vmul.f32 %v1448, %v1447
          %v1451 = vadd.f32 %v1444, %v1449
          %v1452 = vadd.f32 %v1445, %v1450
          %1453 = vst.msk [vmem:[#allocation6] sm:$0xff] %vm491, %v1451
          %1454 = vst.msk [vmem:[#allocation6 + $0x8] sm:$0xff] %vm491, %v1452
          %s1455 = sld [smem:[#allocation7 + $0x4f]]
          %v1456 = vld [vmem:[#allocation6] sm:$0xff]
          %v1457 = vld [vmem:[#allocation6 + $0x8] sm:$0xff]
          %v1458 = vld [vmem:[#allocation5 + $0x4] sm:$0xff]
          %v1459 = vld [vmem:[#allocation5 + $0xc] sm:$0xff]
          %v1460 = vstv %s1455
          %v1461 = vmul.f32 %v1460, %v1458
          %v1462 = vmul.f32 %v1460, %v1459
          %v1463 = vadd.f32 %v1456, %v1461
          %v1464 = vadd.f32 %v1457, %v1462
          %1465 = vst.msk [vmem:[#allocation6] sm:$0xff] %vm491, %v1463
          %1466 = vst.msk [vmem:[#allocation6 + $0x8] sm:$0xff] %vm491, %v1464
          %s1467 = sld [smem:[#allocation7 + $0x56]]
          %v1468 = vld [vmem:[#allocation6] sm:$0xff]
          %v1469 = vld [vmem:[#allocation6 + $0x8] sm:$0xff]
          %v1470 = vld [vmem:[#allocation5 + $0x5] sm:$0xff]
          %v1471 = vld [vmem:[#allocation5 + $0xd] sm:$0xff]
          %v1472 = vstv %s1467
          %v1473 = vmul.f32 %v1472, %v1470
          %v1474 = vmul.f32 %v1472, %v1471
          %v1475 = vadd.f32 %v1468, %v1473
          %v1476 = vadd.f32 %v1469, %v1474
          %1477 = vst.msk [vmem:[#allocation6] sm:$0xff] %vm491, %v1475
          %1478 = vst.msk [vmem:[#allocation6 + $0x8] sm:$0xff] %vm491, %v1476
          %s1479 = sld [smem:[#allocation7 + $0x5d]]
          %v1480 = vld [vmem:[#allocation6] sm:$0xff]
          %v1481 = vld [vmem:[#allocation6 + $0x8] sm:$0xff]
          %v1482 = vld [vmem:[#allocation5 + $0x6] sm:$0xff]
          %v1483 = vld [vmem:[#allocation5 + $0xe] sm:$0xff]
          %v1484 = vstv %s1479
          %v1485 = vmul.f32 %v1484, %v1482
          %v1486 = vmul.f32 %v1484, %v1483
          %v1487 = vadd.f32 %v1480, %v1485
          %v1488 = vadd.f32 %v1481, %v1486
          %1489 = vst.msk [vmem:[#allocation6] sm:$0xff] %vm491, %v1487
          %1490 = vst.msk [vmem:[#allocation6 + $0x8] sm:$0xff] %vm491, %v1488
          %v1491 = vld [vmem:[%s309] sm:$0xff]
          %v1492 = vld [vmem:[%s309 + $0x8] sm:$0xff]
          %v1493 = vld [vmem:[%s309 + $0x10] sm:$0x3f]
          %1497 = vrot.lane.b32.xlu0 %v1491, 125
          %v1498 = vpop.permute.xlu0 %1497
          %1499 = vrot.lane.b32.xlu0 %v1492, 125
          %v1500 = vpop.permute.xlu0 %1499
          %1501 = vrot.lane.b32.xlu0 %v1493, 125
          %v1502 = vpop.permute.xlu0 %1501
          %1506 = vst.msk [vmem:[#allocation5] sm:$0xff] %vm491, %v1498
          %1507 = vst.msk [vmem:[#allocation5 + $0x8] sm:$0xff] %vm491, %v1500
          %1508 = vst.msk [vmem:[#allocation5 + $0x10] sm:$0x3f] %vm499, %v1502
          %s1509 = sld [smem:[#allocation7 + $0x34]]
          %v1510 = vld [vmem:[#allocation6] sm:$0xff]
          %v1511 = vld [vmem:[#allocation6 + $0x8] sm:$0xff]
          %v1512 = vld [vmem:[#allocation5] sm:$0xff]
          %v1513 = vld [vmem:[#allocation5 + $0x8] sm:$0xff]
          %v1514 = vstv %s1509
          %v1515 = vmul.f32 %v1514, %v1512
          %v1516 = vmul.f32 %v1514, %v1513
          %v1517 = vadd.f32 %v1510, %v1515
          %v1518 = vadd.f32 %v1511, %v1516
          %1519 = vst.msk [vmem:[#allocation6] sm:$0xff] %vm491, %v1517
          %1520 = vst.msk [vmem:[#allocation6 + $0x8] sm:$0xff] %vm491, %v1518
          %s1521 = sld [smem:[#allocation7 + $0x3b]]
          %v1522 = vld [vmem:[#allocation6] sm:$0xff]
          %v1523 = vld [vmem:[#allocation6 + $0x8] sm:$0xff]
          %v1524 = vld [vmem:[#allocation5 + $0x1] sm:$0xff]
          %v1525 = vld [vmem:[#allocation5 + $0x9] sm:$0xff]
          %v1526 = vstv %s1521
          %v1527 = vmul.f32 %v1526, %v1524
          %v1528 = vmul.f32 %v1526, %v1525
          %v1529 = vadd.f32 %v1522, %v1527
          %v1530 = vadd.f32 %v1523, %v1528
          %1531 = vst.msk [vmem:[#allocation6] sm:$0xff] %vm491, %v1529
          %1532 = vst.msk [vmem:[#allocation6 + $0x8] sm:$0xff] %vm491, %v1530
          %s1533 = sld [smem:[#allocation7 + $0x42]]
          %v1534 = vld [vmem:[#allocation6] sm:$0xff]
          %v1535 = vld [vmem:[#allocation6 + $0x8] sm:$0xff]
          %v1536 = vld [vmem:[#allocation5 + $0x2] sm:$0xff]
          %v1537 = vld [vmem:[#allocation5 + $0xa] sm:$0xff]
          %v1538 = vstv %s1533
          %v1539 = vmul.f32 %v1538, %v1536
          %v1540 = vmul.f32 %v1538, %v1537
          %v1541 = vadd.f32 %v1534, %v1539
          %v1542 = vadd.f32 %v1535, %v1540
          %1543 = vst.msk [vmem:[#allocation6] sm:$0xff] %vm491, %v1541
          %1544 = vst.msk [vmem:[#allocation6 + $0x8] sm:$0xff] %vm491, %v1542
          %s1545 = sld [smem:[#allocation7 + $0x49]]
          %v1546 = vld [vmem:[#allocation6] sm:$0xff]
          %v1547 = vld [vmem:[#allocation6 + $0x8] sm:$0xff]
          %v1548 = vld [vmem:[#allocation5 + $0x3] sm:$0xff]
          %v1549 = vld [vmem:[#allocation5 + $0xb] sm:$0xff]
          %v1550 = vstv %s1545
          %v1551 = vmul.f32 %v1550, %v1548
          %v1552 = vmul.f32 %v1550, %v1549
          %v1553 = vadd.f32 %v1546, %v1551
          %v1554 = vadd.f32 %v1547, %v1552
          %1555 = vst.msk [vmem:[#allocation6] sm:$0xff] %vm491, %v1553
          %1556 = vst.msk [vmem:[#allocation6 + $0x8] sm:$0xff] %vm491, %v1554
          %s1557 = sld [smem:[#allocation7 + $0x50]]
          %v1558 = vld [vmem:[#allocation6] sm:$0xff]
          %v1559 = vld [vmem:[#allocation6 + $0x8] sm:$0xff]
          %v1560 = vld [vmem:[#allocation5 + $0x4] sm:$0xff]
          %v1561 = vld [vmem:[#allocation5 + $0xc] sm:$0xff]
          %v1562 = vstv %s1557
          %v1563 = vmul.f32 %v1562, %v1560
          %v1564 = vmul.f32 %v1562, %v1561
          %v1565 = vadd.f32 %v1558, %v1563
          %v1566 = vadd.f32 %v1559, %v1564
          %1567 = vst.msk [vmem:[#allocation6] sm:$0xff] %vm491, %v1565
          %1568 = vst.msk [vmem:[#allocation6 + $0x8] sm:$0xff] %vm491, %v1566
          %s1569 = sld [smem:[#allocation7 + $0x57]]
          %v1570 = vld [vmem:[#allocation6] sm:$0xff]
          %v1571 = vld [vmem:[#allocation6 + $0x8] sm:$0xff]
          %v1572 = vld [vmem:[#allocation5 + $0x5] sm:$0xff]
          %v1573 = vld [vmem:[#allocation5 + $0xd] sm:$0xff]
          %v1574 = vstv %s1569
          %v1575 = vmul.f32 %v1574, %v1572
          %v1576 = vmul.f32 %v1574, %v1573
          %v1577 = vadd.f32 %v1570, %v1575
          %v1578 = vadd.f32 %v1571, %v1576
          %1579 = vst.msk [vmem:[#allocation6] sm:$0xff] %vm491, %v1577
          %1580 = vst.msk [vmem:[#allocation6 + $0x8] sm:$0xff] %vm491, %v1578
          %s1581 = sld [smem:[#allocation7 + $0x5e]]
          %v1582 = vld [vmem:[#allocation6] sm:$0xff]
          %v1583 = vld [vmem:[#allocation6 + $0x8] sm:$0xff]
          %v1584 = vld [vmem:[#allocation5 + $0x6] sm:$0xff]
          %v1585 = vld [vmem:[#allocation5 + $0xe] sm:$0xff]
          %v1586 = vstv %s1581
          %v1587 = vmul.f32 %v1586, %v1584
          %v1588 = vmul.f32 %v1586, %v1585
          %v1589 = vadd.f32 %v1582, %v1587
          %v1590 = vadd.f32 %v1583, %v1588
          %1591 = vst.msk [vmem:[#allocation6] sm:$0xff] %vm491, %v1589
          %1592 = vst.msk [vmem:[#allocation6 + $0x8] sm:$0xff] %vm491, %v1590
          %v1593 = vld [vmem:[%s309] sm:$0xff]
          %v1594 = vld [vmem:[%s309 + $0x8] sm:$0xff]
          %v1595 = vld [vmem:[%s309 + $0x10] sm:$0x3f]
          %1599 = vrot.lane.b32.xlu0 %v1593, 124
          %v1600 = vpop.permute.xlu0 %1599
          %1601 = vrot.lane.b32.xlu0 %v1594, 124
          %v1602 = vpop.permute.xlu0 %1601
          %1603 = vrot.lane.b32.xlu0 %v1595, 124
          %v1604 = vpop.permute.xlu0 %1603
          %1608 = vst.msk [vmem:[#allocation5] sm:$0xff] %vm491, %v1600
          %1609 = vst.msk [vmem:[#allocation5 + $0x8] sm:$0xff] %vm491, %v1602
          %1610 = vst.msk [vmem:[#allocation5 + $0x10] sm:$0x3f] %vm499, %v1604
          %s1611 = sld [smem:[#allocation7 + $0x35]]
          %v1612 = vld [vmem:[#allocation6] sm:$0xff]
          %v1613 = vld [vmem:[#allocation6 + $0x8] sm:$0xff]
          %v1614 = vld [vmem:[#allocation5] sm:$0xff]
          %v1615 = vld [vmem:[#allocation5 + $0x8] sm:$0xff]
          %v1616 = vstv %s1611
          %v1617 = vmul.f32 %v1616, %v1614
          %v1618 = vmul.f32 %v1616, %v1615
          %v1619 = vadd.f32 %v1612, %v1617
          %v1620 = vadd.f32 %v1613, %v1618
          %1621 = vst.msk [vmem:[#allocation6] sm:$0xff] %vm491, %v1619
          %1622 = vst.msk [vmem:[#allocation6 + $0x8] sm:$0xff] %vm491, %v1620
          %s1623 = sld [smem:[#allocation7 + $0x3c]]
          %v1624 = vld [vmem:[#allocation6] sm:$0xff]
          %v1625 = vld [vmem:[#allocation6 + $0x8] sm:$0xff]
          %v1626 = vld [vmem:[#allocation5 + $0x1] sm:$0xff]
          %v1627 = vld [vmem:[#allocation5 + $0x9] sm:$0xff]
          %v1628 = vstv %s1623
          %v1629 = vmul.f32 %v1628, %v1626
          %v1630 = vmul.f32 %v1628, %v1627
          %v1631 = vadd.f32 %v1624, %v1629
          %v1632 = vadd.f32 %v1625, %v1630
          %1633 = vst.msk [vmem:[#allocation6] sm:$0xff] %vm491, %v1631
          %1634 = vst.msk [vmem:[#allocation6 + $0x8] sm:$0xff] %vm491, %v1632
          %s1635 = sld [smem:[#allocation7 + $0x43]]
          %v1636 = vld [vmem:[#allocation6] sm:$0xff]
          %v1637 = vld [vmem:[#allocation6 + $0x8] sm:$0xff]
          %v1638 = vld [vmem:[#allocation5 + $0x2] sm:$0xff]
          %v1639 = vld [vmem:[#allocation5 + $0xa] sm:$0xff]
          %v1640 = vstv %s1635
          %v1641 = vmul.f32 %v1640, %v1638
          %v1642 = vmul.f32 %v1640, %v1639
          %v1643 = vadd.f32 %v1636, %v1641
          %v1644 = vadd.f32 %v1637, %v1642
          %1645 = vst.msk [vmem:[#allocation6] sm:$0xff] %vm491, %v1643
          %1646 = vst.msk [vmem:[#allocation6 + $0x8] sm:$0xff] %vm491, %v1644
          %s1647 = sld [smem:[#allocation7 + $0x4a]]
          %v1648 = vld [vmem:[#allocation6] sm:$0xff]
          %v1649 = vld [vmem:[#allocation6 + $0x8] sm:$0xff]
          %v1650 = vld [vmem:[#allocation5 + $0x3] sm:$0xff]
          %v1651 = vld [vmem:[#allocation5 + $0xb] sm:$0xff]
          %v1652 = vstv %s1647
          %v1653 = vmul.f32 %v1652, %v1650
          %v1654 = vmul.f32 %v1652, %v1651
          %v1655 = vadd.f32 %v1648, %v1653
          %v1656 = vadd.f32 %v1649, %v1654
          %1657 = vst.msk [vmem:[#allocation6] sm:$0xff] %vm491, %v1655
          %1658 = vst.msk [vmem:[#allocation6 + $0x8] sm:$0xff] %vm491, %v1656
          %s1659 = sld [smem:[#allocation7 + $0x51]]
          %v1660 = vld [vmem:[#allocation6] sm:$0xff]
          %v1661 = vld [vmem:[#allocation6 + $0x8] sm:$0xff]
          %v1662 = vld [vmem:[#allocation5 + $0x4] sm:$0xff]
          %v1663 = vld [vmem:[#allocation5 + $0xc] sm:$0xff]
          %v1664 = vstv %s1659
          %v1665 = vmul.f32 %v1664, %v1662
          %v1666 = vmul.f32 %v1664, %v1663
          %v1667 = vadd.f32 %v1660, %v1665
          %v1668 = vadd.f32 %v1661, %v1666
          %1669 = vst.msk [vmem:[#allocation6] sm:$0xff] %vm491, %v1667
          %1670 = vst.msk [vmem:[#allocation6 + $0x8] sm:$0xff] %vm491, %v1668
          %s1671 = sld [smem:[#allocation7 + $0x58]]
          %v1672 = vld [vmem:[#allocation6] sm:$0xff]
          %v1673 = vld [vmem:[#allocation6 + $0x8] sm:$0xff]
          %v1674 = vld [vmem:[#allocation5 + $0x5] sm:$0xff]
          %v1675 = vld [vmem:[#allocation5 + $0xd] sm:$0xff]
          %v1676 = vstv %s1671
          %v1677 = vmul.f32 %v1676, %v1674
          %v1678 = vmul.f32 %v1676, %v1675
          %v1679 = vadd.f32 %v1672, %v1677
          %v1680 = vadd.f32 %v1673, %v1678
          %1681 = vst.msk [vmem:[#allocation6] sm:$0xff] %vm491, %v1679
          %1682 = vst.msk [vmem:[#allocation6 + $0x8] sm:$0xff] %vm491, %v1680
          %s1683 = sld [smem:[#allocation7 + $0x5f]]
          %v1684 = vld [vmem:[#allocation6] sm:$0xff]
          %v1685 = vld [vmem:[#allocation6 + $0x8] sm:$0xff]
          %v1686 = vld [vmem:[#allocation5 + $0x6] sm:$0xff]
          %v1687 = vld [vmem:[#allocation5 + $0xe] sm:$0xff]
          %v1688 = vstv %s1683
          %v1689 = vmul.f32 %v1688, %v1686
          %v1690 = vmul.f32 %v1688, %v1687
          %v1691 = vadd.f32 %v1684, %v1689
          %v1692 = vadd.f32 %v1685, %v1690
          %1693 = vst.msk [vmem:[#allocation6] sm:$0xff] %vm491, %v1691
          %1694 = vst.msk [vmem:[#allocation6 + $0x8] sm:$0xff] %vm491, %v1692
          %v1695 = vld [vmem:[%s309] sm:$0xff]
          %v1696 = vld [vmem:[%s309 + $0x8] sm:$0xff]
          %v1697 = vld [vmem:[%s309 + $0x10] sm:$0x3f]
          %1701 = vrot.lane.b32.xlu0 %v1695, 123
          %v1702 = vpop.permute.xlu0 %1701
          %1703 = vrot.lane.b32.xlu0 %v1696, 123
          %v1704 = vpop.permute.xlu0 %1703
          %1705 = vrot.lane.b32.xlu0 %v1697, 123
          %v1706 = vpop.permute.xlu0 %1705
          %1710 = vst.msk [vmem:[#allocation5] sm:$0xff] %vm491, %v1702
          %1711 = vst.msk [vmem:[#allocation5 + $0x8] sm:$0xff] %vm491, %v1704
          %1712 = vst.msk [vmem:[#allocation5 + $0x10] sm:$0x3f] %vm499, %v1706
          %s1713 = sld [smem:[#allocation7 + $0x36]]
          %v1714 = vld [vmem:[#allocation6] sm:$0xff]
          %v1715 = vld [vmem:[#allocation6 + $0x8] sm:$0xff]
          %v1716 = vld [vmem:[#allocation5] sm:$0xff]
          %v1717 = vld [vmem:[#allocation5 + $0x8] sm:$0xff]
          %v1718 = vstv %s1713
          %v1719 = vmul.f32 %v1718, %v1716
          %v1720 = vmul.f32 %v1718, %v1717
          %v1721 = vadd.f32 %v1714, %v1719
          %v1722 = vadd.f32 %v1715, %v1720
          %1723 = vst.msk [vmem:[#allocation6] sm:$0xff] %vm491, %v1721
          %1724 = vst.msk [vmem:[#allocation6 + $0x8] sm:$0xff] %vm491, %v1722
          %s1725 = sld [smem:[#allocation7 + $0x3d]]
          %v1726 = vld [vmem:[#allocation6] sm:$0xff]
          %v1727 = vld [vmem:[#allocation6 + $0x8] sm:$0xff]
          %v1728 = vld [vmem:[#allocation5 + $0x1] sm:$0xff]
          %v1729 = vld [vmem:[#allocation5 + $0x9] sm:$0xff]
          %v1730 = vstv %s1725
          %v1731 = vmul.f32 %v1730, %v1728
          %v1732 = vmul.f32 %v1730, %v1729
          %v1733 = vadd.f32 %v1726, %v1731
          %v1734 = vadd.f32 %v1727, %v1732
          %1735 = vst.msk [vmem:[#allocation6] sm:$0xff] %vm491, %v1733
          %1736 = vst.msk [vmem:[#allocation6 + $0x8] sm:$0xff] %vm491, %v1734
          %s1737 = sld [smem:[#allocation7 + $0x44]]
          %v1738 = vld [vmem:[#allocation6] sm:$0xff]
          %v1739 = vld [vmem:[#allocation6 + $0x8] sm:$0xff]
          %v1740 = vld [vmem:[#allocation5 + $0x2] sm:$0xff]
          %v1741 = vld [vmem:[#allocation5 + $0xa] sm:$0xff]
          %v1742 = vstv %s1737
          %v1743 = vmul.f32 %v1742, %v1740
          %v1744 = vmul.f32 %v1742, %v1741
          %v1745 = vadd.f32 %v1738, %v1743
          %v1746 = vadd.f32 %v1739, %v1744
          %1747 = vst.msk [vmem:[#allocation6] sm:$0xff] %vm491, %v1745
          %1748 = vst.msk [vmem:[#allocation6 + $0x8] sm:$0xff] %vm491, %v1746
          %s1749 = sld [smem:[#allocation7 + $0x4b]]
          %v1750 = vld [vmem:[#allocation6] sm:$0xff]
          %v1751 = vld [vmem:[#allocation6 + $0x8] sm:$0xff]
          %v1752 = vld [vmem:[#allocation5 + $0x3] sm:$0xff]
          %v1753 = vld [vmem:[#allocation5 + $0xb] sm:$0xff]
          %v1754 = vstv %s1749
          %v1755 = vmul.f32 %v1754, %v1752
          %v1756 = vmul.f32 %v1754, %v1753
          %v1757 = vadd.f32 %v1750, %v1755
          %v1758 = vadd.f32 %v1751, %v1756
          %1759 = vst.msk [vmem:[#allocation6] sm:$0xff] %vm491, %v1757
          %1760 = vst.msk [vmem:[#allocation6 + $0x8] sm:$0xff] %vm491, %v1758
          %s1761 = sld [smem:[#allocation7 + $0x52]]
          %v1762 = vld [vmem:[#allocation6] sm:$0xff]
          %v1763 = vld [vmem:[#allocation6 + $0x8] sm:$0xff]
          %v1764 = vld [vmem:[#allocation5 + $0x4] sm:$0xff]
          %v1765 = vld [vmem:[#allocation5 + $0xc] sm:$0xff]
          %v1766 = vstv %s1761
          %v1767 = vmul.f32 %v1766, %v1764
          %v1768 = vmul.f32 %v1766, %v1765
          %v1769 = vadd.f32 %v1762, %v1767
          %v1770 = vadd.f32 %v1763, %v1768
          %1771 = vst.msk [vmem:[#allocation6] sm:$0xff] %vm491, %v1769
          %1772 = vst.msk [vmem:[#allocation6 + $0x8] sm:$0xff] %vm491, %v1770
          %s1773 = sld [smem:[#allocation7 + $0x59]]
          %v1774 = vld [vmem:[#allocation6] sm:$0xff]
          %v1775 = vld [vmem:[#allocation6 + $0x8] sm:$0xff]
          %v1776 = vld [vmem:[#allocation5 + $0x5] sm:$0xff]
          %v1777 = vld [vmem:[#allocation5 + $0xd] sm:$0xff]
          %v1778 = vstv %s1773
          %v1779 = vmul.f32 %v1778, %v1776
          %v1780 = vmul.f32 %v1778, %v1777
          %v1781 = vadd.f32 %v1774, %v1779
          %v1782 = vadd.f32 %v1775, %v1780
          %1783 = vst.msk [vmem:[#allocation6] sm:$0xff] %vm491, %v1781
          %1784 = vst.msk [vmem:[#allocation6 + $0x8] sm:$0xff] %vm491, %v1782
          %s1785 = sld [smem:[#allocation7 + $0x60]]
          %v1786 = vld [vmem:[#allocation6] sm:$0xff]
          %v1787 = vld [vmem:[#allocation6 + $0x8] sm:$0xff]
          %v1788 = vld [vmem:[#allocation5 + $0x6] sm:$0xff]
          %v1789 = vld [vmem:[#allocation5 + $0xe] sm:$0xff]
          %v1790 = vstv %s1785
          %v1791 = vmul.f32 %v1790, %v1788
          %v1792 = vmul.f32 %v1790, %v1789
          %v1793 = vadd.f32 %v1786, %v1791
          %v1794 = vadd.f32 %v1787, %v1792
          %1795 = vst.msk [vmem:[#allocation6] sm:$0xff] %vm491, %v1793
          %1796 = vst.msk [vmem:[#allocation6 + $0x8] sm:$0xff] %vm491, %v1794
          %v1797 = vld [vmem:[%s309] sm:$0xff]
          %v1798 = vld [vmem:[%s309 + $0x8] sm:$0xff]
          %v1799 = vld [vmem:[%s309 + $0x10] sm:$0x3f]
          %1803 = vrot.lane.b32.xlu0 %v1797, 122
          %v1804 = vpop.permute.xlu0 %1803
          %1805 = vrot.lane.b32.xlu0 %v1798, 122
          %v1806 = vpop.permute.xlu0 %1805
          %1807 = vrot.lane.b32.xlu0 %v1799, 122
          %v1808 = vpop.permute.xlu0 %1807
          %1812 = vst.msk [vmem:[#allocation5] sm:$0xff] %vm491, %v1804
          %1813 = vst.msk [vmem:[#allocation5 + $0x8] sm:$0xff] %vm491, %v1806
          %1814 = vst.msk [vmem:[#allocation5 + $0x10] sm:$0x3f] %vm499, %v1808
          %s1815 = sld [smem:[#allocation7 + $0x37]]
          %v1816 = vld [vmem:[#allocation6] sm:$0xff]
          %v1817 = vld [vmem:[#allocation6 + $0x8] sm:$0xff]
          %v1818 = vld [vmem:[#allocation5] sm:$0xff]
          %v1819 = vld [vmem:[#allocation5 + $0x8] sm:$0xff]
          %v1820 = vstv %s1815
          %v1821 = vmul.f32 %v1820, %v1818
          %v1822 = vmul.f32 %v1820, %v1819
          %v1823 = vadd.f32 %v1816, %v1821
          %v1824 = vadd.f32 %v1817, %v1822
          %1825 = vst.msk [vmem:[#allocation6] sm:$0xff] %vm491, %v1823
          %1826 = vst.msk [vmem:[#allocation6 + $0x8] sm:$0xff] %vm491, %v1824
          %s1827 = sld [smem:[#allocation7 + $0x3e]]
          %v1828 = vld [vmem:[#allocation6] sm:$0xff]
          %v1829 = vld [vmem:[#allocation6 + $0x8] sm:$0xff]
          %v1830 = vld [vmem:[#allocation5 + $0x1] sm:$0xff]
          %v1831 = vld [vmem:[#allocation5 + $0x9] sm:$0xff]
          %v1832 = vstv %s1827
          %v1833 = vmul.f32 %v1832, %v1830
          %v1834 = vmul.f32 %v1832, %v1831
          %v1835 = vadd.f32 %v1828, %v1833
          %v1836 = vadd.f32 %v1829, %v1834
          %1837 = vst.msk [vmem:[#allocation6] sm:$0xff] %vm491, %v1835
          %1838 = vst.msk [vmem:[#allocation6 + $0x8] sm:$0xff] %vm491, %v1836
          %s1839 = sld [smem:[#allocation7 + $0x45]]
          %v1840 = vld [vmem:[#allocation6] sm:$0xff]
          %v1841 = vld [vmem:[#allocation6 + $0x8] sm:$0xff]
          %v1842 = vld [vmem:[#allocation5 + $0x2] sm:$0xff]
          %v1843 = vld [vmem:[#allocation5 + $0xa] sm:$0xff]
          %v1844 = vstv %s1839
          %v1845 = vmul.f32 %v1844, %v1842
          %v1846 = vmul.f32 %v1844, %v1843
          %v1847 = vadd.f32 %v1840, %v1845
          %v1848 = vadd.f32 %v1841, %v1846
          %1849 = vst.msk [vmem:[#allocation6] sm:$0xff] %vm491, %v1847
          %1850 = vst.msk [vmem:[#allocation6 + $0x8] sm:$0xff] %vm491, %v1848
          %s1851 = sld [smem:[#allocation7 + $0x4c]]
          %v1852 = vld [vmem:[#allocation6] sm:$0xff]
          %v1853 = vld [vmem:[#allocation6 + $0x8] sm:$0xff]
          %v1854 = vld [vmem:[#allocation5 + $0x3] sm:$0xff]
          %v1855 = vld [vmem:[#allocation5 + $0xb] sm:$0xff]
          %v1856 = vstv %s1851
          %v1857 = vmul.f32 %v1856, %v1854
          %v1858 = vmul.f32 %v1856, %v1855
          %v1859 = vadd.f32 %v1852, %v1857
          %v1860 = vadd.f32 %v1853, %v1858
          %1861 = vst.msk [vmem:[#allocation6] sm:$0xff] %vm491, %v1859
          %1862 = vst.msk [vmem:[#allocation6 + $0x8] sm:$0xff] %vm491, %v1860
          %s1863 = sld [smem:[#allocation7 + $0x53]]
          %v1864 = vld [vmem:[#allocation6] sm:$0xff]
          %v1865 = vld [vmem:[#allocation6 + $0x8] sm:$0xff]
          %v1866 = vld [vmem:[#allocation5 + $0x4] sm:$0xff]
          %v1867 = vld [vmem:[#allocation5 + $0xc] sm:$0xff]
          %v1868 = vstv %s1863
          %v1869 = vmul.f32 %v1868, %v1866
          %v1870 = vmul.f32 %v1868, %v1867
          %v1871 = vadd.f32 %v1864, %v1869
          %v1872 = vadd.f32 %v1865, %v1870
          %1873 = vst.msk [vmem:[#allocation6] sm:$0xff] %vm491, %v1871
          %1874 = vst.msk [vmem:[#allocation6 + $0x8] sm:$0xff] %vm491, %v1872
          %s1875 = sld [smem:[#allocation7 + $0x5a]]
          %v1876 = vld [vmem:[#allocation6] sm:$0xff]
          %v1877 = vld [vmem:[#allocation6 + $0x8] sm:$0xff]
          %v1878 = vld [vmem:[#allocation5 + $0x5] sm:$0xff]
          %v1879 = vld [vmem:[#allocation5 + $0xd] sm:$0xff]
          %v1880 = vstv %s1875
          %v1881 = vmul.f32 %v1880, %v1878
          %v1882 = vmul.f32 %v1880, %v1879
          %v1883 = vadd.f32 %v1876, %v1881
          %v1884 = vadd.f32 %v1877, %v1882
          %1885 = vst.msk [vmem:[#allocation6] sm:$0xff] %vm491, %v1883
          %1886 = vst.msk [vmem:[#allocation6 + $0x8] sm:$0xff] %vm491, %v1884
          %s1887 = sld [smem:[#allocation7 + $0x61]]
          %v1888 = vld [vmem:[#allocation6] sm:$0xff]
          %v1889 = vld [vmem:[#allocation6 + $0x8] sm:$0xff]
          %v1890 = vld [vmem:[#allocation5 + $0x6] sm:$0xff]
          %v1891 = vld [vmem:[#allocation5 + $0xe] sm:$0xff]
          %v1892 = vstv %s1887
          %v1893 = vmul.f32 %v1892, %v1890
          %v1894 = vmul.f32 %v1892, %v1891
          %v1895 = vadd.f32 %v1888, %v1893
          %v1896 = vadd.f32 %v1889, %v1894
          %1897 = vst.msk [vmem:[#allocation6] sm:$0xff] %vm491, %v1895
          %1898 = vst.msk [vmem:[#allocation6 + $0x8] sm:$0xff] %vm491, %v1896
          %v1899 = vld [vmem:[#allocation6] sm:$0xff]
          %v1900 = vld [vmem:[#allocation6 + $0x8] sm:$0xff]
          %v1901 = vxor.u32 %v1899, 2147483648
          %v1902 = vxor.u32 %v1900, 2147483648
          %v1903 = vmul.f32 %v1901, 1.442695
          %v1904 = vpow.pop %v1903
          %v1905 = vmul.f32 %v1902, 1.442695
          %v1906 = vpow.pop %v1905
          %v1907 = vadd.f32 %v1904, 1.0
          %v1908 = vadd.f32 %v1906, 1.0
          %v1909 = vrcp.pop %v1907
          %v1910 = vmul.f32 1.0, %v1909
          %v1911 = vrcp.pop %v1908
          %v1912 = vmul.f32 1.0, %v1911
          %1913 = vst.msk [vmem:[%s187] sm:$0xff] %vm491, %v1910
          %1914 = vst.msk [vmem:[%s187 + $0x8] sm:$0xff] %vm491, %v1912
        $region44: #{tpu_custom_call.1} parent=27 // pred_fallthru
          _
        %s1915 = sand.u32 %s89, 1
        %s1916 = scalar_lea.sflag [#allocation9], %s1915
        %s1917 = sand.u32 %s89, 1
        %s1918 = smul.addr %s1917, 16
        %s1919 = scalar_lea.vmem [#allocation12], %s1918
        // Predicated region
        $region45: #{tpu_custom_call.1} parent=27 // pred_check
          %p1920 = pneg %p99
        $region46: #{tpu_custom_call.1} parent=27 // pred_check_branch
          %1922 = sbr.rel (%p1920) target = $region48
        $region47: #{tpu_custom_call.1} parent=27 // pred_region
          %s1924 = ssub.s32 256, 256
          %1925 = vsyncadd %s1916, %s1924
          %s1926 = smul.addr %s24, 2
          %s1927 = smul.addr %s1926, 128
          %s1928 = scalar_lea.hbm %s2, %s1927
          %s1929 = sshll.u32 %s1919, 4
          %s1930 = int_to_ptr.vmem [resolvable:$true] %s1929
          %1935 = dma.vmem_to_hbm [thread:$0]  %s1930, 256, %s1928, %s1916, 128, 128, 8
        $region48: #{tpu_custom_call.1} parent=27 // pred_fallthru
          _
      $region28: #{tpu_custom_call.1} parent=5 // pred_fallthru
        _
      %p1936 = scmp.le.s32.totalorder 2, %s15
      // Predicated region
      $region49: #{tpu_custom_call.1} parent=5 // pred_check
        %p1937 = pneg %p1936
      $region50: #{tpu_custom_call.1} parent=5 // pred_check_branch
        %1939 = sbr.rel (%p1937) target = $region52
      $region51: #{tpu_custom_call.1} parent=5 // pred_region
        %s1940 = ssub.s32 %s15, 2
        // Predicated region
        $region53: #{tpu_custom_call.1} parent=51 // pred_check
          %p1941 = pneg %p105
        $region54: #{tpu_custom_call.1} parent=51 // pred_check_branch
          %1943 = sbr.rel (%p1941) target = $region56
        $region55: #{tpu_custom_call.1} parent=51 // pred_region
          %s1944 = sand.u32 %s90, 1
          %s1945 = scalar_lea.sflag [#allocation9], %s1944
          %s1946 = sand.u32 %s90, 1
          %s1947 = smul.addr %s1946, 16
          %s1948 = scalar_lea.vmem [#allocation12], %s1947
          %1949 = dma.done %s1945, 256
        $region56: #{tpu_custom_call.1} parent=51 // pred_fallthru
          _
      $region52: #{tpu_custom_call.1} parent=5 // pred_fallthru
        _
    $region6: #{tpu_custom_call.1} parent=1 // loop_footer
      %s19 = sadd.s32 1, %s15
    $region7: #{tpu_custom_call.1} parent=1 // loop_footer_branch
      %14 = sbr.rel target = $region3
    $region8: #{tpu_custom_call.1} parent=1 // loop_exit
      _
    %1950 = vsyncpa [#allocation8], 1
    %s1951 = scalar_lea.sflag [#allocation8], 1
    %1952 = vsyncpa %s1951, 1
    %1953 = vsyncpa [#allocation9], 1
    %s1954 = scalar_lea.sflag [#allocation9], 1
    %1955 = vsyncpa %s1954, 1
    %1956 = vsyncpa [#allocation10], 1
    %s1957 = scalar_lea.sflag [#allocation10], 1
    %1958 = vsyncpa %s1957, 1

</llo_original>
